<compile_context>
chip_gen: v7x
topology: tpu7x:2x2x1
jax: 0.10.0
libtpu: 0.0.40
codegen_flags: <defaults>
</compile_context>

<pallas_src>
from functools import partial

import jax
import jax.numpy as jnp
from jax import lax
from jax.experimental import pallas as pl
from jax.experimental.pallas import tpu as pltpu

BN_EPS = 1e-5


# --------------------- fused My_Conv_block kernel (one row-tile / grid step) ---------------------
def _my_conv_block_kernel(xt_ref, xm_ref, xb_ref,          # top-halo / center / bottom-halo x rows
                          w1_ref, b1_ref,                   # primary 1x1
                          wdc_ref, s_ref, t_ref,            # stacked 3x3 branches + folded bias/BN
                          w2_ref, w2b_ref, b2_ref,          # final 1x1 (stacked) + residual part
                          o_ref, xcpad_ref, *, TH, W, dil):
    Cin = xm_ref.shape[-1]
    Cmid = w1_ref.shape[-1]
    Cout = o_ref.shape[-1]
    THp = TH + 2 * dil
    Wp = W + 2 * dil
    t = pl.program_id(1)
    last = pl.num_programs(1) - 1

    # ---- primary 1x1 conv over tile + halo rows (bf16 MXU operands, f32 accumulation) ----
    xwin = jnp.concatenate([xt_ref[...], xm_ref[...], xb_ref[...]], axis=0)   # (THp, W, Cin) bf16
    xwin = xwin.reshape(THp * W, Cin)
    xc_all = jnp.dot(xwin, w1_ref[...], preferred_element_type=jnp.float32) + b1_ref[...]
    xc_mid = xc_all[dil * W: dil * W + TH * W]          # f32 interior x_c (residual input)

    # ---- zero-padded x_c window in a bf16 VMEM scratch (only borders are zeroed) ----
    xcpad_ref[:, 0:dil, :] = jnp.zeros((THp, dil, Cmid), jnp.bfloat16)
    xcpad_ref[:, dil + W:, :] = jnp.zeros((THp, dil, Cmid), jnp.bfloat16)
    xcpad_ref[:, dil:dil + W, :] = xc_all.reshape(THp, W, Cmid).astype(jnp.bfloat16)

    @pl.when(t == 0)              # image top border: conv zero-padding
    def _():
        xcpad_ref[0:dil, :, :] = jnp.zeros((dil, Wp, Cmid), jnp.bfloat16)

    @pl.when(t == last)           # image bottom border
    def _():
        xcpad_ref[dil + TH:, :, :] = jnp.zeros((dil, Wp, Cmid), jnp.bfloat16)

    # ---- both 3x3 dilated branches as ONE stacked 9-tap matmul (Cmid -> 2*Cmid) ----
    # 3 kw-shifted window loads; kh selection is an aligned row slice of the loaded value.
    acc = jnp.zeros((TH * W, 2 * Cmid), jnp.float32)
    for kw in range(3):
        xsh = xcpad_ref[:, kw * dil:kw * dil + W, :].reshape(THp * W, Cmid)
        for kh in range(3):
            patch = xsh[kh * dil * W: kh * dil * W + TH * W]
            acc = acc + jnp.dot(patch, wdc_ref[kh * 3 + kw],
                                preferred_element_type=jnp.float32)

    # ---- folded (conv-bias + eval-BN) scale/shift + ReLU, f32 epilogue (v5e-safe) ----
    y = jnp.maximum(acc * s_ref[...] + t_ref[...], 0.0)          # (TH*W, 2*Cmid) = [x1, x2]

    # ---- final 1x1: cat([x1, x2 + x_c]) @ W2 + b2  ==  [x1,x2] @ W2 + x_c @ W2b + b2 ----
    out = (jnp.dot(y.astype(jnp.bfloat16), w2_ref[...], preferred_element_type=jnp.float32)
           + jnp.dot(xc_mid.astype(jnp.bfloat16), w2b_ref[...], preferred_element_type=jnp.float32)
           + b2_ref[...])
    o_ref[...] = out.astype(jnp.bfloat16).reshape(TH, W, Cout)


def my_conv_block(x_nhwc, p, *, dil=1, tile_h=8):
    """NHWC end-to-end. x_nhwc: (N, H, W, Cin) bf16. Returns (N, H, W, Cout) bf16."""
    N, H, W, Cin = x_nhwc.shape
    Cmid = p["w1"].shape[1]
    Cout = p["b2"].shape[1]
    TH = min(tile_h, H)
    assert H % TH == 0, "H must be divisible by the row tile"
    assert TH % dil == 0 and H % dil == 0, "row tile / H must be multiples of the dilation"
    nT = H // TH
    hb = TH // dil                       # halo step measured in dil-row blocks

    def wspec(a):
        nd = a.ndim
        return pl.BlockSpec(a.shape, lambda n, t, _nd=nd: (0,) * _nd)

    in_specs = [
        # top halo rows [t*TH - dil, t*TH)   (clamped at the image top; zeroed in-kernel)
        pl.BlockSpec((None, dil, W, Cin),
                     lambda n, t: (n, jnp.maximum(t * hb - 1, 0), 0, 0)),
        # center rows  [t*TH, (t+1)*TH)
        pl.BlockSpec((None, TH, W, Cin), lambda n, t: (n, t, 0, 0)),
        # bottom halo rows [(t+1)*TH, (t+1)*TH + dil)  (clamped at the image bottom)
        pl.BlockSpec((None, dil, W, Cin),
                     lambda n, t: (n, jnp.minimum((t + 1) * hb, H // dil - 1), 0, 0)),
        wspec(p["w1"]), wspec(p["b1"]),
        wspec(p["wdc"]), wspec(p["s_dc"]), wspec(p["t_dc"]),
        wspec(p["w2"]), wspec(p["w2b"]), wspec(p["b2"]),
    ]

    kernel = partial(_my_conv_block_kernel, TH=TH, W=W, dil=dil)
    return pl.pallas_call(
        kernel,
        out_shape=jax.ShapeDtypeStruct((N, H, W, Cout), jnp.bfloat16),
        grid=(N, nT),
        in_specs=in_specs,
        out_specs=pl.BlockSpec((None, TH, W, Cout), lambda n, t: (n, t, 0, 0)),
        scratch_shapes=[pltpu.VMEM((TH + 2 * dil, W + 2 * dil, Cmid), jnp.bfloat16)],
        compiler_params=pltpu.CompilerParams(
            dimension_semantics=("parallel", "parallel"),
            # tile_h bounds the working set; 48 MiB leaves headroom on v7x (64 MiB/TC)
            # and is above the 32 MiB scoped default on v5e/v6e.
            vmem_limit_bytes=48 * 1024 * 1024,
        ),
    )(x_nhwc, x_nhwc, x_nhwc,
      p["w1"], p["b1"], p["wdc"], p["s_dc"], p["t_dc"],
      p["w2"], p["w2b"], p["b2"])


# --------------------------- deterministic synthetic parameters ---------------------------
def _folded_bn(key, C, bias):
    """Eval-mode BN folded with the preceding conv bias: y = conv*scale + shift."""
    k1, k2, k3, k4 = jax.random.split(key, 4)
    gamma = 1.0 + 0.1 * jax.random.normal(k1, (C,), jnp.float32)
    beta = 0.1 * jax.random.normal(k2, (C,), jnp.float32)
    mean = 0.1 * jax.random.normal(k3, (C,), jnp.float32)
    var = jnp.abs(jax.random.normal(k4, (C,), jnp.float32)) + 0.5
    scale = gamma / jnp.sqrt(var + BN_EPS)
    shift = beta - mean * scale + bias * scale
    return scale, shift


def make_params(key, ch_in, ch_out):
    cmid = ch_out // 2
    ks = jax.random.split(key, 10)
    bf16 = jnp.bfloat16

    w1 = 0.3 * jax.random.normal(ks[0], (ch_in, cmid), jnp.float32)
    b1 = 0.1 * jax.random.normal(ks[1], (1, cmid), jnp.float32)

    wd = 0.2 * jax.random.normal(ks[2], (9, cmid, cmid), jnp.float32)   # deform branch (zero-offset)
    bd = 0.1 * jax.random.normal(ks[3], (cmid,), jnp.float32)
    sd, td = _folded_bn(ks[4], cmid, bd)

    wc = 0.2 * jax.random.normal(ks[5], (9, cmid, cmid), jnp.float32)   # plain conv branch
    bc = 0.1 * jax.random.normal(ks[6], (cmid,), jnp.float32)
    sc, tc = _folded_bn(ks[7], cmid, bc)

    w2 = 0.3 * jax.random.normal(ks[8], (2 * cmid, ch_out), jnp.float32)
    b2 = 0.1 * jax.random.normal(ks[9], (1, ch_out), jnp.float32)

    return {
        "w1": w1.astype(bf16), "b1": b1,
        "wdc": jnp.concatenate([wd, wc], axis=-1).astype(bf16),          # (9, cmid, 2*cmid)
        "s_dc": jnp.concatenate([sd, sc]).reshape(1, 2 * cmid),
        "t_dc": jnp.concatenate([td, tc]).reshape(1, 2 * cmid),
        "w2": w2.astype(bf16), "w2b": w2[cmid:].astype(bf16), "b2": b2,
    }


# --------------------------- pure-JAX (XLA) reference for validation ---------------------------
def _reference_forward(x_nhwc, p, *, dil=1):
    f32 = lambda a: a.astype(jnp.float32)
    x = f32(x_nhwc)
    w1 = f32(p["w1"])
    cmid = w1.shape[1]
    xc = jnp.einsum("nhwc,cd->nhwd", x, w1) + p["b1"].reshape(1, 1, 1, -1)
    w9 = f32(p["wdc"]).reshape(3, 3, cmid, 2 * cmid)
    acc = lax.conv_general_dilated(
        xc, w9, window_strides=(1, 1), padding=((dil, dil), (dil, dil)),
        rhs_dilation=(dil, dil), dimension_numbers=("NHWC", "HWIO", "NHWC"))
    y = jnp.maximum(acc * p["s_dc"].reshape(1, 1, 1, -1) + p["t_dc"].reshape(1, 1, 1, -1), 0.0)
    x1, x2 = y[..., :cmid], y[..., cmid:]
    return (jnp.einsum("nhwc,cd->nhwd", jnp.concatenate([x1, x2 + xc], axis=-1), f32(p["w2"]))
            + p["b2"].reshape(1, 1, 1, -1))


if __name__ == "__main__":
    key = jax.random.PRNGKey(0)
    kx, kp = jax.random.split(key)
    N, H, W, CH_IN, CH_OUT = 2, 16, 16, 4, 8

    # NHWC end-to-end (no NCHW<->NHWC round trips); bf16 activations in HBM.
    x = jax.random.normal(kx, (N, H, W, CH_IN), jnp.float32).astype(jnp.bfloat16)
    params = make_params(kp, CH_IN, CH_OUT)

    out = my_conv_block(x, params, dil=1, tile_h=8)   # grid (N=2, H/TH=2): exercises the halo path
    out = jax.block_until_ready(out)
    assert out.shape == (N, H, W, CH_OUT), out.shape
    assert out.dtype == jnp.bfloat16, out.dtype
    out_f32 = out.astype(jnp.float32)
    assert bool(jnp.all(jnp.isfinite(out_f32)))

    # Validate against a pure-JAX reference (same bf16 inputs/weights, f32 math).
    ref = _reference_forward(x, params, dil=1)
    max_err = float(jnp.max(jnp.abs(out_f32 - ref)))
    assert max_err < 1e-1, f"max abs err {max_err}"

    print("KERNEL_OK")
</pallas_src>

<mosaic_0001>
module attributes {stable_mosaic.version = 11 : i64} {
  func.func @_my_conv_block_kernel(%arg0: i32, %arg1: i32, %arg2: memref<1x1x16x4xbf16, #tpu.memory_space<vmem>>, %arg3: memref<1x8x16x4xbf16, #tpu.memory_space<vmem>>, %arg4: memref<1x1x16x4xbf16, #tpu.memory_space<vmem>>, %arg5: memref<4x4xbf16, #tpu.memory_space<vmem>>, %arg6: memref<1x4xf32, #tpu.memory_space<vmem>>, %arg7: memref<9x4x8xbf16, #tpu.memory_space<vmem>>, %arg8: memref<1x8xf32, #tpu.memory_space<vmem>>, %arg9: memref<1x8xf32, #tpu.memory_space<vmem>>, %arg10: memref<8x8xbf16, #tpu.memory_space<vmem>>, %arg11: memref<4x8xbf16, #tpu.memory_space<vmem>>, %arg12: memref<1x8xf32, #tpu.memory_space<vmem>>, %arg13: memref<1x8x16x8xbf16, #tpu.memory_space<vmem>>, %arg14: memref<10x18x4xbf16, #tpu.memory_space<vmem>>) attributes {dimension_semantics = [#tpu.dimension_semantics<parallel>, #tpu.dimension_semantics<parallel>], iteration_bounds = array<i64: 2, 2>, scalar_prefetch = 0 : i64, scratch_operands = 1 : i64, tpu.core_type = #tpu.core_type<tc>, window_params = [{transform_indices = @transform_0, window_bounds = array<i64: 1, 1, 16, 4>}, {transform_indices = @transform_1, window_bounds = array<i64: 1, 8, 16, 4>}, {transform_indices = @transform_2, window_bounds = array<i64: 1, 1, 16, 4>}, {pipeline_mode = #tpu.pipeline_mode<synchronous>, transform_indices = @transform_3, window_bounds = array<i64: 4, 4>}, {pipeline_mode = #tpu.pipeline_mode<synchronous>, transform_indices = @transform_4, window_bounds = array<i64: 1, 4>}, {pipeline_mode = #tpu.pipeline_mode<synchronous>, transform_indices = @transform_5, window_bounds = array<i64: 9, 4, 8>}, {pipeline_mode = #tpu.pipeline_mode<synchronous>, transform_indices = @transform_6, window_bounds = array<i64: 1, 8>}, {pipeline_mode = #tpu.pipeline_mode<synchronous>, transform_indices = @transform_7, window_bounds = array<i64: 1, 8>}, {pipeline_mode = #tpu.pipeline_mode<synchronous>, transform_indices = @transform_8, window_bounds = array<i64: 8, 8>}, {pipeline_mode = #tpu.pipeline_mode<synchronous>, transform_indices = @transform_9, window_bounds = array<i64: 4, 8>}, {pipeline_mode = #tpu.pipeline_mode<synchronous>, transform_indices = @transform_10, window_bounds = array<i64: 1, 8>}, {transform_indices = @transform_11, window_bounds = array<i64: 1, 8, 16, 8>}]} {
    %c0 = arith.constant 0 : index
    %c0_0 = arith.constant 0 : index
    %c0_1 = arith.constant 0 : index
    %c0_2 = arith.constant 0 : index
    %0 = vector.load %arg2[%c0, %c0_0, %c0_1, %c0_2] : memref<1x1x16x4xbf16, #tpu.memory_space<vmem>>, vector<1x1x16x4xbf16>
    %1 = vector.shape_cast %0 : vector<1x1x16x4xbf16> to vector<1x16x4xbf16>
    %c0_3 = arith.constant 0 : index
    %c0_4 = arith.constant 0 : index
    %c0_5 = arith.constant 0 : index
    %c0_6 = arith.constant 0 : index
    %2 = vector.load %arg3[%c0_3, %c0_4, %c0_5, %c0_6] : memref<1x8x16x4xbf16, #tpu.memory_space<vmem>>, vector<1x8x16x4xbf16>
    %3 = vector.shape_cast %2 : vector<1x8x16x4xbf16> to vector<8x16x4xbf16>
    %c0_7 = arith.constant 0 : index
    %c0_8 = arith.constant 0 : index
    %c0_9 = arith.constant 0 : index
    %c0_10 = arith.constant 0 : index
    %4 = vector.load %arg4[%c0_7, %c0_8, %c0_9, %c0_10] : memref<1x1x16x4xbf16, #tpu.memory_space<vmem>>, vector<1x1x16x4xbf16>
    %5 = vector.shape_cast %4 : vector<1x1x16x4xbf16> to vector<1x16x4xbf16>
    %6 = tpu.concatenate %1, %3, %5 in 0 : vector<1x16x4xbf16>, vector<8x16x4xbf16>, vector<1x16x4xbf16> -> vector<10x16x4xbf16>
    %7 = vector.shape_cast %6 : vector<10x16x4xbf16> to vector<160x4xbf16>
    %c0_11 = arith.constant 0 : index
    %c0_12 = arith.constant 0 : index
    %8 = vector.load %arg5[%c0_11, %c0_12] : memref<4x4xbf16, #tpu.memory_space<vmem>>, vector<4x4xbf16>
    %cst = arith.constant dense<0.000000e+00> : vector<160x4xf32>
    %9 = tpu.matmul %7, %8, %cst {dimension_numbers = #tpu.dot_dimension_numbers<[1], [0], [0], [1], [0, 0, 1, 1], [], []>} : vector<160x4xbf16>, vector<4x4xbf16>, vector<160x4xf32> -> vector<160x4xf32>
    %c0_13 = arith.constant 0 : index
    %c0_14 = arith.constant 0 : index
    %10 = vector.load %arg6[%c0_13, %c0_14] : memref<1x4xf32, #tpu.memory_space<vmem>>, vector<1x4xf32>
    %11 = vector.broadcast %10 : vector<1x4xf32> to vector<160x4xf32>
    %12 = arith.addf %9, %11 : vector<160x4xf32>
    %13 = vector.extract_strided_slice %12 {offsets = [16, 0], sizes = [128, 4], strides = [1, 1]} : vector<160x4xf32> to vector<128x4xf32>
    %cst_15 = arith.constant 0.000000e+00 : bf16
    %14 = vector.broadcast %cst_15 : bf16 to vector<10x1x4xbf16>
    %c0_16 = arith.constant 0 : index
    %c0_17 = arith.constant 0 : index
    %c0_18 = arith.constant 0 : index
    %15 = vector.load %arg14[%c0_16, %c0_17, %c0_18] : memref<10x18x4xbf16, #tpu.memory_space<vmem>>, vector<10x1x4xbf16>
    tpu.vector_store %arg14[%c0_16, %c0_17, %c0_18], %14 {strides = array<i32>} : memref<10x18x4xbf16, #tpu.memory_space<vmem>>, vector<10x1x4xbf16>,
    %cst_19 = arith.constant 0.000000e+00 : bf16
    %16 = vector.broadcast %cst_19 : bf16 to vector<10x1x4xbf16>
    %c0_20 = arith.constant 0 : index
    %c17 = arith.constant 17 : index
    %c0_21 = arith.constant 0 : index
    %17 = vector.load %arg14[%c0_20, %c17, %c0_21] : memref<10x18x4xbf16, #tpu.memory_space<vmem>>, vector<10x1x4xbf16>
    tpu.vector_store %arg14[%c0_20, %c17, %c0_21], %16 {strides = array<i32>} : memref<10x18x4xbf16, #tpu.memory_space<vmem>>, vector<10x1x4xbf16>,
    %18 = vector.shape_cast %12 : vector<160x4xf32> to vector<10x16x4xf32>
    %19 = arith.truncf %18 : vector<10x16x4xf32> to vector<10x16x4xbf16>
    %c0_22 = arith.constant 0 : index
    %c1 = arith.constant 1 : index
    %c0_23 = arith.constant 0 : index
    %20 = vector.load %arg14[%c0_22, %c1, %c0_23] : memref<10x18x4xbf16, #tpu.memory_space<vmem>>, vector<10x16x4xbf16>
    tpu.vector_store %arg14[%c0_22, %c1, %c0_23], %19 {strides = array<i32>} : memref<10x18x4xbf16, #tpu.memory_space<vmem>>, vector<10x16x4xbf16>,
    %c0_i32 = arith.constant 0 : i32
    %21 = arith.cmpi eq, %arg1, %c0_i32 : i32
    %22 = arith.extui %21 : i1 to i32
    %c0_i32_24 = arith.constant 0 : i32
    %23 = arith.cmpi ne, %22, %c0_i32_24 : i32
    scf.if %23 {
      %cst_82 = arith.constant 0.000000e+00 : bf16
      %102 = vector.broadcast %cst_82 : bf16 to vector<1x18x4xbf16>
      %c0_83 = arith.constant 0 : index
      %c0_84 = arith.constant 0 : index
      %c0_85 = arith.constant 0 : index
      %103 = vector.load %arg14[%c0_83, %c0_84, %c0_85] : memref<10x18x4xbf16, #tpu.memory_space<vmem>>, vector<1x18x4xbf16>
      tpu.vector_store %arg14[%c0_83, %c0_84, %c0_85], %102 {strides = array<i32>} : memref<10x18x4xbf16, #tpu.memory_space<vmem>>, vector<1x18x4xbf16>,
    } else {
    }
    %c1_i32 = arith.constant 1 : i32
    %24 = arith.cmpi eq, %arg1, %c1_i32 : i32
    %25 = arith.extui %24 : i1 to i32
    %c0_i32_25 = arith.constant 0 : i32
    %26 = arith.cmpi ne, %25, %c0_i32_25 : i32
    scf.if %26 {
      %cst_82 = arith.constant 0.000000e+00 : bf16
      %102 = vector.broadcast %cst_82 : bf16 to vector<1x18x4xbf16>
      %c9 = arith.constant 9 : index
      %c0_83 = arith.constant 0 : index
      %c0_84 = arith.constant 0 : index
      %103 = vector.load %arg14[%c9, %c0_83, %c0_84] : memref<10x18x4xbf16, #tpu.memory_space<vmem>>, vector<1x18x4xbf16>
      tpu.vector_store %arg14[%c9, %c0_83, %c0_84], %102 {strides = array<i32>} : memref<10x18x4xbf16, #tpu.memory_space<vmem>>, vector<1x18x4xbf16>,
    } else {
    }
    %cst_26 = arith.constant 0.000000e+00 : f32
    %27 = vector.broadcast %cst_26 : f32 to vector<128x8xf32>
    %c0_27 = arith.constant 0 : index
    %c0_28 = arith.constant 0 : index
    %c0_29 = arith.constant 0 : index
    %28 = vector.load %arg14[%c0_27, %c0_28, %c0_29] : memref<10x18x4xbf16, #tpu.memory_space<vmem>>, vector<10x16x4xbf16>
    %29 = vector.shape_cast %28 : vector<10x16x4xbf16> to vector<160x4xbf16>
    %30 = vector.extract_strided_slice %29 {offsets = [0, 0], sizes = [128, 4], strides = [1, 1]} : vector<160x4xbf16> to vector<128x4xbf16>
    %c0_30 = arith.constant 0 : index
    %c0_31 = arith.constant 0 : index
    %c0_32 = arith.constant 0 : index
    %31 = vector.load %arg7[%c0_30, %c0_31, %c0_32] : memref<9x4x8xbf16, #tpu.memory_space<vmem>>, vector<1x4x8xbf16>
    %32 = vector.shape_cast %31 : vector<1x4x8xbf16> to vector<4x8xbf16>
    %cst_33 = arith.constant dense<0.000000e+00> : vector<128x8xf32>
    %33 = tpu.matmul %30, %32, %cst_33 {dimension_numbers = #tpu.dot_dimension_numbers<[1], [0], [0], [1], [0, 0, 1, 1], [], []>} : vector<128x4xbf16>, vector<4x8xbf16>, vector<128x8xf32> -> vector<128x8xf32>
    %34 = arith.addf %27, %33 : vector<128x8xf32>
    %35 = vector.extract_strided_slice %29 {offsets = [16, 0], sizes = [128, 4], strides = [1, 1]} : vector<160x4xbf16> to vector<128x4xbf16>
    %c3 = arith.constant 3 : index
    %c0_34 = arith.constant 0 : index
    %c0_35 = arith.constant 0 : index
    %36 = vector.load %arg7[%c3, %c0_34, %c0_35] : memref<9x4x8xbf16, #tpu.memory_space<vmem>>, vector<1x4x8xbf16>
    %37 = vector.shape_cast %36 : vector<1x4x8xbf16> to vector<4x8xbf16>
    %cst_36 = arith.constant dense<0.000000e+00> : vector<128x8xf32>
    %38 = tpu.matmul %35, %37, %cst_36 {dimension_numbers = #tpu.dot_dimension_numbers<[1], [0], [0], [1], [0, 0, 1, 1], [], []>} : vector<128x4xbf16>, vector<4x8xbf16>, vector<128x8xf32> -> vector<128x8xf32>
    %39 = arith.addf %34, %38 : vector<128x8xf32>
    %40 = vector.extract_strided_slice %29 {offsets = [32, 0], sizes = [128, 4], strides = [1, 1]} : vector<160x4xbf16> to vector<128x4xbf16>
    %c6 = arith.constant 6 : index
    %c0_37 = arith.constant 0 : index
    %c0_38 = arith.constant 0 : index
    %41 = vector.load %arg7[%c6, %c0_37, %c0_38] : memref<9x4x8xbf16, #tpu.memory_space<vmem>>, vector<1x4x8xbf16>
    %42 = vector.shape_cast %41 : vector<1x4x8xbf16> to vector<4x8xbf16>
    %cst_39 = arith.constant dense<0.000000e+00> : vector<128x8xf32>
    %43 = tpu.matmul %40, %42, %cst_39 {dimension_numbers = #tpu.dot_dimension_numbers<[1], [0], [0], [1], [0, 0, 1, 1], [], []>} : vector<128x4xbf16>, vector<4x8xbf16>, vector<128x8xf32> -> vector<128x8xf32>
    %44 = arith.addf %39, %43 : vector<128x8xf32>
    %c0_40 = arith.constant 0 : index
    %c1_41 = arith.constant 1 : index
    %c0_42 = arith.constant 0 : index
    %45 = vector.load %arg14[%c0_40, %c1_41, %c0_42] : memref<10x18x4xbf16, #tpu.memory_space<vmem>>, vector<10x16x4xbf16>
    %46 = vector.shape_cast %45 : vector<10x16x4xbf16> to vector<160x4xbf16>
    %47 = vector.extract_strided_slice %46 {offsets = [0, 0], sizes = [128, 4], strides = [1, 1]} : vector<160x4xbf16> to vector<128x4xbf16>
    %c1_43 = arith.constant 1 : index
    %c0_44 = arith.constant 0 : index
    %c0_45 = arith.constant 0 : index
    %48 = vector.load %arg7[%c1_43, %c0_44, %c0_45] : memref<9x4x8xbf16, #tpu.memory_space<vmem>>, vector<1x4x8xbf16>
    %49 = vector.shape_cast %48 : vector<1x4x8xbf16> to vector<4x8xbf16>
    %cst_46 = arith.constant dense<0.000000e+00> : vector<128x8xf32>
    %50 = tpu.matmul %47, %49, %cst_46 {dimension_numbers = #tpu.dot_dimension_numbers<[1], [0], [0], [1], [0, 0, 1, 1], [], []>} : vector<128x4xbf16>, vector<4x8xbf16>, vector<128x8xf32> -> vector<128x8xf32>
    %51 = arith.addf %44, %50 : vector<128x8xf32>
    %52 = vector.extract_strided_slice %46 {offsets = [16, 0], sizes = [128, 4], strides = [1, 1]} : vector<160x4xbf16> to vector<128x4xbf16>
    %c4 = arith.constant 4 : index
    %c0_47 = arith.constant 0 : index
    %c0_48 = arith.constant 0 : index
    %53 = vector.load %arg7[%c4, %c0_47, %c0_48] : memref<9x4x8xbf16, #tpu.memory_space<vmem>>, vector<1x4x8xbf16>
    %54 = vector.shape_cast %53 : vector<1x4x8xbf16> to vector<4x8xbf16>
    %cst_49 = arith.constant dense<0.000000e+00> : vector<128x8xf32>
    %55 = tpu.matmul %52, %54, %cst_49 {dimension_numbers = #tpu.dot_dimension_numbers<[1], [0], [0], [1], [0, 0, 1, 1], [], []>} : vector<128x4xbf16>, vector<4x8xbf16>, vector<128x8xf32> -> vector<128x8xf32>
    %56 = arith.addf %51, %55 : vector<128x8xf32>
    %57 = vector.extract_strided_slice %46 {offsets = [32, 0], sizes = [128, 4], strides = [1, 1]} : vector<160x4xbf16> to vector<128x4xbf16>
    %c7 = arith.constant 7 : index
    %c0_50 = arith.constant 0 : index
    %c0_51 = arith.constant 0 : index
    %58 = vector.load %arg7[%c7, %c0_50, %c0_51] : memref<9x4x8xbf16, #tpu.memory_space<vmem>>, vector<1x4x8xbf16>
    %59 = vector.shape_cast %58 : vector<1x4x8xbf16> to vector<4x8xbf16>
    %cst_52 = arith.constant dense<0.000000e+00> : vector<128x8xf32>
    %60 = tpu.matmul %57, %59, %cst_52 {dimension_numbers = #tpu.dot_dimension_numbers<[1], [0], [0], [1], [0, 0, 1, 1], [], []>} : vector<128x4xbf16>, vector<4x8xbf16>, vector<128x8xf32> -> vector<128x8xf32>
    %61 = arith.addf %56, %60 : vector<128x8xf32>
    %c0_53 = arith.constant 0 : index
    %c2 = arith.constant 2 : index
    %c0_54 = arith.constant 0 : index
    %62 = vector.load %arg14[%c0_53, %c2, %c0_54] : memref<10x18x4xbf16, #tpu.memory_space<vmem>>, vector<10x16x4xbf16>
    %63 = vector.shape_cast %62 : vector<10x16x4xbf16> to vector<160x4xbf16>
    %64 = vector.extract_strided_slice %63 {offsets = [0, 0], sizes = [128, 4], strides = [1, 1]} : vector<160x4xbf16> to vector<128x4xbf16>
    %c2_55 = arith.constant 2 : index
    %c0_56 = arith.constant 0 : index
    %c0_57 = arith.constant 0 : index
    %65 = vector.load %arg7[%c2_55, %c0_56, %c0_57] : memref<9x4x8xbf16, #tpu.memory_space<vmem>>, vector<1x4x8xbf16>
    %66 = vector.shape_cast %65 : vector<1x4x8xbf16> to vector<4x8xbf16>
    %cst_58 = arith.constant dense<0.000000e+00> : vector<128x8xf32>
    %67 = tpu.matmul %64, %66, %cst_58 {dimension_numbers = #tpu.dot_dimension_numbers<[1], [0], [0], [1], [0, 0, 1, 1], [], []>} : vector<128x4xbf16>, vector<4x8xbf16>, vector<128x8xf32> -> vector<128x8xf32>
    %68 = arith.addf %61, %67 : vector<128x8xf32>
    %69 = vector.extract_strided_slice %63 {offsets = [16, 0], sizes = [128, 4], strides = [1, 1]} : vector<160x4xbf16> to vector<128x4xbf16>
    %c5 = arith.constant 5 : index
    %c0_59 = arith.constant 0 : index
    %c0_60 = arith.constant 0 : index
    %70 = vector.load %arg7[%c5, %c0_59, %c0_60] : memref<9x4x8xbf16, #tpu.memory_space<vmem>>, vector<1x4x8xbf16>
    %71 = vector.shape_cast %70 : vector<1x4x8xbf16> to vector<4x8xbf16>
    %cst_61 = arith.constant dense<0.000000e+00> : vector<128x8xf32>
    %72 = tpu.matmul %69, %71, %cst_61 {dimension_numbers = #tpu.dot_dimension_numbers<[1], [0], [0], [1], [0, 0, 1, 1], [], []>} : vector<128x4xbf16>, vector<4x8xbf16>, vector<128x8xf32> -> vector<128x8xf32>
    %73 = arith.addf %68, %72 : vector<128x8xf32>
    %74 = vector.extract_strided_slice %63 {offsets = [32, 0], sizes = [128, 4], strides = [1, 1]} : vector<160x4xbf16> to vector<128x4xbf16>
    %c8 = arith.constant 8 : index
    %c0_62 = arith.constant 0 : index
    %c0_63 = arith.constant 0 : index
    %75 = vector.load %arg7[%c8, %c0_62, %c0_63] : memref<9x4x8xbf16, #tpu.memory_space<vmem>>, vector<1x4x8xbf16>
    %76 = vector.shape_cast %75 : vector<1x4x8xbf16> to vector<4x8xbf16>
    %cst_64 = arith.constant dense<0.000000e+00> : vector<128x8xf32>
    %77 = tpu.matmul %74, %76, %cst_64 {dimension_numbers = #tpu.dot_dimension_numbers<[1], [0], [0], [1], [0, 0, 1, 1], [], []>} : vector<128x4xbf16>, vector<4x8xbf16>, vector<128x8xf32> -> vector<128x8xf32>
    %78 = arith.addf %73, %77 : vector<128x8xf32>
    %c0_65 = arith.constant 0 : index
    %c0_66 = arith.constant 0 : index
    %79 = vector.load %arg8[%c0_65, %c0_66] : memref<1x8xf32, #tpu.memory_space<vmem>>, vector<1x8xf32>
    %80 = vector.broadcast %79 : vector<1x8xf32> to vector<128x8xf32>
    %81 = arith.mulf %78, %80 : vector<128x8xf32>
    %c0_67 = arith.constant 0 : index
    %c0_68 = arith.constant 0 : index
    %82 = vector.load %arg9[%c0_67, %c0_68] : memref<1x8xf32, #tpu.memory_space<vmem>>, vector<1x8xf32>
    %83 = vector.broadcast %82 : vector<1x8xf32> to vector<128x8xf32>
    %84 = arith.addf %81, %83 : vector<128x8xf32>
    %cst_69 = arith.constant 0.000000e+00 : f32
    %85 = vector.broadcast %cst_69 : f32 to vector<128x8xf32>
    %86 = arith.maximumf %84, %85 : vector<128x8xf32>
    %87 = arith.truncf %86 : vector<128x8xf32> to vector<128x8xbf16>
    %c0_70 = arith.constant 0 : index
    %c0_71 = arith.constant 0 : index
    %88 = vector.load %arg10[%c0_70, %c0_71] : memref<8x8xbf16, #tpu.memory_space<vmem>>, vector<8x8xbf16>
    %cst_72 = arith.constant dense<0.000000e+00> : vector<128x8xf32>
    %89 = tpu.matmul %87, %88, %cst_72 {dimension_numbers = #tpu.dot_dimension_numbers<[1], [0], [0], [1], [0, 0, 1, 1], [], []>} : vector<128x8xbf16>, vector<8x8xbf16>, vector<128x8xf32> -> vector<128x8xf32>
    %90 = arith.truncf %13 : vector<128x4xf32> to vector<128x4xbf16>
    %c0_73 = arith.constant 0 : index
    %c0_74 = arith.constant 0 : index
    %91 = vector.load %arg11[%c0_73, %c0_74] : memref<4x8xbf16, #tpu.memory_space<vmem>>, vector<4x8xbf16>
    %cst_75 = arith.constant dense<0.000000e+00> : vector<128x8xf32>
    %92 = tpu.matmul %90, %91, %cst_75 {dimension_numbers = #tpu.dot_dimension_numbers<[1], [0], [0], [1], [0, 0, 1, 1], [], []>} : vector<128x4xbf16>, vector<4x8xbf16>, vector<128x8xf32> -> vector<128x8xf32>
    %93 = arith.addf %89, %92 : vector<128x8xf32>
    %c0_76 = arith.constant 0 : index
    %c0_77 = arith.constant 0 : index
    %94 = vector.load %arg12[%c0_76, %c0_77] : memref<1x8xf32, #tpu.memory_space<vmem>>, vector<1x8xf32>
    %95 = vector.broadcast %94 : vector<1x8xf32> to vector<128x8xf32>
    %96 = arith.addf %93, %95 : vector<128x8xf32>
    %97 = arith.truncf %96 : vector<128x8xf32> to vector<128x8xbf16>
    %98 = vector.shape_cast %97 : vector<128x8xbf16> to vector<8x16x8xbf16>
    %c0_78 = arith.constant 0 : index
    %c0_79 = arith.constant 0 : index
    %c0_80 = arith.constant 0 : index
    %c0_81 = arith.constant 0 : index
    %99 = vector.load %arg13[%c0_78, %c0_79, %c0_80, %c0_81] : memref<1x8x16x8xbf16, #tpu.memory_space<vmem>>, vector<1x8x16x8xbf16>
    %100 = vector.shape_cast %99 : vector<1x8x16x8xbf16> to vector<8x16x8xbf16>
    %101 = vector.shape_cast %98 : vector<8x16x8xbf16> to vector<1x8x16x8xbf16>
    tpu.vector_store %arg13[%c0_78, %c0_79, %c0_80, %c0_81], %101 {strides = array<i32>} : memref<1x8x16x8xbf16, #tpu.memory_space<vmem>>, vector<1x8x16x8xbf16>,
    return
  }
  func.func @transform_0(%arg0: i32, %arg1: i32) -> (i32, i32, i32, i32) {
    %c8_i32 = arith.constant 8 : i32
    %0 = arith.muli %arg1, %c8_i32 : i32
    %c1_i32 = arith.constant 1 : i32
    %1 = arith.subi %0, %c1_i32 : i32
    %c0_i32 = arith.constant 0 : i32
    %2 = arith.maxsi %1, %c0_i32 : i32
    %c0_i32_0 = arith.constant 0 : i32
    %c0_i32_1 = arith.constant 0 : i32
    %c0_i32_2 = arith.constant 0 : i32
    return %arg0, %2, %c0_i32_0, %c0_i32_1 : i32, i32, i32, i32
  }
  func.func @transform_1(%arg0: i32, %arg1: i32) -> (i32, i32, i32, i32) {
    %c0_i32 = arith.constant 0 : i32
    %c0_i32_0 = arith.constant 0 : i32
    %c0_i32_1 = arith.constant 0 : i32
    return %arg0, %arg1, %c0_i32, %c0_i32_0 : i32, i32, i32, i32
  }
  func.func @transform_2(%arg0: i32, %arg1: i32) -> (i32, i32, i32, i32) {
    %c1_i32 = arith.constant 1 : i32
    %0 = arith.addi %arg1, %c1_i32 : i32
    %c8_i32 = arith.constant 8 : i32
    %1 = arith.muli %0, %c8_i32 : i32
    %c15_i32 = arith.constant 15 : i32
    %2 = arith.minsi %1, %c15_i32 : i32
    %c0_i32 = arith.constant 0 : i32
    %c0_i32_0 = arith.constant 0 : i32
    %c0_i32_1 = arith.constant 0 : i32
    return %arg0, %2, %c0_i32, %c0_i32_0 : i32, i32, i32, i32
  }
  func.func @transform_3(%arg0: i32, %arg1: i32) -> (i32, i32) {
    %c0_i32 = arith.constant 0 : i32
    %c0_i32_0 = arith.constant 0 : i32
    %c0_i32_1 = arith.constant 0 : i32
    return %c0_i32, %c0_i32_0 : i32, i32
  }
  func.func @transform_4(%arg0: i32, %arg1: i32) -> (i32, i32) {
    %c0_i32 = arith.constant 0 : i32
    %c0_i32_0 = arith.constant 0 : i32
    %c0_i32_1 = arith.constant 0 : i32
    return %c0_i32, %c0_i32_0 : i32, i32
  }
  func.func @transform_5(%arg0: i32, %arg1: i32) -> (i32, i32, i32) {
    %c0_i32 = arith.constant 0 : i32
    %c0_i32_0 = arith.constant 0 : i32
    %c0_i32_1 = arith.constant 0 : i32
    %c0_i32_2 = arith.constant 0 : i32
    return %c0_i32, %c0_i32_0, %c0_i32_1 : i32, i32, i32
  }
  func.func @transform_6(%arg0: i32, %arg1: i32) -> (i32, i32) {
    %c0_i32 = arith.constant 0 : i32
    %c0_i32_0 = arith.constant 0 : i32
    %c0_i32_1 = arith.constant 0 : i32
    return %c0_i32, %c0_i32_0 : i32, i32
  }
  func.func @transform_7(%arg0: i32, %arg1: i32) -> (i32, i32) {
    %c0_i32 = arith.constant 0 : i32
    %c0_i32_0 = arith.constant 0 : i32
    %c0_i32_1 = arith.constant 0 : i32
    return %c0_i32, %c0_i32_0 : i32, i32
  }
  func.func @transform_8(%arg0: i32, %arg1: i32) -> (i32, i32) {
    %c0_i32 = arith.constant 0 : i32
    %c0_i32_0 = arith.constant 0 : i32
    %c0_i32_1 = arith.constant 0 : i32
    return %c0_i32, %c0_i32_0 : i32, i32
  }
  func.func @transform_9(%arg0: i32, %arg1: i32) -> (i32, i32) {
    %c0_i32 = arith.constant 0 : i32
    %c0_i32_0 = arith.constant 0 : i32
    %c0_i32_1 = arith.constant 0 : i32
    return %c0_i32, %c0_i32_0 : i32, i32
  }
  func.func @transform_10(%arg0: i32, %arg1: i32) -> (i32, i32) {
    %c0_i32 = arith.constant 0 : i32
    %c0_i32_0 = arith.constant 0 : i32
    %c0_i32_1 = arith.constant 0 : i32
    return %c0_i32, %c0_i32_0 : i32, i32
  }
  func.func @transform_11(%arg0: i32, %arg1: i32) -> (i32, i32, i32, i32) {
    %c0_i32 = arith.constant 0 : i32
    %c0_i32_0 = arith.constant 0 : i32
    %c0_i32_1 = arith.constant 0 : i32
    return %arg0, %arg1, %c0_i32, %c0_i32_0 : i32, i32, i32, i32
  }
}

</mosaic_0001>

<llo_original>
// kernel: tpu_custom_call.1
$region0: #{tpu_custom_call.1}
  #allocation0 [shape = 'u32[]', space=smem, size = 0x4, offset = 0x4, fixed_abs, tag = 'smem constant byte address 0x4 - core index']
  #allocation1 [shape = 'u32[144,128]{1,0:T(1,128)}', space=vmem, size = 0x12000, scoped, tag = 'internal scratch']
  #allocation2 [shape = 'bf16[10,18,4]{2,1,0:T(8,128)(2,1)}', space=vmem, size = 0xf000, scoped, tag = 'scratch operand']
  %s0 = inlined_call_operand.vmem [shape: bf16[2,16,16,4], index: 0, kind: input, shape index: {}]
  %s1 = inlined_call_operand.vmem [shape: bf16[2,16,16,4], index: 1, kind: input, shape index: {}]
  %s2 = inlined_call_operand.vmem [shape: bf16[2,16,16,4], index: 2, kind: input, shape index: {}]
  %s3 = inlined_call_operand.vmem [shape: bf16[4,4], index: 3, kind: input, shape index: {}]
  %s4 = inlined_call_operand.vmem [shape: f32[1,4], index: 4, kind: input, shape index: {}]
  %s5 = inlined_call_operand.vmem [shape: bf16[9,4,8], index: 5, kind: input, shape index: {}]
  %s6 = inlined_call_operand.vmem [shape: f32[1,8], index: 6, kind: input, shape index: {}]
  %s7 = inlined_call_operand.vmem [shape: f32[1,8], index: 7, kind: input, shape index: {}]
  %s8 = inlined_call_operand.vmem [shape: bf16[8,8], index: 8, kind: input, shape index: {}]
  %s9 = inlined_call_operand.vmem [shape: bf16[4,8], index: 9, kind: input, shape index: {}]
  %s10 = inlined_call_operand.vmem [shape: f32[1,8], index: 10, kind: input, shape index: {}]
  %s11 = inlined_call_operand.vmem [shape: bf16[2,16,16,8], index: 11, kind: output, shape index: {}]
  %s12 = sld [smem:[#allocation0]]
  $region85: #{tpu_custom_call.1} parent=0
    _
  %s14 = ssub.s32 1, %s12
  %s15 = scalar_select 0, %s14, %s12
  loop: start=0, step=1, limit=6
  $region2: #{tpu_custom_call.1} parent=0 // loop_pre_header
    _
  $region3: #{tpu_custom_call.1} parent=0 // loop_header
    %s17 = sphi 0, %s21
    %p18 = scmp.ge.s32.totalorder %s17, 6
    %s24 = sphi 0, %s36
    %s25 = sphi 0, %s32
    %s26 = sphi 0, %s24
    %s27 = sphi 0, %s25
    %s28 = sphi 0, %s26
    %s29 = sphi 0, %s27
    %s49 = sphi 0, %s51
    %s52 = sphi 0, %s49
    %s53 = sphi 0, %s52
    %s69 = sphi 0, %s53
    %s77 = sphi 0, %s79
    %s80 = sphi 0, %s77
    %s81 = sphi 0, %s80
    %s97 = sphi 0, %s81
    %s113 = sphi 0, %s115
    %s116 = sphi 0, %s113
    %s117 = sphi 0, %s116
    %s133 = sphi 0, %s117
    %s137 = sphi 0, %s137
    %s139 = sphi 0, %s137
    %s140 = sphi 0, %s139
    %s154 = sphi 0, %s140
    %s158 = sphi 0, %s158
    %s160 = sphi 0, %s158
    %s161 = sphi 0, %s160
    %s175 = sphi 0, %s161
    %s179 = sphi 0, %s179
    %s181 = sphi 0, %s179
    %s182 = sphi 0, %s181
    %s196 = sphi 0, %s182
    %s200 = sphi 0, %s200
    %s202 = sphi 0, %s200
    %s203 = sphi 0, %s202
    %s217 = sphi 0, %s203
    %s221 = sphi 0, %s221
    %s223 = sphi 0, %s221
    %s224 = sphi 0, %s223
    %s238 = sphi 0, %s224
    %s242 = sphi 0, %s242
    %s244 = sphi 0, %s242
    %s245 = sphi 0, %s244
    %s259 = sphi 0, %s245
    %s263 = sphi 0, %s263
    %s265 = sphi 0, %s263
    %s266 = sphi 0, %s265
    %s280 = sphi 0, %s266
    %s284 = sphi 0, %s284
    %s286 = sphi 0, %s284
    %s287 = sphi 0, %s286
    %s301 = sphi 0, %s287
    %s309 = sphi 0, %s311
    %s312 = sphi 0, %s309
    %s313 = sphi 0, %s312
    %s329 = sphi 0, %s313
  $region4: #{tpu_custom_call.1} parent=0 // loop_header_branch
    %20 = sbr.rel (%p18) target = $region8
  $region5: #{tpu_custom_call.1} parent=0 // loop_body
    %s22 = ssub.s32 %s17, 1
    %s23 = ssub.s32 %s17, 2
    %s30 = sadd.s32 1, %s25
    %p31 = scmp.ge.s32.totalorder %s30, 2
    %s32 = scalar_select %p31, 0, %s30
    %s33 = sadd.s32 1, %s24
    %s34 = scalar_select %p31, %s33, %s24
    %p35 = scmp.ge.s32.totalorder %s34, 2
    %s36 = scalar_select %p35, 0, %s34
    %s37 = smul.u32 %s25, 8
    %s38 = ssub.s32 %s37, 1
    %p39 = scmp.gt.s32.totalorder %s38, 0
    %s40 = scalar_select %p39, %s38, 0
    %s41 = smul.u32 %s32, 8
    %s42 = ssub.s32 %s41, 1
    %p43 = scmp.gt.s32.totalorder %s42, 0
    %s44 = scalar_select %p43, %s42, 0
    %s45 = ssub.s32 %s24, %s36
    %s46 = ssub.s32 %s40, %s44
    %s47 = sor.u32 %s45, %s46
    %p48 = scmp.eq.s32.totalorder %s47, 0
    %s50 = sadd.s32 %s49, 1
    %s51 = scalar_select %p48, %s49, %s50
    %p54 = pneg %p48
    %p55 = scmp.eq.s32.totalorder %s17, 3
    %p56 = por %p54, %p55
    %p57 = scmp.ne.s32.totalorder %s49, %s52
    %p58 = scmp.eq.s32.totalorder %s17, 0
    %p59 = por %p57, %p58
    %p60 = scmp.ne.s32.totalorder %s49, %s52
    %p61 = scmp.eq.s32.totalorder %s22, 3
    %p62 = por %p60, %p61
    %p63 = scmp.ne.s32.totalorder %s52, %s53
    %p64 = scmp.eq.s32.totalorder %s22, 0
    %p65 = por %p63, %p64
    %p66 = scmp.ne.s32.totalorder %s52, %s53
    %p67 = scmp.eq.s32.totalorder %s23, 3
    %p68 = por %p66, %p67
    %p70 = scmp.ne.s32.totalorder %s53, %s69
    %p71 = scmp.eq.s32.totalorder %s23, 0
    %p72 = por %p70, %p71
    %s73 = ssub.s32 %s24, %s36
    %s74 = ssub.s32 %s25, %s32
    %s75 = sor.u32 %s73, %s74
    %p76 = scmp.eq.s32.totalorder %s75, 0
    %s78 = sadd.s32 %s77, 1
    %s79 = scalar_select %p76, %s77, %s78
    %p82 = pneg %p76
    %p83 = scmp.eq.s32.totalorder %s17, 3
    %p84 = por %p82, %p83
    %p85 = scmp.ne.s32.totalorder %s77, %s80
    %p86 = scmp.eq.s32.totalorder %s17, 0
    %p87 = por %p85, %p86
    %p88 = scmp.ne.s32.totalorder %s77, %s80
    %p89 = scmp.eq.s32.totalorder %s22, 3
    %p90 = por %p88, %p89
    %p91 = scmp.ne.s32.totalorder %s80, %s81
    %p92 = scmp.eq.s32.totalorder %s22, 0
    %p93 = por %p91, %p92
    %p94 = scmp.ne.s32.totalorder %s80, %s81
    %p95 = scmp.eq.s32.totalorder %s23, 3
    %p96 = por %p94, %p95
    %p98 = scmp.ne.s32.totalorder %s81, %s97
    %p99 = scmp.eq.s32.totalorder %s23, 0
    %p100 = por %p98, %p99
    %s101 = sadd.s32 %s25, 1
    %s102 = smul.u32 %s101, 8
    %p103 = scmp.lt.s32.totalorder %s102, 15
    %s104 = scalar_select %p103, %s102, 15
    %s105 = sadd.s32 %s32, 1
    %s106 = smul.u32 %s105, 8
    %p107 = scmp.lt.s32.totalorder %s106, 15
    %s108 = scalar_select %p107, %s106, 15
    %s109 = ssub.s32 %s24, %s36
    %s110 = ssub.s32 %s104, %s108
    %s111 = sor.u32 %s109, %s110
    %p112 = scmp.eq.s32.totalorder %s111, 0
    %s114 = sadd.s32 %s113, 1
    %s115 = scalar_select %p112, %s113, %s114
    %p118 = pneg %p112
    %p119 = scmp.eq.s32.totalorder %s17, 3
    %p120 = por %p118, %p119
    %p121 = scmp.ne.s32.totalorder %s113, %s116
    %p122 = scmp.eq.s32.totalorder %s17, 0
    %p123 = por %p121, %p122
    %p124 = scmp.ne.s32.totalorder %s113, %s116
    %p125 = scmp.eq.s32.totalorder %s22, 3
    %p126 = por %p124, %p125
    %p127 = scmp.ne.s32.totalorder %s116, %s117
    %p128 = scmp.eq.s32.totalorder %s22, 0
    %p129 = por %p127, %p128
    %p130 = scmp.ne.s32.totalorder %s116, %s117
    %p131 = scmp.eq.s32.totalorder %s23, 3
    %p132 = por %p130, %p131
    %p134 = scmp.ne.s32.totalorder %s117, %s133
    %p135 = scmp.eq.s32.totalorder %s23, 0
    %p136 = por %p134, %p135
    %s138 = sadd.s32 %s137, 1
    %p141 = scmp.eq.s32.totalorder %s17, 3
    %p142 = scmp.ne.s32.totalorder %s137, %s139
    %p143 = scmp.eq.s32.totalorder %s17, 0
    %p144 = por %p142, %p143
    %p145 = scmp.ne.s32.totalorder %s137, %s139
    %p146 = scmp.eq.s32.totalorder %s22, 3
    %p147 = por %p145, %p146
    %p148 = scmp.ne.s32.totalorder %s139, %s140
    %p149 = scmp.eq.s32.totalorder %s22, 0
    %p150 = por %p148, %p149
    %p151 = scmp.ne.s32.totalorder %s139, %s140
    %p152 = scmp.eq.s32.totalorder %s23, 3
    %p153 = por %p151, %p152
    %p155 = scmp.ne.s32.totalorder %s140, %s154
    %p156 = scmp.eq.s32.totalorder %s23, 0
    %p157 = por %p155, %p156
    %s159 = sadd.s32 %s158, 1
    %p162 = scmp.eq.s32.totalorder %s17, 3
    %p163 = scmp.ne.s32.totalorder %s158, %s160
    %p164 = scmp.eq.s32.totalorder %s17, 0
    %p165 = por %p163, %p164
    %p166 = scmp.ne.s32.totalorder %s158, %s160
    %p167 = scmp.eq.s32.totalorder %s22, 3
    %p168 = por %p166, %p167
    %p169 = scmp.ne.s32.totalorder %s160, %s161
    %p170 = scmp.eq.s32.totalorder %s22, 0
    %p171 = por %p169, %p170
    %p172 = scmp.ne.s32.totalorder %s160, %s161
    %p173 = scmp.eq.s32.totalorder %s23, 3
    %p174 = por %p172, %p173
    %p176 = scmp.ne.s32.totalorder %s161, %s175
    %p177 = scmp.eq.s32.totalorder %s23, 0
    %p178 = por %p176, %p177
    %s180 = sadd.s32 %s179, 1
    %p183 = scmp.eq.s32.totalorder %s17, 3
    %p184 = scmp.ne.s32.totalorder %s179, %s181
    %p185 = scmp.eq.s32.totalorder %s17, 0
    %p186 = por %p184, %p185
    %p187 = scmp.ne.s32.totalorder %s179, %s181
    %p188 = scmp.eq.s32.totalorder %s22, 3
    %p189 = por %p187, %p188
    %p190 = scmp.ne.s32.totalorder %s181, %s182
    %p191 = scmp.eq.s32.totalorder %s22, 0
    %p192 = por %p190, %p191
    %p193 = scmp.ne.s32.totalorder %s181, %s182
    %p194 = scmp.eq.s32.totalorder %s23, 3
    %p195 = por %p193, %p194
    %p197 = scmp.ne.s32.totalorder %s182, %s196
    %p198 = scmp.eq.s32.totalorder %s23, 0
    %p199 = por %p197, %p198
    %s201 = sadd.s32 %s200, 1
    %p204 = scmp.eq.s32.totalorder %s17, 3
    %p205 = scmp.ne.s32.totalorder %s200, %s202
    %p206 = scmp.eq.s32.totalorder %s17, 0
    %p207 = por %p205, %p206
    %p208 = scmp.ne.s32.totalorder %s200, %s202
    %p209 = scmp.eq.s32.totalorder %s22, 3
    %p210 = por %p208, %p209
    %p211 = scmp.ne.s32.totalorder %s202, %s203
    %p212 = scmp.eq.s32.totalorder %s22, 0
    %p213 = por %p211, %p212
    %p214 = scmp.ne.s32.totalorder %s202, %s203
    %p215 = scmp.eq.s32.totalorder %s23, 3
    %p216 = por %p214, %p215
    %p218 = scmp.ne.s32.totalorder %s203, %s217
    %p219 = scmp.eq.s32.totalorder %s23, 0
    %p220 = por %p218, %p219
    %s222 = sadd.s32 %s221, 1
    %p225 = scmp.eq.s32.totalorder %s17, 3
    %p226 = scmp.ne.s32.totalorder %s221, %s223
    %p227 = scmp.eq.s32.totalorder %s17, 0
    %p228 = por %p226, %p227
    %p229 = scmp.ne.s32.totalorder %s221, %s223
    %p230 = scmp.eq.s32.totalorder %s22, 3
    %p231 = por %p229, %p230
    %p232 = scmp.ne.s32.totalorder %s223, %s224
    %p233 = scmp.eq.s32.totalorder %s22, 0
    %p234 = por %p232, %p233
    %p235 = scmp.ne.s32.totalorder %s223, %s224
    %p236 = scmp.eq.s32.totalorder %s23, 3
    %p237 = por %p235, %p236
    %p239 = scmp.ne.s32.totalorder %s224, %s238
    %p240 = scmp.eq.s32.totalorder %s23, 0
    %p241 = por %p239, %p240
    %s243 = sadd.s32 %s242, 1
    %p246 = scmp.eq.s32.totalorder %s17, 3
    %p247 = scmp.ne.s32.totalorder %s242, %s244
    %p248 = scmp.eq.s32.totalorder %s17, 0
    %p249 = por %p247, %p248
    %p250 = scmp.ne.s32.totalorder %s242, %s244
    %p251 = scmp.eq.s32.totalorder %s22, 3
    %p252 = por %p250, %p251
    %p253 = scmp.ne.s32.totalorder %s244, %s245
    %p254 = scmp.eq.s32.totalorder %s22, 0
    %p255 = por %p253, %p254
    %p256 = scmp.ne.s32.totalorder %s244, %s245
    %p257 = scmp.eq.s32.totalorder %s23, 3
    %p258 = por %p256, %p257
    %p260 = scmp.ne.s32.totalorder %s245, %s259
    %p261 = scmp.eq.s32.totalorder %s23, 0
    %p262 = por %p260, %p261
    %s264 = sadd.s32 %s263, 1
    %p267 = scmp.eq.s32.totalorder %s17, 3
    %p268 = scmp.ne.s32.totalorder %s263, %s265
    %p269 = scmp.eq.s32.totalorder %s17, 0
    %p270 = por %p268, %p269
    %p271 = scmp.ne.s32.totalorder %s263, %s265
    %p272 = scmp.eq.s32.totalorder %s22, 3
    %p273 = por %p271, %p272
    %p274 = scmp.ne.s32.totalorder %s265, %s266
    %p275 = scmp.eq.s32.totalorder %s22, 0
    %p276 = por %p274, %p275
    %p277 = scmp.ne.s32.totalorder %s265, %s266
    %p278 = scmp.eq.s32.totalorder %s23, 3
    %p279 = por %p277, %p278
    %p281 = scmp.ne.s32.totalorder %s266, %s280
    %p282 = scmp.eq.s32.totalorder %s23, 0
    %p283 = por %p281, %p282
    %s285 = sadd.s32 %s284, 1
    %p288 = scmp.eq.s32.totalorder %s17, 3
    %p289 = scmp.ne.s32.totalorder %s284, %s286
    %p290 = scmp.eq.s32.totalorder %s17, 0
    %p291 = por %p289, %p290
    %p292 = scmp.ne.s32.totalorder %s284, %s286
    %p293 = scmp.eq.s32.totalorder %s22, 3
    %p294 = por %p292, %p293
    %p295 = scmp.ne.s32.totalorder %s286, %s287
    %p296 = scmp.eq.s32.totalorder %s22, 0
    %p297 = por %p295, %p296
    %p298 = scmp.ne.s32.totalorder %s286, %s287
    %p299 = scmp.eq.s32.totalorder %s23, 3
    %p300 = por %p298, %p299
    %p302 = scmp.ne.s32.totalorder %s287, %s301
    %p303 = scmp.eq.s32.totalorder %s23, 0
    %p304 = por %p302, %p303
    %s305 = ssub.s32 %s24, %s36
    %s306 = ssub.s32 %s25, %s32
    %s307 = sor.u32 %s305, %s306
    %p308 = scmp.eq.s32.totalorder %s307, 0
    %s310 = sadd.s32 %s309, 1
    %s311 = scalar_select %p308, %s309, %s310
    %p314 = pneg %p308
    %p315 = scmp.eq.s32.totalorder %s17, 3
    %p316 = por %p314, %p315
    %p317 = scmp.ne.s32.totalorder %s309, %s312
    %p318 = scmp.eq.s32.totalorder %s17, 0
    %p319 = por %p317, %p318
    %p320 = scmp.ne.s32.totalorder %s309, %s312
    %p321 = scmp.eq.s32.totalorder %s22, 3
    %p322 = por %p320, %p321
    %p323 = scmp.ne.s32.totalorder %s312, %s313
    %p324 = scmp.eq.s32.totalorder %s22, 0
    %p325 = por %p323, %p324
    %p326 = scmp.ne.s32.totalorder %s312, %s313
    %p327 = scmp.eq.s32.totalorder %s23, 3
    %p328 = por %p326, %p327
    %p330 = scmp.ne.s32.totalorder %s313, %s329
    %p331 = scmp.eq.s32.totalorder %s23, 0
    %p332 = por %p330, %p331
    %p333 = scmp.le.s32.totalorder 1, %s17
    %p334 = scmp.lt.s32.totalorder %s17, 5
    %p335 = pnand %p333, %p334
    %p336 = pneg %p335
    // Predicated region
    $region9: #{tpu_custom_call.1} parent=5 // pred_check
      _
    $region10: #{tpu_custom_call.1} parent=5 // pred_check_branch
      %338 = sbr.rel (%p335) target = $region12
    $region11: #{tpu_custom_call.1} parent=5 // pred_region
      %s339 = ssub.s32 %s17, 1
      // Predicated region
      $region13: #{tpu_custom_call.1} parent=11 // pred_check
        %p340 = pneg %p150
      $region14: #{tpu_custom_call.1} parent=11 // pred_check_branch
        %342 = sbr.rel (%p340) target = $region16
      $region15: #{tpu_custom_call.1} parent=11 // pred_region
        _
      $region16: #{tpu_custom_call.1} parent=11 // pred_fallthru
        _
      // Predicated region
      $region17: #{tpu_custom_call.1} parent=11 // pred_check
        %p343 = pneg %p171
      $region18: #{tpu_custom_call.1} parent=11 // pred_check_branch
        %345 = sbr.rel (%p343) target = $region20
      $region19: #{tpu_custom_call.1} parent=11 // pred_region
        _
      $region20: #{tpu_custom_call.1} parent=11 // pred_fallthru
        _
      // Predicated region
      $region21: #{tpu_custom_call.1} parent=11 // pred_check
        %p346 = pneg %p192
      $region22: #{tpu_custom_call.1} parent=11 // pred_check_branch
        %348 = sbr.rel (%p346) target = $region24
      $region23: #{tpu_custom_call.1} parent=11 // pred_region
        _
      $region24: #{tpu_custom_call.1} parent=11 // pred_fallthru
        _
      // Predicated region
      $region25: #{tpu_custom_call.1} parent=11 // pred_check
        %p349 = pneg %p213
      $region26: #{tpu_custom_call.1} parent=11 // pred_check_branch
        %351 = sbr.rel (%p349) target = $region28
      $region27: #{tpu_custom_call.1} parent=11 // pred_region
        _
      $region28: #{tpu_custom_call.1} parent=11 // pred_fallthru
        _
      // Predicated region
      $region29: #{tpu_custom_call.1} parent=11 // pred_check
        %p352 = pneg %p234
      $region30: #{tpu_custom_call.1} parent=11 // pred_check_branch
        %354 = sbr.rel (%p352) target = $region32
      $region31: #{tpu_custom_call.1} parent=11 // pred_region
        _
      $region32: #{tpu_custom_call.1} parent=11 // pred_fallthru
        _
      // Predicated region
      $region33: #{tpu_custom_call.1} parent=11 // pred_check
        %p355 = pneg %p255
      $region34: #{tpu_custom_call.1} parent=11 // pred_check_branch
        %357 = sbr.rel (%p355) target = $region36
      $region35: #{tpu_custom_call.1} parent=11 // pred_region
        _
      $region36: #{tpu_custom_call.1} parent=11 // pred_fallthru
        _
      // Predicated region
      $region37: #{tpu_custom_call.1} parent=11 // pred_check
        %p358 = pneg %p276
      $region38: #{tpu_custom_call.1} parent=11 // pred_check_branch
        %360 = sbr.rel (%p358) target = $region40
      $region39: #{tpu_custom_call.1} parent=11 // pred_region
        _
      $region40: #{tpu_custom_call.1} parent=11 // pred_fallthru
        _
      // Predicated region
      $region41: #{tpu_custom_call.1} parent=11 // pred_check
        %p361 = pneg %p297
      $region42: #{tpu_custom_call.1} parent=11 // pred_check_branch
        %363 = sbr.rel (%p361) target = $region44
      $region43: #{tpu_custom_call.1} parent=11 // pred_region
        _
      $region44: #{tpu_custom_call.1} parent=11 // pred_fallthru
        _
    $region12: #{tpu_custom_call.1} parent=5 // pred_fallthru
      _
    %p364 = scmp.lt.s32.totalorder %s17, 4
    // Predicated region
    $region45: #{tpu_custom_call.1} parent=5 // pred_check
      %p365 = pneg %p364
    $region46: #{tpu_custom_call.1} parent=5 // pred_check_branch
      %367 = sbr.rel (%p365) target = $region48
    $region47: #{tpu_custom_call.1} parent=5 // pred_region
      // Predicated region
      $region49: #{tpu_custom_call.1} parent=47 // pred_check
        %p368 = pneg %p59
      $region50: #{tpu_custom_call.1} parent=47 // pred_check_branch
        %370 = sbr.rel (%p368) target = $region52
      $region51: #{tpu_custom_call.1} parent=47 // pred_region
        %s371 = smul.u32 %s25, 8
        %s372 = ssub.s32 %s371, 1
        %p373 = scmp.gt.s32.totalorder %s372, 0
        %s374 = scalar_select %p373, %s372, 0
        %p375 = scmp.lt.s32.totalorder %s24, 1
        %s376 = scalar_select %p375, %s24, 1
        %p377 = scmp.lt.s32.totalorder %s374, 15
        %s378 = scalar_select %p377, %s374, 15
        %s379 = smul.addr %s378, 2
        %s380 = smul.addr %s376, 32
        %s381 = sadd.s32 %s379, %s380
        %s382 = smul.addr %s381, 4
        %s383 = scalar_lea.vmem %s0, %s382
        %s384 = smul.u32 %s25, 8
        %s385 = ssub.s32 %s384, 1
        %p386 = scmp.gt.s32.totalorder %s385, 0
        %s387 = scalar_select %p386, %s385, 0
      $region52: #{tpu_custom_call.1} parent=47 // pred_fallthru
        _
      // Predicated region
      $region53: #{tpu_custom_call.1} parent=47 // pred_check
        %p388 = pneg %p87
      $region54: #{tpu_custom_call.1} parent=47 // pred_check_branch
        %390 = sbr.rel (%p388) target = $region56
      $region55: #{tpu_custom_call.1} parent=47 // pred_region
        %s391 = smul.u32 8, %s25
        %p392 = scmp.lt.s32.totalorder %s24, 1
        %s393 = scalar_select %p392, %s24, 1
        %p394 = scmp.lt.s32.totalorder %s391, 15
        %s395 = scalar_select %p394, %s391, 15
        %s396 = smul.addr %s395, 2
        %s397 = smul.addr %s393, 32
        %s398 = sadd.s32 %s396, %s397
        %s399 = smul.addr %s398, 4
        %s400 = scalar_lea.vmem %s1, %s399
        %s401 = smul.u32 8, %s25
      $region56: #{tpu_custom_call.1} parent=47 // pred_fallthru
        _
      // Predicated region
      $region57: #{tpu_custom_call.1} parent=47 // pred_check
        %p402 = pneg %p123
      $region58: #{tpu_custom_call.1} parent=47 // pred_check_branch
        %404 = sbr.rel (%p402) target = $region60
      $region59: #{tpu_custom_call.1} parent=47 // pred_region
        %s405 = sadd.s32 %s25, 1
        %s406 = smul.u32 %s405, 8
        %p407 = scmp.lt.s32.totalorder %s406, 15
        %s408 = scalar_select %p407, %s406, 15
        %p409 = scmp.lt.s32.totalorder %s24, 1
        %s410 = scalar_select %p409, %s24, 1
        %p411 = scmp.lt.s32.totalorder %s408, 15
        %s412 = scalar_select %p411, %s408, 15
        %s413 = smul.addr %s412, 2
        %s414 = smul.addr %s410, 32
        %s415 = sadd.s32 %s413, %s414
        %s416 = smul.addr %s415, 4
        %s417 = scalar_lea.vmem %s2, %s416
        %s418 = sadd.s32 %s25, 1
        %s419 = smul.u32 %s418, 8
        %p420 = scmp.lt.s32.totalorder %s419, 15
        %s421 = scalar_select %p420, %s419, 15
      $region60: #{tpu_custom_call.1} parent=47 // pred_fallthru
        _
    $region48: #{tpu_custom_call.1} parent=5 // pred_fallthru
      _
    %p422 = scmp.le.s32.totalorder 1, %s17
    %p423 = scmp.lt.s32.totalorder %s17, 5
    %p424 = pnand %p422, %p423
    %p425 = pneg %p424
    // Predicated region
    $region61: #{tpu_custom_call.1} parent=5 // pred_check
      _
    $region62: #{tpu_custom_call.1} parent=5 // pred_check_branch
      %427 = sbr.rel (%p424) target = $region64
    $region63: #{tpu_custom_call.1} parent=5 // pred_region
      %s428 = ssub.s32 %s17, 1
      %s429 = smul.u32 %s27, 8
      %s430 = ssub.s32 %s429, 1
      %p431 = scmp.gt.s32.totalorder %s430, 0
      %s432 = scalar_select %p431, %s430, 0
      %p433 = scmp.lt.s32.totalorder %s26, 1
      %s434 = scalar_select %p433, %s26, 1
      %p435 = scmp.lt.s32.totalorder %s432, 15
      %s436 = scalar_select %p435, %s432, 15
      %s437 = smul.addr %s436, 2
      %s438 = smul.addr %s434, 32
      %s439 = sadd.s32 %s437, %s438
      %s440 = smul.addr %s439, 4
      %s441 = scalar_lea.vmem %s0, %s440
      %p442 = pneg %p65
      %p443 = pneg %p62
      %s444 = smul.u32 8, %s27
      %p445 = scmp.lt.s32.totalorder %s26, 1
      %s446 = scalar_select %p445, %s26, 1
      %p447 = scmp.lt.s32.totalorder %s444, 15
      %s448 = scalar_select %p447, %s444, 15
      %s449 = smul.addr %s448, 2
      %s450 = smul.addr %s446, 32
      %s451 = sadd.s32 %s449, %s450
      %s452 = smul.addr %s451, 4
      %s453 = scalar_lea.vmem %s1, %s452
      %p454 = pneg %p93
      %p455 = pneg %p90
      %s456 = sadd.s32 %s27, 1
      %s457 = smul.u32 %s456, 8
      %p458 = scmp.lt.s32.totalorder %s457, 15
      %s459 = scalar_select %p458, %s457, 15
      %p460 = scmp.lt.s32.totalorder %s26, 1
      %s461 = scalar_select %p460, %s26, 1
      %p462 = scmp.lt.s32.totalorder %s459, 15
      %s463 = scalar_select %p462, %s459, 15
      %s464 = smul.addr %s463, 2
      %s465 = smul.addr %s461, 32
      %s466 = sadd.s32 %s464, %s465
      %s467 = smul.addr %s466, 4
      %s468 = scalar_lea.vmem %s2, %s467
      %p469 = pneg %p129
      %p470 = pneg %p126
      %p471 = pneg %p150
      %p472 = pneg %p147
      %p473 = pneg %p171
      %p474 = pneg %p168
      %p475 = pneg %p192
      %p476 = pneg %p189
      %p477 = pneg %p213
      %p478 = pneg %p210
      %p479 = pneg %p234
      %p480 = pneg %p231
      %p481 = pneg %p255
      %p482 = pneg %p252
      %p483 = pneg %p276
      %p484 = pneg %p273
      %p485 = pneg %p297
      %p486 = pneg %p294
      %p487 = pneg %p325
      %p488 = pneg %p322
      %s489 = smul.u32 8, %s27
      %p490 = scmp.lt.s32.totalorder %s26, 1
      %s491 = scalar_select %p490, %s26, 1
      %p492 = scmp.lt.s32.totalorder %s489, 15
      %s493 = scalar_select %p492, %s489, 15
      %s494 = smul.addr %s493, 2
      %s495 = smul.addr %s491, 32
      %s496 = sadd.s32 %s494, %s495
      %s497 = smul.addr %s496, 4
      %s498 = scalar_lea.vmem %s11, %s497
      %s499 = smul.u32 %s27, 8
      %s500 = ssub.s32 %s499, 1
      %p501 = scmp.gt.s32.totalorder %s500, 0
      %s502 = scalar_select %p501, %s500, 0
      %p503 = scmp.lt.s32.totalorder %s26, 1
      %s504 = scalar_select %p503, %s26, 1
      %p505 = scmp.lt.s32.totalorder %s502, 15
      %s506 = scalar_select %p505, %s502, 15
      %s507 = smul.addr %s506, 2
      %s508 = smul.addr %s504, 32
      %s509 = sadd.s32 %s507, %s508
      %s510 = smul.addr %s509, 4
      %s511 = scalar_lea.vmem %s0, %s510
      %s512 = smul.u32 %s27, 8
      %s513 = ssub.s32 %s512, 1
      %p514 = scmp.gt.s32.totalorder %s513, 0
      %s515 = scalar_select %p514, %s513, 0
      %s516 = smul.u32 8, %s27
      %p517 = scmp.lt.s32.totalorder %s26, 1
      %s518 = scalar_select %p517, %s26, 1
      %p519 = scmp.lt.s32.totalorder %s516, 15
      %s520 = scalar_select %p519, %s516, 15
      %s521 = smul.addr %s520, 2
      %s522 = smul.addr %s518, 32
      %s523 = sadd.s32 %s521, %s522
      %s524 = smul.addr %s523, 4
      %s525 = scalar_lea.vmem %s1, %s524
      %s526 = smul.u32 8, %s27
      %s527 = sadd.s32 %s27, 1
      %s528 = smul.u32 %s527, 8
      %p529 = scmp.lt.s32.totalorder %s528, 15
      %s530 = scalar_select %p529, %s528, 15
      %p531 = scmp.lt.s32.totalorder %s26, 1
      %s532 = scalar_select %p531, %s26, 1
      %p533 = scmp.lt.s32.totalorder %s530, 15
      %s534 = scalar_select %p533, %s530, 15
      %s535 = smul.addr %s534, 2
      %s536 = smul.addr %s532, 32
      %s537 = sadd.s32 %s535, %s536
      %s538 = smul.addr %s537, 4
      %s539 = scalar_lea.vmem %s2, %s538
      %s540 = sadd.s32 %s27, 1
      %s541 = smul.u32 %s540, 8
      %p542 = scmp.lt.s32.totalorder %s541, 15
      %s543 = scalar_select %p542, %s541, 15
      %s544 = smul.u32 8, %s27
      %p545 = scmp.lt.s32.totalorder %s26, 1
      %s546 = scalar_select %p545, %s26, 1
      %p547 = scmp.lt.s32.totalorder %s544, 15
      %s548 = scalar_select %p547, %s544, 15
      %s549 = smul.addr %s548, 2
      %s550 = smul.addr %s546, 32
      %s551 = sadd.s32 %s549, %s550
      %s552 = smul.addr %s551, 4
      %s553 = scalar_lea.vmem %s11, %s552
      %s554 = smul.u32 8, %s27
      %v556 = vld [vmem:[%s511] sm:$0xf]
      %v557 = vld [vmem:[%s511 + $0x4] sm:$0xf]
      %v558 = vld [vmem:[%s525] sm:$0xf]
      %v559 = vld [vmem:[%s525 + $0x4] sm:$0xf]
      %v560 = vld [vmem:[%s525 + $0x8] sm:$0xf]
      %v561 = vld [vmem:[%s525 + $0xc] sm:$0xf]
      %v562 = vld [vmem:[%s525 + $0x10] sm:$0xf]
      %v563 = vld [vmem:[%s525 + $0x14] sm:$0xf]
      %v564 = vld [vmem:[%s525 + $0x18] sm:$0xf]
      %v565 = vld [vmem:[%s525 + $0x1c] sm:$0xf]
      %v566 = vld [vmem:[%s525 + $0x20] sm:$0xf]
      %v567 = vld [vmem:[%s525 + $0x24] sm:$0xf]
      %v568 = vld [vmem:[%s525 + $0x28] sm:$0xf]
      %v569 = vld [vmem:[%s525 + $0x2c] sm:$0xf]
      %v570 = vld [vmem:[%s525 + $0x30] sm:$0xf]
      %v571 = vld [vmem:[%s525 + $0x34] sm:$0xf]
      %v572 = vld [vmem:[%s525 + $0x38] sm:$0xf]
      %v573 = vld [vmem:[%s525 + $0x3c] sm:$0xf]
      %v574 = vld [vmem:[%s539] sm:$0xf]
      %v575 = vld [vmem:[%s539 + $0x4] sm:$0xf]
      %v576 = vld [vmem:[%s3] sm:$0x3]
      %v577 = vld [vmem:[%s4] sm:$0x1]
      %v579 = vlaneseq
      %v580 = vshrl.u32 %v579, 7
      %v581 = vsub.s32 0, %v580
      %v582 = vrot.slane %v577, %v581
      %v604 = vunpack.c.l.b16 %v556
      %v605 = vunpack.c.l.b16 %v557
      %v606 = vunpack.c.l.b16 %v558
      %v607 = vunpack.c.l.b16 %v559
      %v608 = vunpack.c.l.b16 %v560
      %v609 = vunpack.c.l.b16 %v561
      %v610 = vunpack.c.l.b16 %v562
      %v611 = vunpack.c.l.b16 %v563
      %v612 = vunpack.c.l.b16 %v564
      %v613 = vunpack.c.l.b16 %v565
      %v614 = vunpack.c.l.b16 %v566
      %v615 = vunpack.c.l.b16 %v567
      %v616 = vunpack.c.l.b16 %v568
      %v617 = vunpack.c.l.b16 %v569
      %v618 = vunpack.c.l.b16 %v570
      %v619 = vunpack.c.l.b16 %v571
      %v620 = vunpack.c.l.b16 %v572
      %v621 = vunpack.c.l.b16 %v573
      %v622 = vunpack.c.l.b16 %v574
      %v623 = vunpack.c.l.b16 %v575
      %v624 = vpack.c.b16 %v605, %v604
      %v625 = vpack.c.b16 %v607, %v606
      %v626 = vpack.c.b16 %v609, %v608
      %v627 = vpack.c.b16 %v611, %v610
      %v628 = vpack.c.b16 %v613, %v612
      %v629 = vpack.c.b16 %v615, %v614
      %v630 = vpack.c.b16 %v617, %v616
      %v631 = vpack.c.b16 %v619, %v618
      %v632 = vpack.c.b16 %v621, %v620
      %v633 = vpack.c.b16 %v623, %v622
      %vm634 = vcmask 31744
      %v636 = vsel %vm634, %v624, 0
      %v639 = vsel %vm634, %v625, 0
      %v642 = vsel %vm634, %v626, 0
      %v645 = vsel %vm634, %v627, 0
      %v648 = vsel %vm634, %v628, 0
      %v651 = vsel %vm634, %v629, 0
      %v654 = vsel %vm634, %v630, 0
      %v657 = vsel %vm634, %v631, 0
      %v660 = vsel %vm634, %v632, 0
      %v663 = vsel %vm634, %v633, 0
      %vm665 = vcmask 1041408
      %v667 = vsel %vm665, %v576, 0
      %669 = vmatprep.subr.bf16.mxu0 0
      %670 = vmatpush1.bf16.msra.mxu0 %v667
      %671 = vmatprep.subr.bf16.mxu0 0
      %672 = vmatpush1.bf16.msra.mxu0 0
      %673 = vmatprep.subr.bf16.mxu0 0
      %674 = vmatpush1.bf16.msra.mxu0 0
      %675 = vmatprep.subr.bf16.mxu0 0
      %676 = vmatpush1.bf16.msra.mxu0 0
      %677 = vmatprep.subr.bf16.mxu0 0
      %678 = vmatpush1.bf16.msra.mxu0 0
      %679 = vmatprep.subr.bf16.mxu0 0
      %680 = vmatpush1.bf16.msra.mxu0 0
      %681 = vmatprep.subr.bf16.mxu0 0
      %682 = vmatpush1.bf16.msra.mxu0 0
      %683 = vmatprep.subr.bf16.mxu0 0
      %684 = vmatpush1.bf16.msra.mxu0 0
      %685 = vmatprep.subr.bf16.mxu0 0
      %686 = vmatpush1.bf16.msra.mxu0 0
      %687 = vmatprep.subr.bf16.mxu0 0
      %688 = vmatpush1.bf16.msra.mxu0 0
      %689 = vmatprep.subr.bf16.mxu0 0
      %690 = vmatpush1.bf16.msra.mxu0 0
      %691 = vmatprep.subr.bf16.mxu0 0
      %692 = vmatpush1.bf16.msra.mxu0 0
      %693 = vmatprep.subr.bf16.mxu0 0
      %694 = vmatpush1.bf16.msra.mxu0 0
      %695 = vmatprep.subr.bf16.mxu0 0
      %696 = vmatpush1.bf16.msra.mxu0 0
      %697 = vmatprep.subr.bf16.mxu0 0
      %698 = vmatpush1.bf16.msra.mxu0 0
      %699 = vmatprep.subr.bf16.mxu0 0
      %700 = vmatpush1.bf16.msra.mxu0 0
      %701 = vmatprep.mubr.bf16.mxu0 0
      %702 = vmatmul.mubr.bf16.gmra.mrb[0].mxu0 %v636
      %v703 = vpop.f32.mrb[0].mxu0
      %v704 = vadd.f32 %v582, %v703
      %v705 = vpop.f32.mrb[0].mxu0
      %v706 = vpop.f32.mrb[0].mxu0
      %v707 = vadd.f32 %v582, %v706
      %v708 = vpop.f32.mrb[0].mxu0
      %709 = vmatprep.mubr.bf16.mxu0 0
      %710 = vmatmul.mubr.bf16.gmra.mrb[0].mxu0 %v639
      %v711 = vpop.f32.mrb[0].mxu0
      %v712 = vadd.f32 %v582, %v711
      %v713 = vpop.f32.mrb[0].mxu0
      %v714 = vpop.f32.mrb[0].mxu0
      %v715 = vadd.f32 %v582, %v714
      %v716 = vpop.f32.mrb[0].mxu0
      %717 = vmatprep.mubr.bf16.mxu0 0
      %718 = vmatmul.mubr.bf16.gmra.mrb[0].mxu0 %v642
      %v719 = vpop.f32.mrb[0].mxu0
      %v720 = vadd.f32 %v582, %v719
      %v721 = vpop.f32.mrb[0].mxu0
      %v722 = vpop.f32.mrb[0].mxu0
      %v723 = vadd.f32 %v582, %v722
      %v724 = vpop.f32.mrb[0].mxu0
      %725 = vmatprep.mubr.bf16.mxu0 0
      %726 = vmatmul.mubr.bf16.gmra.mrb[0].mxu0 %v645
      %v727 = vpop.f32.mrb[0].mxu0
      %v728 = vadd.f32 %v582, %v727
      %v729 = vpop.f32.mrb[0].mxu0
      %v730 = vpop.f32.mrb[0].mxu0
      %v731 = vadd.f32 %v582, %v730
      %v732 = vpop.f32.mrb[0].mxu0
      %733 = vmatprep.mubr.bf16.mxu0 0
      %734 = vmatmul.mubr.bf16.gmra.mrb[0].mxu0 %v648
      %v735 = vpop.f32.mrb[0].mxu0
      %v736 = vadd.f32 %v582, %v735
      %v737 = vpop.f32.mrb[0].mxu0
      %v738 = vpop.f32.mrb[0].mxu0
      %v739 = vadd.f32 %v582, %v738
      %v740 = vpop.f32.mrb[0].mxu0
      %741 = vmatprep.mubr.bf16.mxu0 0
      %742 = vmatmul.mubr.bf16.gmra.mrb[0].mxu0 %v651
      %v743 = vpop.f32.mrb[0].mxu0
      %v744 = vadd.f32 %v582, %v743
      %v745 = vpop.f32.mrb[0].mxu0
      %v746 = vpop.f32.mrb[0].mxu0
      %v747 = vadd.f32 %v582, %v746
      %v748 = vpop.f32.mrb[0].mxu0
      %749 = vmatprep.mubr.bf16.mxu0 0
      %750 = vmatmul.mubr.bf16.gmra.mrb[0].mxu0 %v654
      %v751 = vpop.f32.mrb[0].mxu0
      %v752 = vadd.f32 %v582, %v751
      %v753 = vpop.f32.mrb[0].mxu0
      %v754 = vpop.f32.mrb[0].mxu0
      %v755 = vadd.f32 %v582, %v754
      %v756 = vpop.f32.mrb[0].mxu0
      %757 = vmatprep.mubr.bf16.mxu0 0
      %758 = vmatmul.mubr.bf16.gmra.mrb[0].mxu0 %v657
      %v759 = vpop.f32.mrb[0].mxu0
      %v760 = vadd.f32 %v582, %v759
      %v761 = vpop.f32.mrb[0].mxu0
      %v762 = vpop.f32.mrb[0].mxu0
      %v763 = vadd.f32 %v582, %v762
      %v764 = vpop.f32.mrb[0].mxu0
      %765 = vmatprep.mubr.bf16.mxu0 0
      %766 = vmatmul.mubr.bf16.gmra.mrb[0].mxu0 %v660
      %v767 = vpop.f32.mrb[0].mxu0
      %v768 = vadd.f32 %v582, %v767
      %v769 = vpop.f32.mrb[0].mxu0
      %v770 = vpop.f32.mrb[0].mxu0
      %v771 = vadd.f32 %v582, %v770
      %v772 = vpop.f32.mrb[0].mxu0
      %773 = vmatprep.mubr.bf16.mxu0 0
      %774 = vmatmul.mubr.bf16.gmra.mrb[0].mxu0 %v663
      %v775 = vpop.f32.mrb[0].mxu0
      %v776 = vadd.f32 %v582, %v775
      %v777 = vpop.f32.mrb[0].mxu0
      %v778 = vpop.f32.mrb[0].mxu0
      %v779 = vadd.f32 %v582, %v778
      %v780 = vpop.f32.mrb[0].mxu0
      %781 = vdwg.mxu0
      %vm782 = vcmask 24576
      %vm783 = vsmask.f32 256
      %vm784 = vmand %vm782, %vm783
      %v785 = vld [vmem:[#allocation2] sm:$0x1]
      %v786 = vsel %vm784, 0, %v785
      %787 = vst [vmem:[#allocation2] sm:$0x1] %v786
      %v788 = vld [vmem:[#allocation2 + $0xc] sm:$0x1]
      %v789 = vsel %vm784, 0, %v788
      %790 = vst [vmem:[#allocation2 + $0xc] sm:$0x1] %v789
      %v791 = vld [vmem:[#allocation2 + $0x18] sm:$0x1]
      %v792 = vsel %vm784, 0, %v791
      %793 = vst [vmem:[#allocation2 + $0x18] sm:$0x1] %v792
      %v794 = vld [vmem:[#allocation2 + $0x24] sm:$0x1]
      %v795 = vsel %vm784, 0, %v794
      %796 = vst [vmem:[#allocation2 + $0x24] sm:$0x1] %v795
      %v797 = vld [vmem:[#allocation2 + $0x30] sm:$0x1]
      %v798 = vsel %vm784, 0, %v797
      %799 = vst [vmem:[#allocation2 + $0x30] sm:$0x1] %v798
      %v800 = vld [vmem:[#allocation2 + $0x3c] sm:$0x1]
      %v801 = vsel %vm784, 0, %v800
      %802 = vst [vmem:[#allocation2 + $0x3c] sm:$0x1] %v801
      %v803 = vld [vmem:[#allocation2 + $0x48] sm:$0x1]
      %v804 = vsel %vm784, 0, %v803
      %805 = vst [vmem:[#allocation2 + $0x48] sm:$0x1] %v804
      %v806 = vld [vmem:[#allocation2 + $0x54] sm:$0x1]
      %v807 = vsel %vm784, 0, %v806
      %808 = vst [vmem:[#allocation2 + $0x54] sm:$0x1] %v807
      %v809 = vld [vmem:[#allocation2 + $0x60] sm:$0x1]
      %v810 = vsel %vm784, 0, %v809
      %811 = vst [vmem:[#allocation2 + $0x60] sm:$0x1] %v810
      %v812 = vld [vmem:[#allocation2 + $0x6c] sm:$0x1]
      %v813 = vsel %vm784, 0, %v812
      %814 = vst [vmem:[#allocation2 + $0x6c] sm:$0x1] %v813
      %vm815 = vsmask.f32 7938
      %vm816 = vmand %vm782, %vm815
      %v817 = vld [vmem:[#allocation2 + $0x8] sm:$0x1]
      %v818 = vsel %vm816, 0, %v817
      %819 = vst [vmem:[#allocation2 + $0x8] sm:$0x1] %v818
      %v820 = vld [vmem:[#allocation2 + $0x14] sm:$0x1]
      %v821 = vsel %vm816, 0, %v820
      %822 = vst [vmem:[#allocation2 + $0x14] sm:$0x1] %v821
      %v823 = vld [vmem:[#allocation2 + $0x20] sm:$0x1]
      %v824 = vsel %vm816, 0, %v823
      %825 = vst [vmem:[#allocation2 + $0x20] sm:$0x1] %v824
      %v826 = vld [vmem:[#allocation2 + $0x2c] sm:$0x1]
      %v827 = vsel %vm816, 0, %v826
      %828 = vst [vmem:[#allocation2 + $0x2c] sm:$0x1] %v827
      %v829 = vld [vmem:[#allocation2 + $0x38] sm:$0x1]
      %v830 = vsel %vm816, 0, %v829
      %831 = vst [vmem:[#allocation2 + $0x38] sm:$0x1] %v830
      %v832 = vld [vmem:[#allocation2 + $0x44] sm:$0x1]
      %v833 = vsel %vm816, 0, %v832
      %834 = vst [vmem:[#allocation2 + $0x44] sm:$0x1] %v833
      %v835 = vld [vmem:[#allocation2 + $0x50] sm:$0x1]
      %v836 = vsel %vm816, 0, %v835
      %837 = vst [vmem:[#allocation2 + $0x50] sm:$0x1] %v836
      %v838 = vld [vmem:[#allocation2 + $0x5c] sm:$0x1]
      %v839 = vsel %vm816, 0, %v838
      %840 = vst [vmem:[#allocation2 + $0x5c] sm:$0x1] %v839
      %v841 = vld [vmem:[#allocation2 + $0x68] sm:$0x1]
      %v842 = vsel %vm816, 0, %v841
      %843 = vst [vmem:[#allocation2 + $0x68] sm:$0x1] %v842
      %v844 = vld [vmem:[#allocation2 + $0x74] sm:$0x1]
      %v845 = vsel %vm816, 0, %v844
      %846 = vst [vmem:[#allocation2 + $0x74] sm:$0x1] %v845
      %v847 = vpack.c.bf16 %v707, %v704
      %v848 = vpack.c.bf16 %v715, %v712
      %v849 = vpack.c.bf16 %v723, %v720
      %v850 = vpack.c.bf16 %v731, %v728
      %v851 = vpack.c.bf16 %v739, %v736
      %v852 = vpack.c.bf16 %v747, %v744
      %v853 = vpack.c.bf16 %v755, %v752
      %v854 = vpack.c.bf16 %v763, %v760
      %v855 = vpack.c.bf16 %v771, %v768
      %v856 = vpack.c.bf16 %v779, %v776
      %v867 = vunpack.c.l.b16 %v847
      %v868 = vunpack.c.h.b16 %v847
      %v869 = vunpack.c.l.b16 %v848
      %v870 = vunpack.c.h.b16 %v848
      %v871 = vunpack.c.l.b16 %v849
      %v872 = vunpack.c.h.b16 %v849
      %v873 = vunpack.c.l.b16 %v850
      %v874 = vunpack.c.h.b16 %v850
      %v875 = vunpack.c.l.b16 %v851
      %v876 = vunpack.c.h.b16 %v851
      %v877 = vunpack.c.l.b16 %v852
      %v878 = vunpack.c.h.b16 %v852
      %v879 = vunpack.c.l.b16 %v853
      %v880 = vunpack.c.h.b16 %v853
      %v881 = vunpack.c.l.b16 %v854
      %v882 = vunpack.c.h.b16 %v854
      %v883 = vunpack.c.l.b16 %v855
      %v884 = vunpack.c.h.b16 %v855
      %v885 = vunpack.c.l.b16 %v856
      %v886 = vunpack.c.h.b16 %v856
      %v887 = vpack.c.b16 %v867, %v867
      %v888 = vpack.c.b16 %v868, %v868
      %v889 = vpack.c.b16 %v869, %v869
      %v890 = vpack.c.b16 %v870, %v870
      %v891 = vpack.c.b16 %v871, %v871
      %v892 = vpack.c.b16 %v872, %v872
      %v893 = vpack.c.b16 %v873, %v873
      %v894 = vpack.c.b16 %v874, %v874
      %v895 = vpack.c.b16 %v875, %v875
      %v896 = vpack.c.b16 %v876, %v876
      %v897 = vpack.c.b16 %v877, %v877
      %v898 = vpack.c.b16 %v878, %v878
      %v899 = vpack.c.b16 %v879, %v879
      %v900 = vpack.c.b16 %v880, %v880
      %v901 = vpack.c.b16 %v881, %v881
      %v902 = vpack.c.b16 %v882, %v882
      %v903 = vpack.c.b16 %v883, %v883
      %v904 = vpack.c.b16 %v884, %v884
      %v905 = vpack.c.b16 %v885, %v885
      %v906 = vpack.c.b16 %v886, %v886
      %vm907 = vsmask.f32 4368
      %vm908 = vmor %vm783, %vm907
      %v910 = vshrl.u32 %v887, 16
      %v912 = vrot.slane %v910, 7
      %v913 = vshll.u32 %v887, 16
      %v915 = vor.u32 %v912, %v913
      %v916 = vrot.slane %v912, 4
      %v918 = vshrl.u32 %v888, 16
      %v920 = vrot.slane %v918, 7
      %v921 = vshll.u32 %v888, 16
      %v923 = vor.u32 %v920, %v921
      %v924 = vsel %vm908, %v916, %v923
      %v925 = vrot.slane %v920, 4
      %v927 = vshrl.u32 %v889, 16
      %v929 = vrot.slane %v927, 7
      %v930 = vshll.u32 %v889, 16
      %v932 = vor.u32 %v929, %v930
      %v933 = vrot.slane %v929, 4
      %v935 = vshrl.u32 %v890, 16
      %v937 = vrot.slane %v935, 7
      %v938 = vshll.u32 %v890, 16
      %v940 = vor.u32 %v937, %v938
      %v941 = vsel %vm908, %v933, %v940
      %v942 = vrot.slane %v937, 4
      %v944 = vshrl.u32 %v891, 16
      %v946 = vrot.slane %v944, 7
      %v947 = vshll.u32 %v891, 16
      %v949 = vor.u32 %v946, %v947
      %v950 = vrot.slane %v946, 4
      %v952 = vshrl.u32 %v892, 16
      %v954 = vrot.slane %v952, 7
      %v955 = vshll.u32 %v892, 16
      %v957 = vor.u32 %v954, %v955
      %v958 = vsel %vm908, %v950, %v957
      %v959 = vrot.slane %v954, 4
      %v961 = vshrl.u32 %v893, 16
      %v963 = vrot.slane %v961, 7
      %v964 = vshll.u32 %v893, 16
      %v966 = vor.u32 %v963, %v964
      %v967 = vrot.slane %v963, 4
      %v969 = vshrl.u32 %v894, 16
      %v971 = vrot.slane %v969, 7
      %v972 = vshll.u32 %v894, 16
      %v974 = vor.u32 %v971, %v972
      %v975 = vsel %vm908, %v967, %v974
      %v976 = vrot.slane %v971, 4
      %v978 = vshrl.u32 %v895, 16
      %v980 = vrot.slane %v978, 7
      %v981 = vshll.u32 %v895, 16
      %v983 = vor.u32 %v980, %v981
      %v984 = vrot.slane %v980, 4
      %v986 = vshrl.u32 %v896, 16
      %v988 = vrot.slane %v986, 7
      %v989 = vshll.u32 %v896, 16
      %v991 = vor.u32 %v988, %v989
      %v992 = vsel %vm908, %v984, %v991
      %v993 = vrot.slane %v988, 4
      %v995 = vshrl.u32 %v897, 16
      %v997 = vrot.slane %v995, 7
      %v998 = vshll.u32 %v897, 16
      %v1000 = vor.u32 %v997, %v998
      %v1001 = vrot.slane %v997, 4
      %v1003 = vshrl.u32 %v898, 16
      %v1005 = vrot.slane %v1003, 7
      %v1006 = vshll.u32 %v898, 16
      %v1008 = vor.u32 %v1005, %v1006
      %v1009 = vsel %vm908, %v1001, %v1008
      %v1010 = vrot.slane %v1005, 4
      %v1012 = vshrl.u32 %v899, 16
      %v1014 = vrot.slane %v1012, 7
      %v1015 = vshll.u32 %v899, 16
      %v1017 = vor.u32 %v1014, %v1015
      %v1018 = vrot.slane %v1014, 4
      %v1020 = vshrl.u32 %v900, 16
      %v1022 = vrot.slane %v1020, 7
      %v1023 = vshll.u32 %v900, 16
      %v1025 = vor.u32 %v1022, %v1023
      %v1026 = vsel %vm908, %v1018, %v1025
      %v1027 = vrot.slane %v1022, 4
      %v1029 = vshrl.u32 %v901, 16
      %v1031 = vrot.slane %v1029, 7
      %v1032 = vshll.u32 %v901, 16
      %v1034 = vor.u32 %v1031, %v1032
      %v1035 = vrot.slane %v1031, 4
      %v1037 = vshrl.u32 %v902, 16
      %v1039 = vrot.slane %v1037, 7
      %v1040 = vshll.u32 %v902, 16
      %v1042 = vor.u32 %v1039, %v1040
      %v1043 = vsel %vm908, %v1035, %v1042
      %v1044 = vrot.slane %v1039, 4
      %v1046 = vshrl.u32 %v903, 16
      %v1048 = vrot.slane %v1046, 7
      %v1049 = vshll.u32 %v903, 16
      %v1051 = vor.u32 %v1048, %v1049
      %v1052 = vrot.slane %v1048, 4
      %v1054 = vshrl.u32 %v904, 16
      %v1056 = vrot.slane %v1054, 7
      %v1057 = vshll.u32 %v904, 16
      %v1059 = vor.u32 %v1056, %v1057
      %v1060 = vsel %vm908, %v1052, %v1059
      %v1061 = vrot.slane %v1056, 4
      %v1063 = vshrl.u32 %v905, 16
      %v1065 = vrot.slane %v1063, 7
      %v1066 = vshll.u32 %v905, 16
      %v1068 = vor.u32 %v1065, %v1066
      %v1069 = vrot.slane %v1065, 4
      %v1071 = vshrl.u32 %v906, 16
      %v1073 = vrot.slane %v1071, 7
      %v1074 = vshll.u32 %v906, 16
      %v1076 = vor.u32 %v1073, %v1074
      %v1077 = vsel %vm908, %v1069, %v1076
      %v1078 = vrot.slane %v1073, 4
      %vm1109 = vcmask 27648
      %vm1110 = vmand %vm1109, %vm815
      %v1111 = vld [vmem:[#allocation2] sm:$0xf]
      %v1112 = vsel %vm1110, %v915, %v1111
      %1113 = vst [vmem:[#allocation2] sm:$0xf] %v1112
      %vm1114 = vcmask 27648
      %1115 = vst.msk [vmem:[#allocation2 + $0x4] sm:$0xf] %vm1114, %v924
      %v1116 = vld [vmem:[#allocation2 + $0x8] sm:$0x1]
      %v1117 = vsel %vm784, %v925, %v1116
      %1118 = vst [vmem:[#allocation2 + $0x8] sm:$0x1] %v1117
      %v1119 = vld [vmem:[#allocation2 + $0xc] sm:$0xf]
      %v1120 = vsel %vm1110, %v932, %v1119
      %1121 = vst [vmem:[#allocation2 + $0xc] sm:$0xf] %v1120
      %1122 = vst.msk [vmem:[#allocation2 + $0x10] sm:$0xf] %vm1114, %v941
      %v1123 = vld [vmem:[#allocation2 + $0x14] sm:$0x1]
      %v1124 = vsel %vm784, %v942, %v1123
      %1125 = vst [vmem:[#allocation2 + $0x14] sm:$0x1] %v1124
      %v1126 = vld [vmem:[#allocation2 + $0x18] sm:$0xf]
      %v1127 = vsel %vm1110, %v949, %v1126
      %1128 = vst [vmem:[#allocation2 + $0x18] sm:$0xf] %v1127
      %1129 = vst.msk [vmem:[#allocation2 + $0x1c] sm:$0xf] %vm1114, %v958
      %v1130 = vld [vmem:[#allocation2 + $0x20] sm:$0x1]
      %v1131 = vsel %vm784, %v959, %v1130
      %1132 = vst [vmem:[#allocation2 + $0x20] sm:$0x1] %v1131
      %v1133 = vld [vmem:[#allocation2 + $0x24] sm:$0xf]
      %v1134 = vsel %vm1110, %v966, %v1133
      %1135 = vst [vmem:[#allocation2 + $0x24] sm:$0xf] %v1134
      %1136 = vst.msk [vmem:[#allocation2 + $0x28] sm:$0xf] %vm1114, %v975
      %v1137 = vld [vmem:[#allocation2 + $0x2c] sm:$0x1]
      %v1138 = vsel %vm784, %v976, %v1137
      %1139 = vst [vmem:[#allocation2 + $0x2c] sm:$0x1] %v1138
      %v1140 = vld [vmem:[#allocation2 + $0x30] sm:$0xf]
      %v1141 = vsel %vm1110, %v983, %v1140
      %1142 = vst [vmem:[#allocation2 + $0x30] sm:$0xf] %v1141
      %1143 = vst.msk [vmem:[#allocation2 + $0x34] sm:$0xf] %vm1114, %v992
      %v1144 = vld [vmem:[#allocation2 + $0x38] sm:$0x1]
      %v1145 = vsel %vm784, %v993, %v1144
      %1146 = vst [vmem:[#allocation2 + $0x38] sm:$0x1] %v1145
      %v1147 = vld [vmem:[#allocation2 + $0x3c] sm:$0xf]
      %v1148 = vsel %vm1110, %v1000, %v1147
      %1149 = vst [vmem:[#allocation2 + $0x3c] sm:$0xf] %v1148
      %1150 = vst.msk [vmem:[#allocation2 + $0x40] sm:$0xf] %vm1114, %v1009
      %v1151 = vld [vmem:[#allocation2 + $0x44] sm:$0x1]
      %v1152 = vsel %vm784, %v1010, %v1151
      %1153 = vst [vmem:[#allocation2 + $0x44] sm:$0x1] %v1152
      %v1154 = vld [vmem:[#allocation2 + $0x48] sm:$0xf]
      %v1155 = vsel %vm1110, %v1017, %v1154
      %1156 = vst [vmem:[#allocation2 + $0x48] sm:$0xf] %v1155
      %1157 = vst.msk [vmem:[#allocation2 + $0x4c] sm:$0xf] %vm1114, %v1026
      %v1158 = vld [vmem:[#allocation2 + $0x50] sm:$0x1]
      %v1159 = vsel %vm784, %v1027, %v1158
      %1160 = vst [vmem:[#allocation2 + $0x50] sm:$0x1] %v1159
      %v1161 = vld [vmem:[#allocation2 + $0x54] sm:$0xf]
      %v1162 = vsel %vm1110, %v1034, %v1161
      %1163 = vst [vmem:[#allocation2 + $0x54] sm:$0xf] %v1162
      %1164 = vst.msk [vmem:[#allocation2 + $0x58] sm:$0xf] %vm1114, %v1043
      %v1165 = vld [vmem:[#allocation2 + $0x5c] sm:$0x1]
      %v1166 = vsel %vm784, %v1044, %v1165
      %1167 = vst [vmem:[#allocation2 + $0x5c] sm:$0x1] %v1166
      %v1168 = vld [vmem:[#allocation2 + $0x60] sm:$0xf]
      %v1169 = vsel %vm1110, %v1051, %v1168
      %1170 = vst [vmem:[#allocation2 + $0x60] sm:$0xf] %v1169
      %1171 = vst.msk [vmem:[#allocation2 + $0x64] sm:$0xf] %vm1114, %v1060
      %v1172 = vld [vmem:[#allocation2 + $0x68] sm:$0x1]
      %v1173 = vsel %vm784, %v1061, %v1172
      %1174 = vst [vmem:[#allocation2 + $0x68] sm:$0x1] %v1173
      %v1175 = vld [vmem:[#allocation2 + $0x6c] sm:$0xf]
      %v1176 = vsel %vm1110, %v1068, %v1175
      %1177 = vst [vmem:[#allocation2 + $0x6c] sm:$0xf] %v1176
      %1178 = vst.msk [vmem:[#allocation2 + $0x70] sm:$0xf] %vm1114, %v1077
      %v1179 = vld [vmem:[#allocation2 + $0x74] sm:$0x1]
      %v1180 = vsel %vm784, %v1078, %v1179
      %1181 = vst [vmem:[#allocation2 + $0x74] sm:$0x1] %v1180
      %p1182 = scmp.eq.s32.totalorder %s27, 0
      // Predicated region
      $region65: #{tpu_custom_call.1} parent=63 // pred_check
        %p1183 = pneg %p1182
      $region66: #{tpu_custom_call.1} parent=63 // pred_check_branch
        %1185 = sbr.rel (%p1183) target = $region68
      $region67: #{tpu_custom_call.1} parent=63 // pred_region
        %1186 = vst.msk [vmem:[#allocation2] sm:$0xf] %vm1114, 0
        %1187 = vst.msk [vmem:[#allocation2 + $0x4] sm:$0xf] %vm1114, 0
        %vm1188 = vcmask 24576
        %1189 = vst.msk [vmem:[#allocation2 + $0x8] sm:$0x1] %vm1188, 0
      $region68: #{tpu_custom_call.1} parent=63 // pred_fallthru
        _
      %p1190 = scmp.eq.s32.totalorder %s27, 1
      // Predicated region
      $region69: #{tpu_custom_call.1} parent=63 // pred_check
        %p1191 = pneg %p1190
      $region70: #{tpu_custom_call.1} parent=63 // pred_check_branch
        %1193 = sbr.rel (%p1191) target = $region72
      $region71: #{tpu_custom_call.1} parent=63 // pred_region
        %s1194 = scalar_lea.vmem [#allocation2], 108
        %1195 = vst.msk [vmem:[%s1194] sm:$0xf] %vm1114, 0
        %1196 = vst.msk [vmem:[%s1194 + $0x4] sm:$0xf] %vm1114, 0
        %vm1197 = vcmask 24576
        %1198 = vst.msk [vmem:[%s1194 + $0x8] sm:$0x1] %vm1197, 0
      $region72: #{tpu_custom_call.1} parent=63 // pred_fallthru
        _
      %v1199 = vld [vmem:[#allocation2] sm:$0xf]
      %v1200 = vld [vmem:[#allocation2 + $0x4] sm:$0xf]
      %v1201 = vld [vmem:[#allocation2 + $0xc] sm:$0xf]
      %v1202 = vld [vmem:[#allocation2 + $0x10] sm:$0xf]
      %v1203 = vld [vmem:[#allocation2 + $0x18] sm:$0xf]
      %v1204 = vld [vmem:[#allocation2 + $0x1c] sm:$0xf]
      %v1205 = vld [vmem:[#allocation2 + $0x24] sm:$0xf]
      %v1206 = vld [vmem:[#allocation2 + $0x28] sm:$0xf]
      %v1207 = vld [vmem:[#allocation2 + $0x30] sm:$0xf]
      %v1208 = vld [vmem:[#allocation2 + $0x34] sm:$0xf]
      %v1209 = vld [vmem:[#allocation2 + $0x3c] sm:$0xf]
      %v1210 = vld [vmem:[#allocation2 + $0x40] sm:$0xf]
      %v1211 = vld [vmem:[#allocation2 + $0x48] sm:$0xf]
      %v1212 = vld [vmem:[#allocation2 + $0x4c] sm:$0xf]
      %v1213 = vld [vmem:[#allocation2 + $0x54] sm:$0xf]
      %v1214 = vld [vmem:[#allocation2 + $0x58] sm:$0xf]
      %v1215 = vld [vmem:[#allocation2 + $0x60] sm:$0xf]
      %v1216 = vld [vmem:[#allocation2 + $0x64] sm:$0xf]
      %v1217 = vld [vmem:[#allocation2 + $0x6c] sm:$0xf]
      %v1218 = vld [vmem:[#allocation2 + $0x70] sm:$0xf]
      %v1219 = vld [vmem:[%s5] sm:$0x3]
      %s1220 = scalar_lea.vmem %s5, 6
      %v1221 = vld [vmem:[%s1220] sm:$0x3]
      %v1238 = vunpack.c.l.b16 %v1201
      %v1239 = vunpack.c.l.b16 %v1202
      %v1240 = vunpack.c.l.b16 %v1203
      %v1241 = vunpack.c.l.b16 %v1204
      %v1242 = vunpack.c.l.b16 %v1205
      %v1243 = vunpack.c.l.b16 %v1206
      %v1244 = vunpack.c.l.b16 %v1207
      %v1245 = vunpack.c.l.b16 %v1208
      %v1246 = vunpack.c.l.b16 %v1209
      %v1247 = vunpack.c.l.b16 %v1210
      %v1248 = vunpack.c.l.b16 %v1211
      %v1249 = vunpack.c.l.b16 %v1212
      %v1250 = vunpack.c.l.b16 %v1213
      %v1251 = vunpack.c.l.b16 %v1214
      %v1252 = vunpack.c.l.b16 %v1215
      %v1253 = vunpack.c.l.b16 %v1216
      %v1254 = vpack.c.b16 %v1239, %v1238
      %v1255 = vpack.c.b16 %v1241, %v1240
      %v1256 = vpack.c.b16 %v1243, %v1242
      %v1257 = vpack.c.b16 %v1245, %v1244
      %v1258 = vpack.c.b16 %v1247, %v1246
      %v1259 = vpack.c.b16 %v1249, %v1248
      %v1260 = vpack.c.b16 %v1251, %v1250
      %v1261 = vpack.c.b16 %v1253, %v1252
      %v1263 = vsel %vm634, %v1254, 0
      %v1266 = vsel %vm634, %v1255, 0
      %v1269 = vsel %vm634, %v1256, 0
      %v1272 = vsel %vm634, %v1257, 0
      %v1275 = vsel %vm634, %v1258, 0
      %v1278 = vsel %vm634, %v1259, 0
      %v1281 = vsel %vm634, %v1260, 0
      %v1284 = vsel %vm634, %v1261, 0
      %v1287 = vsel %vm665, %v1221, 0
      %1289 = vmatprep.subr.bf16.mxu0 0
      %1290 = vmatpush1.bf16.msra.mxu0 %v1287
      %1291 = vmatprep.subr.bf16.mxu0 0
      %1292 = vmatpush1.bf16.msra.mxu0 0
      %1293 = vmatprep.subr.bf16.mxu0 0
      %1294 = vmatpush1.bf16.msra.mxu0 0
      %1295 = vmatprep.subr.bf16.mxu0 0
      %1296 = vmatpush1.bf16.msra.mxu0 0
      %1297 = vmatprep.subr.bf16.mxu0 0
      %1298 = vmatpush1.bf16.msra.mxu0 0
      %1299 = vmatprep.subr.bf16.mxu0 0
      %1300 = vmatpush1.bf16.msra.mxu0 0
      %1301 = vmatprep.subr.bf16.mxu0 0
      %1302 = vmatpush1.bf16.msra.mxu0 0
      %1303 = vmatprep.subr.bf16.mxu0 0
      %1304 = vmatpush1.bf16.msra.mxu0 0
      %1305 = vmatprep.subr.bf16.mxu0 0
      %1306 = vmatpush1.bf16.msra.mxu0 0
      %1307 = vmatprep.subr.bf16.mxu0 0
      %1308 = vmatpush1.bf16.msra.mxu0 0
      %1309 = vmatprep.subr.bf16.mxu0 0
      %1310 = vmatpush1.bf16.msra.mxu0 0
      %1311 = vmatprep.subr.bf16.mxu0 0
      %1312 = vmatpush1.bf16.msra.mxu0 0
      %1313 = vmatprep.subr.bf16.mxu0 0
      %1314 = vmatpush1.bf16.msra.mxu0 0
      %1315 = vmatprep.subr.bf16.mxu0 0
      %1316 = vmatpush1.bf16.msra.mxu0 0
      %1317 = vmatprep.subr.bf16.mxu0 0
      %1318 = vmatpush1.bf16.msra.mxu0 0
      %1319 = vmatprep.subr.bf16.mxu0 0
      %1320 = vmatpush1.bf16.msra.mxu0 0
      %1321 = vmatprep.mubr.bf16.mxu0 0
      %1322 = vmatmul.mubr.bf16.gmra.mrb[0].mxu0 %v1263
      %v1323 = vpop.f32.mrb[0].mxu0
      %v1324 = vadd.f32 0.0, %v1323
      %v1325 = vpop.f32.mrb[0].mxu0
      %v1326 = vpop.f32.mrb[0].mxu0
      %v1327 = vadd.f32 0.0, %v1326
      %v1328 = vpop.f32.mrb[0].mxu0
      %1329 = vmatprep.mubr.bf16.mxu0 0
      %1330 = vmatmul.mubr.bf16.gmra.mrb[0].mxu0 %v1266
      %v1331 = vpop.f32.mrb[0].mxu0
      %v1332 = vadd.f32 0.0, %v1331
      %v1333 = vpop.f32.mrb[0].mxu0
      %v1334 = vpop.f32.mrb[0].mxu0
      %v1335 = vadd.f32 0.0, %v1334
      %v1336 = vpop.f32.mrb[0].mxu0
      %1337 = vmatprep.mubr.bf16.mxu0 0
      %1338 = vmatmul.mubr.bf16.gmra.mrb[0].mxu0 %v1269
      %v1339 = vpop.f32.mrb[0].mxu0
      %v1340 = vadd.f32 0.0, %v1339
      %v1341 = vpop.f32.mrb[0].mxu0
      %v1342 = vpop.f32.mrb[0].mxu0
      %v1343 = vadd.f32 0.0, %v1342
      %v1344 = vpop.f32.mrb[0].mxu0
      %1345 = vmatprep.mubr.bf16.mxu0 0
      %1346 = vmatmul.mubr.bf16.gmra.mrb[0].mxu0 %v1272
      %v1347 = vpop.f32.mrb[0].mxu0
      %v1348 = vadd.f32 0.0, %v1347
      %v1349 = vpop.f32.mrb[0].mxu0
      %v1350 = vpop.f32.mrb[0].mxu0
      %v1351 = vadd.f32 0.0, %v1350
      %v1352 = vpop.f32.mrb[0].mxu0
      %1353 = vmatprep.mubr.bf16.mxu0 0
      %1354 = vmatmul.mubr.bf16.gmra.mrb[0].mxu0 %v1275
      %v1355 = vpop.f32.mrb[0].mxu0
      %v1356 = vadd.f32 0.0, %v1355
      %v1357 = vpop.f32.mrb[0].mxu0
      %v1358 = vpop.f32.mrb[0].mxu0
      %v1359 = vadd.f32 0.0, %v1358
      %v1360 = vpop.f32.mrb[0].mxu0
      %1361 = vmatprep.mubr.bf16.mxu0 0
      %1362 = vmatmul.mubr.bf16.gmra.mrb[0].mxu0 %v1278
      %v1363 = vpop.f32.mrb[0].mxu0
      %v1364 = vadd.f32 0.0, %v1363
      %v1365 = vpop.f32.mrb[0].mxu0
      %v1366 = vpop.f32.mrb[0].mxu0
      %v1367 = vadd.f32 0.0, %v1366
      %v1368 = vpop.f32.mrb[0].mxu0
      %1369 = vmatprep.mubr.bf16.mxu0 0
      %1370 = vmatmul.mubr.bf16.gmra.mrb[0].mxu0 %v1281
      %v1371 = vpop.f32.mrb[0].mxu0
      %v1372 = vadd.f32 0.0, %v1371
      %v1373 = vpop.f32.mrb[0].mxu0
      %v1374 = vpop.f32.mrb[0].mxu0
      %v1375 = vadd.f32 0.0, %v1374
      %v1376 = vpop.f32.mrb[0].mxu0
      %1377 = vmatprep.mubr.bf16.mxu0 0
      %1378 = vmatmul.mubr.bf16.gmra.mrb[0].mxu0 %v1284
      %v1379 = vpop.f32.mrb[0].mxu0
      %v1380 = vadd.f32 0.0, %v1379
      %v1381 = vpop.f32.mrb[0].mxu0
      %v1382 = vpop.f32.mrb[0].mxu0
      %v1383 = vadd.f32 0.0, %v1382
      %v1384 = vpop.f32.mrb[0].mxu0
      %1385 = vdwg.mxu0
      %v1388 = vunpack.c.l.b16 %v1199
      %v1389 = vunpack.c.l.b16 %v1200
      %v1390 = vpack.c.b16 %v1389, %v1388
      %v1392 = vsel %vm634, %v1390, 0
      %v1395 = vsel %vm665, %v1219, 0
      %1397 = vmatprep.subr.bf16.mxu0 0
      %1398 = vmatpush1.bf16.msra.mxu0 %v1395
      %1399 = vmatprep.subr.bf16.mxu0 0
      %1400 = vmatpush1.bf16.msra.mxu0 0
      %1401 = vmatprep.subr.bf16.mxu0 0
      %1402 = vmatpush1.bf16.msra.mxu0 0
      %1403 = vmatprep.subr.bf16.mxu0 0
      %1404 = vmatpush1.bf16.msra.mxu0 0
      %1405 = vmatprep.subr.bf16.mxu0 0
      %1406 = vmatpush1.bf16.msra.mxu0 0
      %1407 = vmatprep.subr.bf16.mxu0 0
      %1408 = vmatpush1.bf16.msra.mxu0 0
      %1409 = vmatprep.subr.bf16.mxu0 0
      %1410 = vmatpush1.bf16.msra.mxu0 0
      %1411 = vmatprep.subr.bf16.mxu0 0
      %1412 = vmatpush1.bf16.msra.mxu0 0
      %1413 = vmatprep.subr.bf16.mxu0 0
      %1414 = vmatpush1.bf16.msra.mxu0 0
      %1415 = vmatprep.subr.bf16.mxu0 0
      %1416 = vmatpush1.bf16.msra.mxu0 0
      %1417 = vmatprep.subr.bf16.mxu0 0
      %1418 = vmatpush1.bf16.msra.mxu0 0
      %1419 = vmatprep.subr.bf16.mxu0 0
      %1420 = vmatpush1.bf16.msra.mxu0 0
      %1421 = vmatprep.subr.bf16.mxu0 0
      %1422 = vmatpush1.bf16.msra.mxu0 0
      %1423 = vmatprep.subr.bf16.mxu0 0
      %1424 = vmatpush1.bf16.msra.mxu0 0
      %1425 = vmatprep.subr.bf16.mxu0 0
      %1426 = vmatpush1.bf16.msra.mxu0 0
      %1427 = vmatprep.subr.bf16.mxu0 0
      %1428 = vmatpush1.bf16.msra.mxu0 0
      %1429 = vmatprep.mubr.bf16.mxu0 0
      %1430 = vmatmul.mubr.bf16.gmra.mrb[0].mxu0 %v1392
      %v1431 = vpop.f32.mrb[0].mxu0
      %v1432 = vadd.f32 %v1324, %v1431
      %v1433 = vpop.f32.mrb[0].mxu0
      %v1434 = vpop.f32.mrb[0].mxu0
      %v1435 = vadd.f32 %v1327, %v1434
      %v1436 = vpop.f32.mrb[0].mxu0
      %1437 = vmatprep.mubr.bf16.mxu0 0
      %1438 = vmatmul.mubr.bf16.gmra.mrb[0].mxu0 %v1263
      %v1439 = vpop.f32.mrb[0].mxu0
      %v1440 = vadd.f32 %v1332, %v1439
      %v1441 = vpop.f32.mrb[0].mxu0
      %v1442 = vpop.f32.mrb[0].mxu0
      %v1443 = vadd.f32 %v1335, %v1442
      %v1444 = vpop.f32.mrb[0].mxu0
      %1445 = vmatprep.mubr.bf16.mxu0 0
      %1446 = vmatmul.mubr.bf16.gmra.mrb[0].mxu0 %v1266
      %v1447 = vpop.f32.mrb[0].mxu0
      %v1448 = vadd.f32 %v1340, %v1447
      %v1449 = vpop.f32.mrb[0].mxu0
      %v1450 = vpop.f32.mrb[0].mxu0
      %v1451 = vadd.f32 %v1343, %v1450
      %v1452 = vpop.f32.mrb[0].mxu0
      %1453 = vmatprep.mubr.bf16.mxu0 0
      %1454 = vmatmul.mubr.bf16.gmra.mrb[0].mxu0 %v1269
      %v1455 = vpop.f32.mrb[0].mxu0
      %v1456 = vadd.f32 %v1348, %v1455
      %v1457 = vpop.f32.mrb[0].mxu0
      %v1458 = vpop.f32.mrb[0].mxu0
      %v1459 = vadd.f32 %v1351, %v1458
      %v1460 = vpop.f32.mrb[0].mxu0
      %1461 = vmatprep.mubr.bf16.mxu0 0
      %1462 = vmatmul.mubr.bf16.gmra.mrb[0].mxu0 %v1272
      %v1463 = vpop.f32.mrb[0].mxu0
      %v1464 = vadd.f32 %v1356, %v1463
      %v1465 = vpop.f32.mrb[0].mxu0
      %v1466 = vpop.f32.mrb[0].mxu0
      %v1467 = vadd.f32 %v1359, %v1466
      %v1468 = vpop.f32.mrb[0].mxu0
      %1469 = vmatprep.mubr.bf16.mxu0 0
      %1470 = vmatmul.mubr.bf16.gmra.mrb[0].mxu0 %v1275
      %v1471 = vpop.f32.mrb[0].mxu0
      %v1472 = vadd.f32 %v1364, %v1471
      %v1473 = vpop.f32.mrb[0].mxu0
      %v1474 = vpop.f32.mrb[0].mxu0
      %v1475 = vadd.f32 %v1367, %v1474
      %v1476 = vpop.f32.mrb[0].mxu0
      %1477 = vmatprep.mubr.bf16.mxu0 0
      %1478 = vmatmul.mubr.bf16.gmra.mrb[0].mxu0 %v1278
      %v1479 = vpop.f32.mrb[0].mxu0
      %v1480 = vadd.f32 %v1372, %v1479
      %v1481 = vpop.f32.mrb[0].mxu0
      %v1482 = vpop.f32.mrb[0].mxu0
      %v1483 = vadd.f32 %v1375, %v1482
      %v1484 = vpop.f32.mrb[0].mxu0
      %1485 = vmatprep.mubr.bf16.mxu0 0
      %1486 = vmatmul.mubr.bf16.gmra.mrb[0].mxu0 %v1281
      %v1487 = vpop.f32.mrb[0].mxu0
      %v1488 = vadd.f32 %v1380, %v1487
      %v1489 = vpop.f32.mrb[0].mxu0
      %v1490 = vpop.f32.mrb[0].mxu0
      %v1491 = vadd.f32 %v1383, %v1490
      %v1492 = vpop.f32.mrb[0].mxu0
      %1493 = vdwg.mxu0
      %s1494 = scalar_lea.vmem %s5, 12
      %v1495 = vld [vmem:[%s1494] sm:$0x3]
      %v1498 = vunpack.c.l.b16 %v1217
      %v1499 = vunpack.c.l.b16 %v1218
      %v1500 = vpack.c.b16 %v1499, %v1498
      %v1502 = vsel %vm634, %v1500, 0
      %v1505 = vsel %vm665, %v1495, 0
      %1507 = vmatprep.subr.bf16.mxu0 0
      %1508 = vmatpush1.bf16.msra.mxu0 %v1505
      %1509 = vmatprep.subr.bf16.mxu0 0
      %1510 = vmatpush1.bf16.msra.mxu0 0
      %1511 = vmatprep.subr.bf16.mxu0 0
      %1512 = vmatpush1.bf16.msra.mxu0 0
      %1513 = vmatprep.subr.bf16.mxu0 0
      %1514 = vmatpush1.bf16.msra.mxu0 0
      %1515 = vmatprep.subr.bf16.mxu0 0
      %1516 = vmatpush1.bf16.msra.mxu0 0
      %1517 = vmatprep.subr.bf16.mxu0 0
      %1518 = vmatpush1.bf16.msra.mxu0 0
      %1519 = vmatprep.subr.bf16.mxu0 0
      %1520 = vmatpush1.bf16.msra.mxu0 0
      %1521 = vmatprep.subr.bf16.mxu0 0
      %1522 = vmatpush1.bf16.msra.mxu0 0
      %1523 = vmatprep.subr.bf16.mxu0 0
      %1524 = vmatpush1.bf16.msra.mxu0 0
      %1525 = vmatprep.subr.bf16.mxu0 0
      %1526 = vmatpush1.bf16.msra.mxu0 0
      %1527 = vmatprep.subr.bf16.mxu0 0
      %1528 = vmatpush1.bf16.msra.mxu0 0
      %1529 = vmatprep.subr.bf16.mxu0 0
      %1530 = vmatpush1.bf16.msra.mxu0 0
      %1531 = vmatprep.subr.bf16.mxu0 0
      %1532 = vmatpush1.bf16.msra.mxu0 0
      %1533 = vmatprep.subr.bf16.mxu0 0
      %1534 = vmatpush1.bf16.msra.mxu0 0
      %1535 = vmatprep.subr.bf16.mxu0 0
      %1536 = vmatpush1.bf16.msra.mxu0 0
      %1537 = vmatprep.subr.bf16.mxu0 0
      %1538 = vmatpush1.bf16.msra.mxu0 0
      %1539 = vmatprep.mubr.bf16.mxu0 0
      %1540 = vmatmul.mubr.bf16.gmra.mrb[0].mxu0 %v1266
      %v1541 = vpop.f32.mrb[0].mxu0
      %v1542 = vadd.f32 0.0, %v1541
      %v1543 = vpop.f32.mrb[0].mxu0
      %v1544 = vpop.f32.mrb[0].mxu0
      %v1545 = vadd.f32 0.0, %v1544
      %v1546 = vpop.f32.mrb[0].mxu0
      %1547 = vmatprep.mubr.bf16.mxu0 0
      %1548 = vmatmul.mubr.bf16.gmra.mrb[0].mxu0 %v1269
      %v1549 = vpop.f32.mrb[0].mxu0
      %v1550 = vadd.f32 0.0, %v1549
      %v1551 = vpop.f32.mrb[0].mxu0
      %v1552 = vpop.f32.mrb[0].mxu0
      %v1553 = vadd.f32 0.0, %v1552
      %v1554 = vpop.f32.mrb[0].mxu0
      %1555 = vmatprep.mubr.bf16.mxu0 0
      %1556 = vmatmul.mubr.bf16.gmra.mrb[0].mxu0 %v1272
      %v1557 = vpop.f32.mrb[0].mxu0
      %v1558 = vadd.f32 0.0, %v1557
      %v1559 = vpop.f32.mrb[0].mxu0
      %v1560 = vpop.f32.mrb[0].mxu0
      %v1561 = vadd.f32 0.0, %v1560
      %v1562 = vpop.f32.mrb[0].mxu0
      %1563 = vmatprep.mubr.bf16.mxu0 0
      %1564 = vmatmul.mubr.bf16.gmra.mrb[0].mxu0 %v1275
      %v1565 = vpop.f32.mrb[0].mxu0
      %v1566 = vadd.f32 0.0, %v1565
      %v1567 = vpop.f32.mrb[0].mxu0
      %v1568 = vpop.f32.mrb[0].mxu0
      %v1569 = vadd.f32 0.0, %v1568
      %v1570 = vpop.f32.mrb[0].mxu0
      %1571 = vmatprep.mubr.bf16.mxu0 0
      %1572 = vmatmul.mubr.bf16.gmra.mrb[0].mxu0 %v1278
      %v1573 = vpop.f32.mrb[0].mxu0
      %v1574 = vadd.f32 0.0, %v1573
      %v1575 = vpop.f32.mrb[0].mxu0
      %v1576 = vpop.f32.mrb[0].mxu0
      %v1577 = vadd.f32 0.0, %v1576
      %v1578 = vpop.f32.mrb[0].mxu0
      %1579 = vmatprep.mubr.bf16.mxu0 0
      %1580 = vmatmul.mubr.bf16.gmra.mrb[0].mxu0 %v1281
      %v1581 = vpop.f32.mrb[0].mxu0
      %v1582 = vadd.f32 0.0, %v1581
      %v1583 = vpop.f32.mrb[0].mxu0
      %v1584 = vpop.f32.mrb[0].mxu0
      %v1585 = vadd.f32 0.0, %v1584
      %v1586 = vpop.f32.mrb[0].mxu0
      %1587 = vmatprep.mubr.bf16.mxu0 0
      %1588 = vmatmul.mubr.bf16.gmra.mrb[0].mxu0 %v1284
      %v1589 = vpop.f32.mrb[0].mxu0
      %v1590 = vadd.f32 0.0, %v1589
      %v1591 = vpop.f32.mrb[0].mxu0
      %v1592 = vpop.f32.mrb[0].mxu0
      %v1593 = vadd.f32 0.0, %v1592
      %v1594 = vpop.f32.mrb[0].mxu0
      %1595 = vmatprep.mubr.bf16.mxu0 0
      %1596 = vmatmul.mubr.bf16.gmra.mrb[0].mxu0 %v1502
      %v1597 = vpop.f32.mrb[0].mxu0
      %v1598 = vadd.f32 0.0, %v1597
      %v1599 = vpop.f32.mrb[0].mxu0
      %v1600 = vpop.f32.mrb[0].mxu0
      %v1601 = vadd.f32 0.0, %v1600
      %v1602 = vpop.f32.mrb[0].mxu0
      %1603 = vdwg.mxu0
      %v1604 = vadd.f32 %v1432, %v1542
      %v1605 = vadd.f32 %v1435, %v1545
      %v1606 = vadd.f32 %v1440, %v1550
      %v1607 = vadd.f32 %v1443, %v1553
      %v1608 = vadd.f32 %v1448, %v1558
      %v1609 = vadd.f32 %v1451, %v1561
      %v1610 = vadd.f32 %v1456, %v1566
      %v1611 = vadd.f32 %v1459, %v1569
      %v1612 = vadd.f32 %v1464, %v1574
      %v1613 = vadd.f32 %v1467, %v1577
      %v1614 = vadd.f32 %v1472, %v1582
      %v1615 = vadd.f32 %v1475, %v1585
      %v1616 = vadd.f32 %v1480, %v1590
      %v1617 = vadd.f32 %v1483, %v1593
      %v1618 = vadd.f32 %v1488, %v1598
      %v1619 = vadd.f32 %v1491, %v1601
      %v1620 = vld [vmem:[#allocation2] sm:$0xf]
      %v1621 = vld [vmem:[#allocation2 + $0x4] sm:$0xf]
      %v1622 = vld [vmem:[#allocation2 + $0x8] sm:$0x1]
      %v1623 = vld [vmem:[#allocation2 + $0xc] sm:$0xf]
      %v1624 = vld [vmem:[#allocation2 + $0x10] sm:$0xf]
      %v1625 = vld [vmem:[#allocation2 + $0x14] sm:$0x1]
      %v1626 = vld [vmem:[#allocation2 + $0x18] sm:$0xf]
      %v1627 = vld [vmem:[#allocation2 + $0x1c] sm:$0xf]
      %v1628 = vld [vmem:[#allocation2 + $0x20] sm:$0x1]
      %v1629 = vld [vmem:[#allocation2 + $0x24] sm:$0xf]
      %v1630 = vld [vmem:[#allocation2 + $0x28] sm:$0xf]
      %v1631 = vld [vmem:[#allocation2 + $0x2c] sm:$0x1]
      %v1632 = vld [vmem:[#allocation2 + $0x30] sm:$0xf]
      %v1633 = vld [vmem:[#allocation2 + $0x34] sm:$0xf]
      %v1634 = vld [vmem:[#allocation2 + $0x38] sm:$0x1]
      %v1635 = vld [vmem:[#allocation2 + $0x3c] sm:$0xf]
      %v1636 = vld [vmem:[#allocation2 + $0x40] sm:$0xf]
      %v1637 = vld [vmem:[#allocation2 + $0x44] sm:$0x1]
      %v1638 = vld [vmem:[#allocation2 + $0x48] sm:$0xf]
      %v1639 = vld [vmem:[#allocation2 + $0x4c] sm:$0xf]
      %v1640 = vld [vmem:[#allocation2 + $0x50] sm:$0x1]
      %v1641 = vld [vmem:[#allocation2 + $0x54] sm:$0xf]
      %v1642 = vld [vmem:[#allocation2 + $0x58] sm:$0xf]
      %v1643 = vld [vmem:[#allocation2 + $0x5c] sm:$0x1]
      %v1644 = vld [vmem:[#allocation2 + $0x60] sm:$0xf]
      %v1645 = vld [vmem:[#allocation2 + $0x64] sm:$0xf]
      %v1646 = vld [vmem:[#allocation2 + $0x68] sm:$0x1]
      %v1647 = vld [vmem:[#allocation2 + $0x6c] sm:$0xf]
      %v1648 = vld [vmem:[#allocation2 + $0x70] sm:$0xf]
      %v1649 = vld [vmem:[#allocation2 + $0x74] sm:$0x1]
      %vm1650 = vsmask.f32 3328
      %vm1651 = vsmask.f32 7440
      %vm1652 = vmor %vm1650, %vm1651
      %v1654 = vshrl.u32 %v1620, 16
      %v1656 = vrot.slane %v1654, 4
      %v1657 = vshll.u32 %v1620, 16
      %v1659 = vrot.slane %v1657, 5
      %v1660 = vor.u32 %v1656, %v1659
      %v1661 = vrot.slane %v1660, 4
      %v1663 = vshll.u32 %v1621, 16
      %v1665 = vrot.slane %v1663, 5
      %v1666 = vsel %vm1652, %v1661, %v1665
      %v1667 = vshrl.u32 %v1621, 16
      %v1669 = vrot.slane %v1667, 4
      %v1670 = vor.u32 %v1669, %v1665
      %v1671 = vrot.slane %v1670, 4
      %v1673 = vshll.u32 %v1622, 16
      %v1675 = vrot.slane %v1673, 5
      %v1676 = vsel %vm1652, %v1671, %v1675
      %v1678 = vshrl.u32 %v1623, 16
      %v1680 = vrot.slane %v1678, 4
      %v1681 = vshll.u32 %v1623, 16
      %v1683 = vrot.slane %v1681, 5
      %v1684 = vor.u32 %v1680, %v1683
      %v1685 = vrot.slane %v1684, 4
      %v1687 = vshll.u32 %v1624, 16
      %v1689 = vrot.slane %v1687, 5
      %v1690 = vsel %vm1652, %v1685, %v1689
      %v1691 = vshrl.u32 %v1624, 16
      %v1693 = vrot.slane %v1691, 4
      %v1694 = vor.u32 %v1693, %v1689
      %v1695 = vrot.slane %v1694, 4
      %v1697 = vshll.u32 %v1625, 16
      %v1699 = vrot.slane %v1697, 5
      %v1700 = vsel %vm1652, %v1695, %v1699
      %v1702 = vshrl.u32 %v1626, 16
      %v1704 = vrot.slane %v1702, 4
      %v1705 = vshll.u32 %v1626, 16
      %v1707 = vrot.slane %v1705, 5
      %v1708 = vor.u32 %v1704, %v1707
      %v1709 = vrot.slane %v1708, 4
      %v1711 = vshll.u32 %v1627, 16
      %v1713 = vrot.slane %v1711, 5
      %v1714 = vsel %vm1652, %v1709, %v1713
      %v1715 = vshrl.u32 %v1627, 16
      %v1717 = vrot.slane %v1715, 4
      %v1718 = vor.u32 %v1717, %v1713
      %v1719 = vrot.slane %v1718, 4
      %v1721 = vshll.u32 %v1628, 16
      %v1723 = vrot.slane %v1721, 5
      %v1724 = vsel %vm1652, %v1719, %v1723
      %v1726 = vshrl.u32 %v1629, 16
      %v1728 = vrot.slane %v1726, 4
      %v1729 = vshll.u32 %v1629, 16
      %v1731 = vrot.slane %v1729, 5
      %v1732 = vor.u32 %v1728, %v1731
      %v1733 = vrot.slane %v1732, 4
      %v1735 = vshll.u32 %v1630, 16
      %v1737 = vrot.slane %v1735, 5
      %v1738 = vsel %vm1652, %v1733, %v1737
      %v1739 = vshrl.u32 %v1630, 16
      %v1741 = vrot.slane %v1739, 4
      %v1742 = vor.u32 %v1741, %v1737
      %v1743 = vrot.slane %v1742, 4
      %v1745 = vshll.u32 %v1631, 16
      %v1747 = vrot.slane %v1745, 5
      %v1748 = vsel %vm1652, %v1743, %v1747
      %v1750 = vshrl.u32 %v1632, 16
      %v1752 = vrot.slane %v1750, 4
      %v1753 = vshll.u32 %v1632, 16
      %v1755 = vrot.slane %v1753, 5
      %v1756 = vor.u32 %v1752, %v1755
      %v1757 = vrot.slane %v1756, 4
      %v1759 = vshll.u32 %v1633, 16
      %v1761 = vrot.slane %v1759, 5
      %v1762 = vsel %vm1652, %v1757, %v1761
      %v1763 = vshrl.u32 %v1633, 16
      %v1765 = vrot.slane %v1763, 4
      %v1766 = vor.u32 %v1765, %v1761
      %v1767 = vrot.slane %v1766, 4
      %v1769 = vshll.u32 %v1634, 16
      %v1771 = vrot.slane %v1769, 5
      %v1772 = vsel %vm1652, %v1767, %v1771
      %v1774 = vshrl.u32 %v1635, 16
      %v1776 = vrot.slane %v1774, 4
      %v1777 = vshll.u32 %v1635, 16
      %v1779 = vrot.slane %v1777, 5
      %v1780 = vor.u32 %v1776, %v1779
      %v1781 = vrot.slane %v1780, 4
      %v1783 = vshll.u32 %v1636, 16
      %v1785 = vrot.slane %v1783, 5
      %v1786 = vsel %vm1652, %v1781, %v1785
      %v1787 = vshrl.u32 %v1636, 16
      %v1789 = vrot.slane %v1787, 4
      %v1790 = vor.u32 %v1789, %v1785
      %v1791 = vrot.slane %v1790, 4
      %v1793 = vshll.u32 %v1637, 16
      %v1795 = vrot.slane %v1793, 5
      %v1796 = vsel %vm1652, %v1791, %v1795
      %v1798 = vshrl.u32 %v1638, 16
      %v1800 = vrot.slane %v1798, 4
      %v1801 = vshll.u32 %v1638, 16
      %v1803 = vrot.slane %v1801, 5
      %v1804 = vor.u32 %v1800, %v1803
      %v1805 = vrot.slane %v1804, 4
      %v1807 = vshll.u32 %v1639, 16
      %v1809 = vrot.slane %v1807, 5
      %v1810 = vsel %vm1652, %v1805, %v1809
      %v1811 = vshrl.u32 %v1639, 16
      %v1813 = vrot.slane %v1811, 4
      %v1814 = vor.u32 %v1813, %v1809
      %v1815 = vrot.slane %v1814, 4
      %v1817 = vshll.u32 %v1640, 16
      %v1819 = vrot.slane %v1817, 5
      %v1820 = vsel %vm1652, %v1815, %v1819
      %v1822 = vshrl.u32 %v1641, 16
      %v1824 = vrot.slane %v1822, 4
      %v1825 = vshll.u32 %v1641, 16
      %v1827 = vrot.slane %v1825, 5
      %v1828 = vor.u32 %v1824, %v1827
      %v1829 = vrot.slane %v1828, 4
      %v1831 = vshll.u32 %v1642, 16
      %v1833 = vrot.slane %v1831, 5
      %v1834 = vsel %vm1652, %v1829, %v1833
      %v1835 = vshrl.u32 %v1642, 16
      %v1837 = vrot.slane %v1835, 4
      %v1838 = vor.u32 %v1837, %v1833
      %v1839 = vrot.slane %v1838, 4
      %v1841 = vshll.u32 %v1643, 16
      %v1843 = vrot.slane %v1841, 5
      %v1844 = vsel %vm1652, %v1839, %v1843
      %v1846 = vshrl.u32 %v1644, 16
      %v1848 = vrot.slane %v1846, 4
      %v1849 = vshll.u32 %v1644, 16
      %v1851 = vrot.slane %v1849, 5
      %v1852 = vor.u32 %v1848, %v1851
      %v1853 = vrot.slane %v1852, 4
      %v1855 = vshll.u32 %v1645, 16
      %v1857 = vrot.slane %v1855, 5
      %v1858 = vsel %vm1652, %v1853, %v1857
      %v1859 = vshrl.u32 %v1645, 16
      %v1861 = vrot.slane %v1859, 4
      %v1862 = vor.u32 %v1861, %v1857
      %v1863 = vrot.slane %v1862, 4
      %v1865 = vshll.u32 %v1646, 16
      %v1867 = vrot.slane %v1865, 5
      %v1868 = vsel %vm1652, %v1863, %v1867
      %v1870 = vshrl.u32 %v1647, 16
      %v1872 = vrot.slane %v1870, 4
      %v1873 = vshll.u32 %v1647, 16
      %v1875 = vrot.slane %v1873, 5
      %v1876 = vor.u32 %v1872, %v1875
      %v1877 = vrot.slane %v1876, 4
      %v1879 = vshll.u32 %v1648, 16
      %v1881 = vrot.slane %v1879, 5
      %v1882 = vsel %vm1652, %v1877, %v1881
      %v1883 = vshrl.u32 %v1648, 16
      %v1885 = vrot.slane %v1883, 4
      %v1886 = vor.u32 %v1885, %v1881
      %v1887 = vrot.slane %v1886, 4
      %v1889 = vshll.u32 %v1649, 16
      %v1891 = vrot.slane %v1889, 5
      %v1892 = vsel %vm1652, %v1887, %v1891
      %s1893 = scalar_lea.vmem %s5, 2
      %v1894 = vld [vmem:[%s1893] sm:$0x3]
      %v1895 = vunpack.c.l.b16 %v1666
      %v1896 = vunpack.c.l.b16 %v1676
      %v1897 = vunpack.c.l.b16 %v1690
      %v1898 = vunpack.c.l.b16 %v1700
      %v1899 = vunpack.c.l.b16 %v1714
      %v1900 = vunpack.c.l.b16 %v1724
      %v1901 = vunpack.c.l.b16 %v1738
      %v1902 = vunpack.c.l.b16 %v1748
      %v1903 = vunpack.c.l.b16 %v1762
      %v1904 = vunpack.c.l.b16 %v1772
      %v1905 = vunpack.c.l.b16 %v1786
      %v1906 = vunpack.c.l.b16 %v1796
      %v1907 = vunpack.c.l.b16 %v1810
      %v1908 = vunpack.c.l.b16 %v1820
      %v1909 = vunpack.c.l.b16 %v1834
      %v1910 = vunpack.c.l.b16 %v1844
      %v1911 = vpack.c.b16 %v1896, %v1895
      %v1912 = vpack.c.b16 %v1898, %v1897
      %v1913 = vpack.c.b16 %v1900, %v1899
      %v1914 = vpack.c.b16 %v1902, %v1901
      %v1915 = vpack.c.b16 %v1904, %v1903
      %v1916 = vpack.c.b16 %v1906, %v1905
      %v1917 = vpack.c.b16 %v1908, %v1907
      %v1918 = vpack.c.b16 %v1910, %v1909
      %v1920 = vsel %vm634, %v1911, 0
      %v1923 = vsel %vm634, %v1912, 0
      %v1926 = vsel %vm634, %v1913, 0
      %v1929 = vsel %vm634, %v1914, 0
      %v1932 = vsel %vm634, %v1915, 0
      %v1935 = vsel %vm634, %v1916, 0
      %v1938 = vsel %vm634, %v1917, 0
      %v1941 = vsel %vm634, %v1918, 0
      %v1944 = vsel %vm665, %v1894, 0
      %1946 = vmatprep.subr.bf16.mxu0 0
      %1947 = vmatpush1.bf16.msra.mxu0 %v1944
      %1948 = vmatprep.subr.bf16.mxu0 0
      %1949 = vmatpush1.bf16.msra.mxu0 0
      %1950 = vmatprep.subr.bf16.mxu0 0
      %1951 = vmatpush1.bf16.msra.mxu0 0
      %1952 = vmatprep.subr.bf16.mxu0 0
      %1953 = vmatpush1.bf16.msra.mxu0 0
      %1954 = vmatprep.subr.bf16.mxu0 0
      %1955 = vmatpush1.bf16.msra.mxu0 0
      %1956 = vmatprep.subr.bf16.mxu0 0
      %1957 = vmatpush1.bf16.msra.mxu0 0
      %1958 = vmatprep.subr.bf16.mxu0 0
      %1959 = vmatpush1.bf16.msra.mxu0 0
      %1960 = vmatprep.subr.bf16.mxu0 0
      %1961 = vmatpush1.bf16.msra.mxu0 0
      %1962 = vmatprep.subr.bf16.mxu0 0
      %1963 = vmatpush1.bf16.msra.mxu0 0
      %1964 = vmatprep.subr.bf16.mxu0 0
      %1965 = vmatpush1.bf16.msra.mxu0 0
      %1966 = vmatprep.subr.bf16.mxu0 0
      %1967 = vmatpush1.bf16.msra.mxu0 0
      %1968 = vmatprep.subr.bf16.mxu0 0
      %1969 = vmatpush1.bf16.msra.mxu0 0
      %1970 = vmatprep.subr.bf16.mxu0 0
      %1971 = vmatpush1.bf16.msra.mxu0 0
      %1972 = vmatprep.subr.bf16.mxu0 0
      %1973 = vmatpush1.bf16.msra.mxu0 0
      %1974 = vmatprep.subr.bf16.mxu0 0
      %1975 = vmatpush1.bf16.msra.mxu0 0
      %1976 = vmatprep.subr.bf16.mxu0 0
      %1977 = vmatpush1.bf16.msra.mxu0 0
      %1978 = vmatprep.mubr.bf16.mxu0 0
      %1979 = vmatmul.mubr.bf16.gmra.mrb[0].mxu0 %v1920
      %v1980 = vpop.f32.mrb[0].mxu0
      %v1981 = vadd.f32 0.0, %v1980
      %v1982 = vpop.f32.mrb[0].mxu0
      %v1983 = vpop.f32.mrb[0].mxu0
      %v1984 = vadd.f32 0.0, %v1983
      %v1985 = vpop.f32.mrb[0].mxu0
      %1986 = vmatprep.mubr.bf16.mxu0 0
      %1987 = vmatmul.mubr.bf16.gmra.mrb[0].mxu0 %v1923
      %v1988 = vpop.f32.mrb[0].mxu0
      %v1989 = vadd.f32 0.0, %v1988
      %v1990 = vpop.f32.mrb[0].mxu0
      %v1991 = vpop.f32.mrb[0].mxu0
      %v1992 = vadd.f32 0.0, %v1991
      %v1993 = vpop.f32.mrb[0].mxu0
      %1994 = vmatprep.mubr.bf16.mxu0 0
      %1995 = vmatmul.mubr.bf16.gmra.mrb[0].mxu0 %v1926
      %v1996 = vpop.f32.mrb[0].mxu0
      %v1997 = vadd.f32 0.0, %v1996
      %v1998 = vpop.f32.mrb[0].mxu0
      %v1999 = vpop.f32.mrb[0].mxu0
      %v2000 = vadd.f32 0.0, %v1999
      %v2001 = vpop.f32.mrb[0].mxu0
      %2002 = vmatprep.mubr.bf16.mxu0 0
      %2003 = vmatmul.mubr.bf16.gmra.mrb[0].mxu0 %v1929
      %v2004 = vpop.f32.mrb[0].mxu0
      %v2005 = vadd.f32 0.0, %v2004
      %v2006 = vpop.f32.mrb[0].mxu0
      %v2007 = vpop.f32.mrb[0].mxu0
      %v2008 = vadd.f32 0.0, %v2007
      %v2009 = vpop.f32.mrb[0].mxu0
      %2010 = vmatprep.mubr.bf16.mxu0 0
      %2011 = vmatmul.mubr.bf16.gmra.mrb[0].mxu0 %v1932
      %v2012 = vpop.f32.mrb[0].mxu0
      %v2013 = vadd.f32 0.0, %v2012
      %v2014 = vpop.f32.mrb[0].mxu0
      %v2015 = vpop.f32.mrb[0].mxu0
      %v2016 = vadd.f32 0.0, %v2015
      %v2017 = vpop.f32.mrb[0].mxu0
      %2018 = vmatprep.mubr.bf16.mxu0 0
      %2019 = vmatmul.mubr.bf16.gmra.mrb[0].mxu0 %v1935
      %v2020 = vpop.f32.mrb[0].mxu0
      %v2021 = vadd.f32 0.0, %v2020
      %v2022 = vpop.f32.mrb[0].mxu0
      %v2023 = vpop.f32.mrb[0].mxu0
      %v2024 = vadd.f32 0.0, %v2023
      %v2025 = vpop.f32.mrb[0].mxu0
      %2026 = vmatprep.mubr.bf16.mxu0 0
      %2027 = vmatmul.mubr.bf16.gmra.mrb[0].mxu0 %v1938
      %v2028 = vpop.f32.mrb[0].mxu0
      %v2029 = vadd.f32 0.0, %v2028
      %v2030 = vpop.f32.mrb[0].mxu0
      %v2031 = vpop.f32.mrb[0].mxu0
      %v2032 = vadd.f32 0.0, %v2031
      %v2033 = vpop.f32.mrb[0].mxu0
      %2034 = vmatprep.mubr.bf16.mxu0 0
      %2035 = vmatmul.mubr.bf16.gmra.mrb[0].mxu0 %v1941
      %v2036 = vpop.f32.mrb[0].mxu0
      %v2037 = vadd.f32 0.0, %v2036
      %v2038 = vpop.f32.mrb[0].mxu0
      %v2039 = vpop.f32.mrb[0].mxu0
      %v2040 = vadd.f32 0.0, %v2039
      %v2041 = vpop.f32.mrb[0].mxu0
      %2042 = vdwg.mxu0
      %v2043 = vadd.f32 %v1604, %v1981
      %v2044 = vadd.f32 %v1605, %v1984
      %v2045 = vadd.f32 %v1606, %v1989
      %v2046 = vadd.f32 %v1607, %v1992
      %v2047 = vadd.f32 %v1608, %v1997
      %v2048 = vadd.f32 %v1609, %v2000
      %v2049 = vadd.f32 %v1610, %v2005
      %v2050 = vadd.f32 %v1611, %v2008
      %v2051 = vadd.f32 %v1612, %v2013
      %v2052 = vadd.f32 %v1613, %v2016
      %v2053 = vadd.f32 %v1614, %v2021
      %v2054 = vadd.f32 %v1615, %v2024
      %v2055 = vadd.f32 %v1616, %v2029
      %v2056 = vadd.f32 %v1617, %v2032
      %v2057 = vadd.f32 %v1618, %v2037
      %v2058 = vadd.f32 %v1619, %v2040
      %s2059 = scalar_lea.vmem %s5, 8
      %v2060 = vld [vmem:[%s2059] sm:$0x3]
      %v2061 = vunpack.c.l.b16 %v1858
      %v2062 = vunpack.c.l.b16 %v1868
      %v2063 = vpack.c.b16 %v2062, %v2061
      %v2065 = vsel %vm634, %v2063, 0
      %v2068 = vsel %vm665, %v2060, 0
      %2070 = vmatprep.subr.bf16.mxu0 0
      %2071 = vmatpush1.bf16.msra.mxu0 %v2068
      %2072 = vmatprep.subr.bf16.mxu0 0
      %2073 = vmatpush1.bf16.msra.mxu0 0
      %2074 = vmatprep.subr.bf16.mxu0 0
      %2075 = vmatpush1.bf16.msra.mxu0 0
      %2076 = vmatprep.subr.bf16.mxu0 0
      %2077 = vmatpush1.bf16.msra.mxu0 0
      %2078 = vmatprep.subr.bf16.mxu0 0
      %2079 = vmatpush1.bf16.msra.mxu0 0
      %2080 = vmatprep.subr.bf16.mxu0 0
      %2081 = vmatpush1.bf16.msra.mxu0 0
      %2082 = vmatprep.subr.bf16.mxu0 0
      %2083 = vmatpush1.bf16.msra.mxu0 0
      %2084 = vmatprep.subr.bf16.mxu0 0
      %2085 = vmatpush1.bf16.msra.mxu0 0
      %2086 = vmatprep.subr.bf16.mxu0 0
      %2087 = vmatpush1.bf16.msra.mxu0 0
      %2088 = vmatprep.subr.bf16.mxu0 0
      %2089 = vmatpush1.bf16.msra.mxu0 0
      %2090 = vmatprep.subr.bf16.mxu0 0
      %2091 = vmatpush1.bf16.msra.mxu0 0
      %2092 = vmatprep.subr.bf16.mxu0 0
      %2093 = vmatpush1.bf16.msra.mxu0 0
      %2094 = vmatprep.subr.bf16.mxu0 0
      %2095 = vmatpush1.bf16.msra.mxu0 0
      %2096 = vmatprep.subr.bf16.mxu0 0
      %2097 = vmatpush1.bf16.msra.mxu0 0
      %2098 = vmatprep.subr.bf16.mxu0 0
      %2099 = vmatpush1.bf16.msra.mxu0 0
      %2100 = vmatprep.subr.bf16.mxu0 0
      %2101 = vmatpush1.bf16.msra.mxu0 0
      %2102 = vmatprep.mubr.bf16.mxu0 0
      %2103 = vmatmul.mubr.bf16.gmra.mrb[0].mxu0 %v1923
      %v2104 = vpop.f32.mrb[0].mxu0
      %v2105 = vadd.f32 0.0, %v2104
      %v2106 = vpop.f32.mrb[0].mxu0
      %v2107 = vpop.f32.mrb[0].mxu0
      %v2108 = vadd.f32 0.0, %v2107
      %v2109 = vpop.f32.mrb[0].mxu0
      %2110 = vmatprep.mubr.bf16.mxu0 0
      %2111 = vmatmul.mubr.bf16.gmra.mrb[0].mxu0 %v1926
      %v2112 = vpop.f32.mrb[0].mxu0
      %v2113 = vadd.f32 0.0, %v2112
      %v2114 = vpop.f32.mrb[0].mxu0
      %v2115 = vpop.f32.mrb[0].mxu0
      %v2116 = vadd.f32 0.0, %v2115
      %v2117 = vpop.f32.mrb[0].mxu0
      %2118 = vmatprep.mubr.bf16.mxu0 0
      %2119 = vmatmul.mubr.bf16.gmra.mrb[0].mxu0 %v1929
      %v2120 = vpop.f32.mrb[0].mxu0
      %v2121 = vadd.f32 0.0, %v2120
      %v2122 = vpop.f32.mrb[0].mxu0
      %v2123 = vpop.f32.mrb[0].mxu0
      %v2124 = vadd.f32 0.0, %v2123
      %v2125 = vpop.f32.mrb[0].mxu0
      %2126 = vmatprep.mubr.bf16.mxu0 0
      %2127 = vmatmul.mubr.bf16.gmra.mrb[0].mxu0 %v1932
      %v2128 = vpop.f32.mrb[0].mxu0
      %v2129 = vadd.f32 0.0, %v2128
      %v2130 = vpop.f32.mrb[0].mxu0
      %v2131 = vpop.f32.mrb[0].mxu0
      %v2132 = vadd.f32 0.0, %v2131
      %v2133 = vpop.f32.mrb[0].mxu0
      %2134 = vmatprep.mubr.bf16.mxu0 0
      %2135 = vmatmul.mubr.bf16.gmra.mrb[0].mxu0 %v1935
      %v2136 = vpop.f32.mrb[0].mxu0
      %v2137 = vadd.f32 0.0, %v2136
      %v2138 = vpop.f32.mrb[0].mxu0
      %v2139 = vpop.f32.mrb[0].mxu0
      %v2140 = vadd.f32 0.0, %v2139
      %v2141 = vpop.f32.mrb[0].mxu0
      %2142 = vmatprep.mubr.bf16.mxu0 0
      %2143 = vmatmul.mubr.bf16.gmra.mrb[0].mxu0 %v1938
      %v2144 = vpop.f32.mrb[0].mxu0
      %v2145 = vadd.f32 0.0, %v2144
      %v2146 = vpop.f32.mrb[0].mxu0
      %v2147 = vpop.f32.mrb[0].mxu0
      %v2148 = vadd.f32 0.0, %v2147
      %v2149 = vpop.f32.mrb[0].mxu0
      %2150 = vmatprep.mubr.bf16.mxu0 0
      %2151 = vmatmul.mubr.bf16.gmra.mrb[0].mxu0 %v1941
      %v2152 = vpop.f32.mrb[0].mxu0
      %v2153 = vadd.f32 0.0, %v2152
      %v2154 = vpop.f32.mrb[0].mxu0
      %v2155 = vpop.f32.mrb[0].mxu0
      %v2156 = vadd.f32 0.0, %v2155
      %v2157 = vpop.f32.mrb[0].mxu0
      %2158 = vmatprep.mubr.bf16.mxu0 0
      %2159 = vmatmul.mubr.bf16.gmra.mrb[0].mxu0 %v2065
      %v2160 = vpop.f32.mrb[0].mxu0
      %v2161 = vadd.f32 0.0, %v2160
      %v2162 = vpop.f32.mrb[0].mxu0
      %v2163 = vpop.f32.mrb[0].mxu0
      %v2164 = vadd.f32 0.0, %v2163
      %v2165 = vpop.f32.mrb[0].mxu0
      %2166 = vdwg.mxu0
      %v2167 = vadd.f32 %v2043, %v2105
      %v2168 = vadd.f32 %v2044, %v2108
      %v2169 = vadd.f32 %v2045, %v2113
      %v2170 = vadd.f32 %v2046, %v2116
      %v2171 = vadd.f32 %v2047, %v2121
      %v2172 = vadd.f32 %v2048, %v2124
      %v2173 = vadd.f32 %v2049, %v2129
      %v2174 = vadd.f32 %v2050, %v2132
      %v2175 = vadd.f32 %v2051, %v2137
      %v2176 = vadd.f32 %v2052, %v2140
      %v2177 = vadd.f32 %v2053, %v2145
      %v2178 = vadd.f32 %v2054, %v2148
      %v2179 = vadd.f32 %v2055, %v2153
      %v2180 = vadd.f32 %v2056, %v2156
      %v2181 = vadd.f32 %v2057, %v2161
      %v2182 = vadd.f32 %v2058, %v2164
      %s2183 = scalar_lea.vmem %s5, 14
      %v2184 = vld [vmem:[%s2183] sm:$0x3]
      %v2185 = vunpack.c.l.b16 %v1882
      %v2186 = vunpack.c.l.b16 %v1892
      %v2187 = vpack.c.b16 %v2186, %v2185
      %v2189 = vsel %vm634, %v2187, 0
      %v2192 = vsel %vm665, %v2184, 0
      %2194 = vmatprep.subr.bf16.mxu0 0
      %2195 = vmatpush1.bf16.msra.mxu0 %v2192
      %2196 = vmatprep.subr.bf16.mxu0 0
      %2197 = vmatpush1.bf16.msra.mxu0 0
      %2198 = vmatprep.subr.bf16.mxu0 0
      %2199 = vmatpush1.bf16.msra.mxu0 0
      %2200 = vmatprep.subr.bf16.mxu0 0
      %2201 = vmatpush1.bf16.msra.mxu0 0
      %2202 = vmatprep.subr.bf16.mxu0 0
      %2203 = vmatpush1.bf16.msra.mxu0 0
      %2204 = vmatprep.subr.bf16.mxu0 0
      %2205 = vmatpush1.bf16.msra.mxu0 0
      %2206 = vmatprep.subr.bf16.mxu0 0
      %2207 = vmatpush1.bf16.msra.mxu0 0
      %2208 = vmatprep.subr.bf16.mxu0 0
      %2209 = vmatpush1.bf16.msra.mxu0 0
      %2210 = vmatprep.subr.bf16.mxu0 0
      %2211 = vmatpush1.bf16.msra.mxu0 0
      %2212 = vmatprep.subr.bf16.mxu0 0
      %2213 = vmatpush1.bf16.msra.mxu0 0
      %2214 = vmatprep.subr.bf16.mxu0 0
      %2215 = vmatpush1.bf16.msra.mxu0 0
      %2216 = vmatprep.subr.bf16.mxu0 0
      %2217 = vmatpush1.bf16.msra.mxu0 0
      %2218 = vmatprep.subr.bf16.mxu0 0
      %2219 = vmatpush1.bf16.msra.mxu0 0
      %2220 = vmatprep.subr.bf16.mxu0 0
      %2221 = vmatpush1.bf16.msra.mxu0 0
      %2222 = vmatprep.subr.bf16.mxu0 0
      %2223 = vmatpush1.bf16.msra.mxu0 0
      %2224 = vmatprep.subr.bf16.mxu0 0
      %2225 = vmatpush1.bf16.msra.mxu0 0
      %2226 = vmatprep.mubr.bf16.mxu0 0
      %2227 = vmatmul.mubr.bf16.gmra.mrb[0].mxu0 %v1926
      %v2228 = vpop.f32.mrb[0].mxu0
      %v2229 = vadd.f32 0.0, %v2228
      %v2230 = vpop.f32.mrb[0].mxu0
      %v2231 = vpop.f32.mrb[0].mxu0
      %v2232 = vadd.f32 0.0, %v2231
      %v2233 = vpop.f32.mrb[0].mxu0
      %2234 = vmatprep.mubr.bf16.mxu0 0
      %2235 = vmatmul.mubr.bf16.gmra.mrb[0].mxu0 %v1929
      %v2236 = vpop.f32.mrb[0].mxu0
      %v2237 = vadd.f32 0.0, %v2236
      %v2238 = vpop.f32.mrb[0].mxu0
      %v2239 = vpop.f32.mrb[0].mxu0
      %v2240 = vadd.f32 0.0, %v2239
      %v2241 = vpop.f32.mrb[0].mxu0
      %2242 = vmatprep.mubr.bf16.mxu0 0
      %2243 = vmatmul.mubr.bf16.gmra.mrb[0].mxu0 %v1932
      %v2244 = vpop.f32.mrb[0].mxu0
      %v2245 = vadd.f32 0.0, %v2244
      %v2246 = vpop.f32.mrb[0].mxu0
      %v2247 = vpop.f32.mrb[0].mxu0
      %v2248 = vadd.f32 0.0, %v2247
      %v2249 = vpop.f32.mrb[0].mxu0
      %2250 = vmatprep.mubr.bf16.mxu0 0
      %2251 = vmatmul.mubr.bf16.gmra.mrb[0].mxu0 %v1935
      %v2252 = vpop.f32.mrb[0].mxu0
      %v2253 = vadd.f32 0.0, %v2252
      %v2254 = vpop.f32.mrb[0].mxu0
      %v2255 = vpop.f32.mrb[0].mxu0
      %v2256 = vadd.f32 0.0, %v2255
      %v2257 = vpop.f32.mrb[0].mxu0
      %2258 = vmatprep.mubr.bf16.mxu0 0
      %2259 = vmatmul.mubr.bf16.gmra.mrb[0].mxu0 %v1938
      %v2260 = vpop.f32.mrb[0].mxu0
      %v2261 = vadd.f32 0.0, %v2260
      %v2262 = vpop.f32.mrb[0].mxu0
      %v2263 = vpop.f32.mrb[0].mxu0
      %v2264 = vadd.f32 0.0, %v2263
      %v2265 = vpop.f32.mrb[0].mxu0
      %2266 = vmatprep.mubr.bf16.mxu0 0
      %2267 = vmatmul.mubr.bf16.gmra.mrb[0].mxu0 %v1941
      %v2268 = vpop.f32.mrb[0].mxu0
      %v2269 = vadd.f32 0.0, %v2268
      %v2270 = vpop.f32.mrb[0].mxu0
      %v2271 = vpop.f32.mrb[0].mxu0
      %v2272 = vadd.f32 0.0, %v2271
      %v2273 = vpop.f32.mrb[0].mxu0
      %2274 = vmatprep.mubr.bf16.mxu0 0
      %2275 = vmatmul.mubr.bf16.gmra.mrb[0].mxu0 %v2065
      %v2276 = vpop.f32.mrb[0].mxu0
      %v2277 = vadd.f32 0.0, %v2276
      %v2278 = vpop.f32.mrb[0].mxu0
      %v2279 = vpop.f32.mrb[0].mxu0
      %v2280 = vadd.f32 0.0, %v2279
      %v2281 = vpop.f32.mrb[0].mxu0
      %2282 = vmatprep.mubr.bf16.mxu0 0
      %2283 = vmatmul.mubr.bf16.gmra.mrb[0].mxu0 %v2189
      %v2284 = vpop.f32.mrb[0].mxu0
      %v2285 = vadd.f32 0.0, %v2284
      %v2286 = vpop.f32.mrb[0].mxu0
      %v2287 = vpop.f32.mrb[0].mxu0
      %v2288 = vadd.f32 0.0, %v2287
      %v2289 = vpop.f32.mrb[0].mxu0
      %2290 = vdwg.mxu0
      %v2291 = vadd.f32 %v2167, %v2229
      %v2292 = vadd.f32 %v2168, %v2232
      %v2293 = vadd.f32 %v2169, %v2237
      %v2294 = vadd.f32 %v2170, %v2240
      %v2295 = vadd.f32 %v2171, %v2245
      %v2296 = vadd.f32 %v2172, %v2248
      %v2297 = vadd.f32 %v2173, %v2253
      %v2298 = vadd.f32 %v2174, %v2256
      %v2299 = vadd.f32 %v2175, %v2261
      %v2300 = vadd.f32 %v2176, %v2264
      %v2301 = vadd.f32 %v2177, %v2269
      %v2302 = vadd.f32 %v2178, %v2272
      %v2303 = vadd.f32 %v2179, %v2277
      %v2304 = vadd.f32 %v2180, %v2280
      %v2305 = vadd.f32 %v2181, %v2285
      %v2306 = vadd.f32 %v2182, %v2288
      %v2307 = vld [vmem:[#allocation2] sm:$0xe]
      %v2308 = vld [vmem:[#allocation2 + $0xc] sm:$0xe]
      %v2309 = vld [vmem:[#allocation2 + $0x18] sm:$0xe]
      %v2310 = vld [vmem:[#allocation2 + $0x24] sm:$0xe]
      %v2311 = vld [vmem:[#allocation2 + $0x30] sm:$0xe]
      %v2312 = vld [vmem:[#allocation2 + $0x3c] sm:$0xe]
      %v2313 = vld [vmem:[#allocation2 + $0x48] sm:$0xe]
      %v2314 = vld [vmem:[#allocation2 + $0x54] sm:$0xe]
      %v2315 = vld [vmem:[#allocation2 + $0x60] sm:$0xe]
      %v2316 = vld [vmem:[#allocation2 + $0x6c] sm:$0xe]
      %vm2347 = vcmask 1042432
      %vm2348 = vcmask 1046532
      %vm2349 = vmor %vm2347, %vm2348
      %v2350 = vrot.slane %v2307, 5
      %v2351 = vrot.slane %v2350, 4
      %v2352 = vrot.slane %v1621, 5
      %v2353 = vsel %vm2349, %v2351, %v2352
      %v2354 = vrot.slane %v2352, 4
      %v2355 = vrot.slane %v1622, 5
      %v2356 = vsel %vm2349, %v2354, %v2355
      %v2357 = vrot.slane %v2308, 5
      %v2358 = vrot.slane %v2357, 4
      %v2359 = vrot.slane %v1624, 5
      %v2360 = vsel %vm2349, %v2358, %v2359
      %v2361 = vrot.slane %v2359, 4
      %v2362 = vrot.slane %v1625, 5
      %v2363 = vsel %vm2349, %v2361, %v2362
      %v2364 = vrot.slane %v2309, 5
      %v2365 = vrot.slane %v2364, 4
      %v2366 = vrot.slane %v1627, 5
      %v2367 = vsel %vm2349, %v2365, %v2366
      %v2368 = vrot.slane %v2366, 4
      %v2369 = vrot.slane %v1628, 5
      %v2370 = vsel %vm2349, %v2368, %v2369
      %v2371 = vrot.slane %v2310, 5
      %v2372 = vrot.slane %v2371, 4
      %v2373 = vrot.slane %v1630, 5
      %v2374 = vsel %vm2349, %v2372, %v2373
      %v2375 = vrot.slane %v2373, 4
      %v2376 = vrot.slane %v1631, 5
      %v2377 = vsel %vm2349, %v2375, %v2376
      %v2378 = vrot.slane %v2311, 5
      %v2379 = vrot.slane %v2378, 4
      %v2380 = vrot.slane %v1633, 5
      %v2381 = vsel %vm2349, %v2379, %v2380
      %v2382 = vrot.slane %v2380, 4
      %v2383 = vrot.slane %v1634, 5
      %v2384 = vsel %vm2349, %v2382, %v2383
      %v2385 = vrot.slane %v2312, 5
      %v2386 = vrot.slane %v2385, 4
      %v2387 = vrot.slane %v1636, 5
      %v2388 = vsel %vm2349, %v2386, %v2387
      %v2389 = vrot.slane %v2387, 4
      %v2390 = vrot.slane %v1637, 5
      %v2391 = vsel %vm2349, %v2389, %v2390
      %v2392 = vrot.slane %v2313, 5
      %v2393 = vrot.slane %v2392, 4
      %v2394 = vrot.slane %v1639, 5
      %v2395 = vsel %vm2349, %v2393, %v2394
      %v2396 = vrot.slane %v2394, 4
      %v2397 = vrot.slane %v1640, 5
      %v2398 = vsel %vm2349, %v2396, %v2397
      %v2399 = vrot.slane %v2314, 5
      %v2400 = vrot.slane %v2399, 4
      %v2401 = vrot.slane %v1642, 5
      %v2402 = vsel %vm2349, %v2400, %v2401
      %v2403 = vrot.slane %v2401, 4
      %v2404 = vrot.slane %v1643, 5
      %v2405 = vsel %vm2349, %v2403, %v2404
      %v2406 = vrot.slane %v2315, 5
      %v2407 = vrot.slane %v2406, 4
      %v2408 = vrot.slane %v1645, 5
      %v2409 = vsel %vm2349, %v2407, %v2408
      %v2410 = vrot.slane %v2408, 4
      %v2411 = vrot.slane %v1646, 5
      %v2412 = vsel %vm2349, %v2410, %v2411
      %v2413 = vrot.slane %v2316, 5
      %v2414 = vrot.slane %v2413, 4
      %v2415 = vrot.slane %v1648, 5
      %v2416 = vsel %vm2349, %v2414, %v2415
      %v2417 = vrot.slane %v2415, 4
      %v2418 = vrot.slane %v1649, 5
      %v2419 = vsel %vm2349, %v2417, %v2418
      %s2420 = scalar_lea.vmem %s5, 4
      %v2421 = vld [vmem:[%s2420] sm:$0x3]
      %v2422 = vunpack.c.l.b16 %v2353
      %v2423 = vunpack.c.l.b16 %v2356
      %v2424 = vunpack.c.l.b16 %v2360
      %v2425 = vunpack.c.l.b16 %v2363
      %v2426 = vunpack.c.l.b16 %v2367
      %v2427 = vunpack.c.l.b16 %v2370
      %v2428 = vunpack.c.l.b16 %v2374
      %v2429 = vunpack.c.l.b16 %v2377
      %v2430 = vunpack.c.l.b16 %v2381
      %v2431 = vunpack.c.l.b16 %v2384
      %v2432 = vunpack.c.l.b16 %v2388
      %v2433 = vunpack.c.l.b16 %v2391
      %v2434 = vunpack.c.l.b16 %v2395
      %v2435 = vunpack.c.l.b16 %v2398
      %v2436 = vunpack.c.l.b16 %v2402
      %v2437 = vunpack.c.l.b16 %v2405
      %v2438 = vpack.c.b16 %v2423, %v2422
      %v2439 = vpack.c.b16 %v2425, %v2424
      %v2440 = vpack.c.b16 %v2427, %v2426
      %v2441 = vpack.c.b16 %v2429, %v2428
      %v2442 = vpack.c.b16 %v2431, %v2430
      %v2443 = vpack.c.b16 %v2433, %v2432
      %v2444 = vpack.c.b16 %v2435, %v2434
      %v2445 = vpack.c.b16 %v2437, %v2436
      %v2447 = vsel %vm634, %v2438, 0
      %v2450 = vsel %vm634, %v2439, 0
      %v2453 = vsel %vm634, %v2440, 0
      %v2456 = vsel %vm634, %v2441, 0
      %v2459 = vsel %vm634, %v2442, 0
      %v2462 = vsel %vm634, %v2443, 0
      %v2465 = vsel %vm634, %v2444, 0
      %v2468 = vsel %vm634, %v2445, 0
      %v2471 = vsel %vm665, %v2421, 0
      %2473 = vmatprep.subr.bf16.mxu0 0
      %2474 = vmatpush1.bf16.msra.mxu0 %v2471
      %2475 = vmatprep.subr.bf16.mxu0 0
      %2476 = vmatpush1.bf16.msra.mxu0 0
      %2477 = vmatprep.subr.bf16.mxu0 0
      %2478 = vmatpush1.bf16.msra.mxu0 0
      %2479 = vmatprep.subr.bf16.mxu0 0
      %2480 = vmatpush1.bf16.msra.mxu0 0
      %2481 = vmatprep.subr.bf16.mxu0 0
      %2482 = vmatpush1.bf16.msra.mxu0 0
      %2483 = vmatprep.subr.bf16.mxu0 0
      %2484 = vmatpush1.bf16.msra.mxu0 0
      %2485 = vmatprep.subr.bf16.mxu0 0
      %2486 = vmatpush1.bf16.msra.mxu0 0
      %2487 = vmatprep.subr.bf16.mxu0 0
      %2488 = vmatpush1.bf16.msra.mxu0 0
      %2489 = vmatprep.subr.bf16.mxu0 0
      %2490 = vmatpush1.bf16.msra.mxu0 0
      %2491 = vmatprep.subr.bf16.mxu0 0
      %2492 = vmatpush1.bf16.msra.mxu0 0
      %2493 = vmatprep.subr.bf16.mxu0 0
      %2494 = vmatpush1.bf16.msra.mxu0 0
      %2495 = vmatprep.subr.bf16.mxu0 0
      %2496 = vmatpush1.bf16.msra.mxu0 0
      %2497 = vmatprep.subr.bf16.mxu0 0
      %2498 = vmatpush1.bf16.msra.mxu0 0
      %2499 = vmatprep.subr.bf16.mxu0 0
      %2500 = vmatpush1.bf16.msra.mxu0 0
      %2501 = vmatprep.subr.bf16.mxu0 0
      %2502 = vmatpush1.bf16.msra.mxu0 0
      %2503 = vmatprep.subr.bf16.mxu0 0
      %2504 = vmatpush1.bf16.msra.mxu0 0
      %2505 = vmatprep.mubr.bf16.mxu0 0
      %2506 = vmatmul.mubr.bf16.gmra.mrb[0].mxu0 %v2447
      %v2507 = vpop.f32.mrb[0].mxu0
      %v2508 = vadd.f32 0.0, %v2507
      %v2509 = vpop.f32.mrb[0].mxu0
      %v2510 = vpop.f32.mrb[0].mxu0
      %v2511 = vadd.f32 0.0, %v2510
      %v2512 = vpop.f32.mrb[0].mxu0
      %2513 = vmatprep.mubr.bf16.mxu0 0
      %2514 = vmatmul.mubr.bf16.gmra.mrb[0].mxu0 %v2450
      %v2515 = vpop.f32.mrb[0].mxu0
      %v2516 = vadd.f32 0.0, %v2515
      %v2517 = vpop.f32.mrb[0].mxu0
      %v2518 = vpop.f32.mrb[0].mxu0
      %v2519 = vadd.f32 0.0, %v2518
      %v2520 = vpop.f32.mrb[0].mxu0
      %2521 = vmatprep.mubr.bf16.mxu0 0
      %2522 = vmatmul.mubr.bf16.gmra.mrb[0].mxu0 %v2453
      %v2523 = vpop.f32.mrb[0].mxu0
      %v2524 = vadd.f32 0.0, %v2523
      %v2525 = vpop.f32.mrb[0].mxu0
      %v2526 = vpop.f32.mrb[0].mxu0
      %v2527 = vadd.f32 0.0, %v2526
      %v2528 = vpop.f32.mrb[0].mxu0
      %2529 = vmatprep.mubr.bf16.mxu0 0
      %2530 = vmatmul.mubr.bf16.gmra.mrb[0].mxu0 %v2456
      %v2531 = vpop.f32.mrb[0].mxu0
      %v2532 = vadd.f32 0.0, %v2531
      %v2533 = vpop.f32.mrb[0].mxu0
      %v2534 = vpop.f32.mrb[0].mxu0
      %v2535 = vadd.f32 0.0, %v2534
      %v2536 = vpop.f32.mrb[0].mxu0
      %2537 = vmatprep.mubr.bf16.mxu0 0
      %2538 = vmatmul.mubr.bf16.gmra.mrb[0].mxu0 %v2459
      %v2539 = vpop.f32.mrb[0].mxu0
      %v2540 = vadd.f32 0.0, %v2539
      %v2541 = vpop.f32.mrb[0].mxu0
      %v2542 = vpop.f32.mrb[0].mxu0
      %v2543 = vadd.f32 0.0, %v2542
      %v2544 = vpop.f32.mrb[0].mxu0
      %2545 = vmatprep.mubr.bf16.mxu0 0
      %2546 = vmatmul.mubr.bf16.gmra.mrb[0].mxu0 %v2462
      %v2547 = vpop.f32.mrb[0].mxu0
      %v2548 = vadd.f32 0.0, %v2547
      %v2549 = vpop.f32.mrb[0].mxu0
      %v2550 = vpop.f32.mrb[0].mxu0
      %v2551 = vadd.f32 0.0, %v2550
      %v2552 = vpop.f32.mrb[0].mxu0
      %2553 = vmatprep.mubr.bf16.mxu0 0
      %2554 = vmatmul.mubr.bf16.gmra.mrb[0].mxu0 %v2465
      %v2555 = vpop.f32.mrb[0].mxu0
      %v2556 = vadd.f32 0.0, %v2555
      %v2557 = vpop.f32.mrb[0].mxu0
      %v2558 = vpop.f32.mrb[0].mxu0
      %v2559 = vadd.f32 0.0, %v2558
      %v2560 = vpop.f32.mrb[0].mxu0
      %2561 = vmatprep.mubr.bf16.mxu0 0
      %2562 = vmatmul.mubr.bf16.gmra.mrb[0].mxu0 %v2468
      %v2563 = vpop.f32.mrb[0].mxu0
      %v2564 = vadd.f32 0.0, %v2563
      %v2565 = vpop.f32.mrb[0].mxu0
      %v2566 = vpop.f32.mrb[0].mxu0
      %v2567 = vadd.f32 0.0, %v2566
      %v2568 = vpop.f32.mrb[0].mxu0
      %2569 = vdwg.mxu0
      %v2570 = vadd.f32 %v2291, %v2508
      %v2571 = vadd.f32 %v2292, %v2511
      %v2572 = vadd.f32 %v2293, %v2516
      %v2573 = vadd.f32 %v2294, %v2519
      %v2574 = vadd.f32 %v2295, %v2524
      %v2575 = vadd.f32 %v2296, %v2527
      %v2576 = vadd.f32 %v2297, %v2532
      %v2577 = vadd.f32 %v2298, %v2535
      %v2578 = vadd.f32 %v2299, %v2540
      %v2579 = vadd.f32 %v2300, %v2543
      %v2580 = vadd.f32 %v2301, %v2548
      %v2581 = vadd.f32 %v2302, %v2551
      %v2582 = vadd.f32 %v2303, %v2556
      %v2583 = vadd.f32 %v2304, %v2559
      %v2584 = vadd.f32 %v2305, %v2564
      %v2585 = vadd.f32 %v2306, %v2567
      %s2586 = scalar_lea.vmem %s5, 10
      %v2587 = vld [vmem:[%s2586] sm:$0x3]
      %v2588 = vunpack.c.l.b16 %v2409
      %v2589 = vunpack.c.l.b16 %v2412
      %v2590 = vpack.c.b16 %v2589, %v2588
      %v2592 = vsel %vm634, %v2590, 0
      %v2595 = vsel %vm665, %v2587, 0
      %2597 = vmatprep.subr.bf16.mxu0 0
      %2598 = vmatpush1.bf16.msra.mxu0 %v2595
      %2599 = vmatprep.subr.bf16.mxu0 0
      %2600 = vmatpush1.bf16.msra.mxu0 0
      %2601 = vmatprep.subr.bf16.mxu0 0
      %2602 = vmatpush1.bf16.msra.mxu0 0
      %2603 = vmatprep.subr.bf16.mxu0 0
      %2604 = vmatpush1.bf16.msra.mxu0 0
      %2605 = vmatprep.subr.bf16.mxu0 0
      %2606 = vmatpush1.bf16.msra.mxu0 0
      %2607 = vmatprep.subr.bf16.mxu0 0
      %2608 = vmatpush1.bf16.msra.mxu0 0
      %2609 = vmatprep.subr.bf16.mxu0 0
      %2610 = vmatpush1.bf16.msra.mxu0 0
      %2611 = vmatprep.subr.bf16.mxu0 0
      %2612 = vmatpush1.bf16.msra.mxu0 0
      %2613 = vmatprep.subr.bf16.mxu0 0
      %2614 = vmatpush1.bf16.msra.mxu0 0
      %2615 = vmatprep.subr.bf16.mxu0 0
      %2616 = vmatpush1.bf16.msra.mxu0 0
      %2617 = vmatprep.subr.bf16.mxu0 0
      %2618 = vmatpush1.bf16.msra.mxu0 0
      %2619 = vmatprep.subr.bf16.mxu0 0
      %2620 = vmatpush1.bf16.msra.mxu0 0
      %2621 = vmatprep.subr.bf16.mxu0 0
      %2622 = vmatpush1.bf16.msra.mxu0 0
      %2623 = vmatprep.subr.bf16.mxu0 0
      %2624 = vmatpush1.bf16.msra.mxu0 0
      %2625 = vmatprep.subr.bf16.mxu0 0
      %2626 = vmatpush1.bf16.msra.mxu0 0
      %2627 = vmatprep.subr.bf16.mxu0 0
      %2628 = vmatpush1.bf16.msra.mxu0 0
      %2629 = vmatprep.mubr.bf16.mxu0 0
      %2630 = vmatmul.mubr.bf16.gmra.mrb[0].mxu0 %v2450
      %v2631 = vpop.f32.mrb[0].mxu0
      %v2632 = vadd.f32 0.0, %v2631
      %v2633 = vpop.f32.mrb[0].mxu0
      %v2634 = vpop.f32.mrb[0].mxu0
      %v2635 = vadd.f32 0.0, %v2634
      %v2636 = vpop.f32.mrb[0].mxu0
      %2637 = vmatprep.mubr.bf16.mxu0 0
      %2638 = vmatmul.mubr.bf16.gmra.mrb[0].mxu0 %v2453
      %v2639 = vpop.f32.mrb[0].mxu0
      %v2640 = vadd.f32 0.0, %v2639
      %v2641 = vpop.f32.mrb[0].mxu0
      %v2642 = vpop.f32.mrb[0].mxu0
      %v2643 = vadd.f32 0.0, %v2642
      %v2644 = vpop.f32.mrb[0].mxu0
      %2645 = vmatprep.mubr.bf16.mxu0 0
      %2646 = vmatmul.mubr.bf16.gmra.mrb[0].mxu0 %v2456
      %v2647 = vpop.f32.mrb[0].mxu0
      %v2648 = vadd.f32 0.0, %v2647
      %v2649 = vpop.f32.mrb[0].mxu0
      %v2650 = vpop.f32.mrb[0].mxu0
      %v2651 = vadd.f32 0.0, %v2650
      %v2652 = vpop.f32.mrb[0].mxu0
      %2653 = vmatprep.mubr.bf16.mxu0 0
      %2654 = vmatmul.mubr.bf16.gmra.mrb[0].mxu0 %v2459
      %v2655 = vpop.f32.mrb[0].mxu0
      %v2656 = vadd.f32 0.0, %v2655
      %v2657 = vpop.f32.mrb[0].mxu0
      %v2658 = vpop.f32.mrb[0].mxu0
      %v2659 = vadd.f32 0.0, %v2658
      %v2660 = vpop.f32.mrb[0].mxu0
      %2661 = vmatprep.mubr.bf16.mxu0 0
      %2662 = vmatmul.mubr.bf16.gmra.mrb[0].mxu0 %v2462
      %v2663 = vpop.f32.mrb[0].mxu0
      %v2664 = vadd.f32 0.0, %v2663
      %v2665 = vpop.f32.mrb[0].mxu0
      %v2666 = vpop.f32.mrb[0].mxu0
      %v2667 = vadd.f32 0.0, %v2666
      %v2668 = vpop.f32.mrb[0].mxu0
      %2669 = vmatprep.mubr.bf16.mxu0 0
      %2670 = vmatmul.mubr.bf16.gmra.mrb[0].mxu0 %v2465
      %v2671 = vpop.f32.mrb[0].mxu0
      %v2672 = vadd.f32 0.0, %v2671
      %v2673 = vpop.f32.mrb[0].mxu0
      %v2674 = vpop.f32.mrb[0].mxu0
      %v2675 = vadd.f32 0.0, %v2674
      %v2676 = vpop.f32.mrb[0].mxu0
      %2677 = vmatprep.mubr.bf16.mxu0 0
      %2678 = vmatmul.mubr.bf16.gmra.mrb[0].mxu0 %v2468
      %v2679 = vpop.f32.mrb[0].mxu0
      %v2680 = vadd.f32 0.0, %v2679
      %v2681 = vpop.f32.mrb[0].mxu0
      %v2682 = vpop.f32.mrb[0].mxu0
      %v2683 = vadd.f32 0.0, %v2682
      %v2684 = vpop.f32.mrb[0].mxu0
      %2685 = vmatprep.mubr.bf16.mxu0 0
      %2686 = vmatmul.mubr.bf16.gmra.mrb[0].mxu0 %v2592
      %v2687 = vpop.f32.mrb[0].mxu0
      %v2688 = vadd.f32 0.0, %v2687
      %v2689 = vpop.f32.mrb[0].mxu0
      %v2690 = vpop.f32.mrb[0].mxu0
      %v2691 = vadd.f32 0.0, %v2690
      %v2692 = vpop.f32.mrb[0].mxu0
      %2693 = vdwg.mxu0
      %v2694 = vadd.f32 %v2570, %v2632
      %v2695 = vadd.f32 %v2571, %v2635
      %v2696 = vadd.f32 %v2572, %v2640
      %v2697 = vadd.f32 %v2573, %v2643
      %v2698 = vadd.f32 %v2574, %v2648
      %v2699 = vadd.f32 %v2575, %v2651
      %v2700 = vadd.f32 %v2576, %v2656
      %v2701 = vadd.f32 %v2577, %v2659
      %v2702 = vadd.f32 %v2578, %v2664
      %v2703 = vadd.f32 %v2579, %v2667
      %v2704 = vadd.f32 %v2580, %v2672
      %v2705 = vadd.f32 %v2581, %v2675
      %v2706 = vadd.f32 %v2582, %v2680
      %v2707 = vadd.f32 %v2583, %v2683
      %v2708 = vadd.f32 %v2584, %v2688
      %v2709 = vadd.f32 %v2585, %v2691
      %s2710 = scalar_lea.vmem %s5, 16
      %v2711 = vld [vmem:[%s2710] sm:$0x3]
      %v2712 = vunpack.c.l.b16 %v2416
      %v2713 = vunpack.c.l.b16 %v2419
      %v2714 = vpack.c.b16 %v2713, %v2712
      %v2716 = vsel %vm634, %v2714, 0
      %v2719 = vsel %vm665, %v2711, 0
      %2721 = vmatprep.subr.bf16.mxu0 0
      %2722 = vmatpush1.bf16.msra.mxu0 %v2719
      %2723 = vmatprep.subr.bf16.mxu0 0
      %2724 = vmatpush1.bf16.msra.mxu0 0
      %2725 = vmatprep.subr.bf16.mxu0 0
      %2726 = vmatpush1.bf16.msra.mxu0 0
      %2727 = vmatprep.subr.bf16.mxu0 0
      %2728 = vmatpush1.bf16.msra.mxu0 0
      %2729 = vmatprep.subr.bf16.mxu0 0
      %2730 = vmatpush1.bf16.msra.mxu0 0
      %2731 = vmatprep.subr.bf16.mxu0 0
      %2732 = vmatpush1.bf16.msra.mxu0 0
      %2733 = vmatprep.subr.bf16.mxu0 0
      %2734 = vmatpush1.bf16.msra.mxu0 0
      %2735 = vmatprep.subr.bf16.mxu0 0
      %2736 = vmatpush1.bf16.msra.mxu0 0
      %2737 = vmatprep.subr.bf16.mxu0 0
      %2738 = vmatpush1.bf16.msra.mxu0 0
      %2739 = vmatprep.subr.bf16.mxu0 0
      %2740 = vmatpush1.bf16.msra.mxu0 0
      %2741 = vmatprep.subr.bf16.mxu0 0
      %2742 = vmatpush1.bf16.msra.mxu0 0
      %2743 = vmatprep.subr.bf16.mxu0 0
      %2744 = vmatpush1.bf16.msra.mxu0 0
      %2745 = vmatprep.subr.bf16.mxu0 0
      %2746 = vmatpush1.bf16.msra.mxu0 0
      %2747 = vmatprep.subr.bf16.mxu0 0
      %2748 = vmatpush1.bf16.msra.mxu0 0
      %2749 = vmatprep.subr.bf16.mxu0 0
      %2750 = vmatpush1.bf16.msra.mxu0 0
      %2751 = vmatprep.subr.bf16.mxu0 0
      %2752 = vmatpush1.bf16.msra.mxu0 0
      %2753 = vmatprep.mubr.bf16.mxu0 0
      %2754 = vmatmul.mubr.bf16.gmra.mrb[0].mxu0 %v2453
      %v2755 = vpop.f32.mrb[0].mxu0
      %v2756 = vadd.f32 0.0, %v2755
      %v2757 = vpop.f32.mrb[0].mxu0
      %v2758 = vpop.f32.mrb[0].mxu0
      %v2759 = vadd.f32 0.0, %v2758
      %v2760 = vpop.f32.mrb[0].mxu0
      %2761 = vmatprep.mubr.bf16.mxu0 0
      %2762 = vmatmul.mubr.bf16.gmra.mrb[0].mxu0 %v2456
      %v2763 = vpop.f32.mrb[0].mxu0
      %v2764 = vadd.f32 0.0, %v2763
      %v2765 = vpop.f32.mrb[0].mxu0
      %v2766 = vpop.f32.mrb[0].mxu0
      %v2767 = vadd.f32 0.0, %v2766
      %v2768 = vpop.f32.mrb[0].mxu0
      %2769 = vmatprep.mubr.bf16.mxu0 0
      %2770 = vmatmul.mubr.bf16.gmra.mrb[0].mxu0 %v2459
      %v2771 = vpop.f32.mrb[0].mxu0
      %v2772 = vadd.f32 0.0, %v2771
      %v2773 = vpop.f32.mrb[0].mxu0
      %v2774 = vpop.f32.mrb[0].mxu0
      %v2775 = vadd.f32 0.0, %v2774
      %v2776 = vpop.f32.mrb[0].mxu0
      %2777 = vmatprep.mubr.bf16.mxu0 0
      %2778 = vmatmul.mubr.bf16.gmra.mrb[0].mxu0 %v2462
      %v2779 = vpop.f32.mrb[0].mxu0
      %v2780 = vadd.f32 0.0, %v2779
      %v2781 = vpop.f32.mrb[0].mxu0
      %v2782 = vpop.f32.mrb[0].mxu0
      %v2783 = vadd.f32 0.0, %v2782
      %v2784 = vpop.f32.mrb[0].mxu0
      %2785 = vmatprep.mubr.bf16.mxu0 0
      %2786 = vmatmul.mubr.bf16.gmra.mrb[0].mxu0 %v2465
      %v2787 = vpop.f32.mrb[0].mxu0
      %v2788 = vadd.f32 0.0, %v2787
      %v2789 = vpop.f32.mrb[0].mxu0
      %v2790 = vpop.f32.mrb[0].mxu0
      %v2791 = vadd.f32 0.0, %v2790
      %v2792 = vpop.f32.mrb[0].mxu0
      %2793 = vmatprep.mubr.bf16.mxu0 0
      %2794 = vmatmul.mubr.bf16.gmra.mrb[0].mxu0 %v2468
      %v2795 = vpop.f32.mrb[0].mxu0
      %v2796 = vadd.f32 0.0, %v2795
      %v2797 = vpop.f32.mrb[0].mxu0
      %v2798 = vpop.f32.mrb[0].mxu0
      %v2799 = vadd.f32 0.0, %v2798
      %v2800 = vpop.f32.mrb[0].mxu0
      %2801 = vmatprep.mubr.bf16.mxu0 0
      %2802 = vmatmul.mubr.bf16.gmra.mrb[0].mxu0 %v2592
      %v2803 = vpop.f32.mrb[0].mxu0
      %v2804 = vadd.f32 0.0, %v2803
      %v2805 = vpop.f32.mrb[0].mxu0
      %v2806 = vpop.f32.mrb[0].mxu0
      %v2807 = vadd.f32 0.0, %v2806
      %v2808 = vpop.f32.mrb[0].mxu0
      %2809 = vmatprep.mubr.bf16.mxu0 0
      %2810 = vmatmul.mubr.bf16.gmra.mrb[0].mxu0 %v2716
      %v2811 = vpop.f32.mrb[0].mxu0
      %v2812 = vadd.f32 0.0, %v2811
      %v2813 = vpop.f32.mrb[0].mxu0
      %v2814 = vpop.f32.mrb[0].mxu0
      %v2815 = vadd.f32 0.0, %v2814
      %v2816 = vpop.f32.mrb[0].mxu0
      %2817 = vdwg.mxu0
      %v2818 = vadd.f32 %v2694, %v2756
      %v2819 = vadd.f32 %v2695, %v2759
      %v2820 = vadd.f32 %v2696, %v2764
      %v2821 = vadd.f32 %v2697, %v2767
      %v2822 = vadd.f32 %v2698, %v2772
      %v2823 = vadd.f32 %v2699, %v2775
      %v2824 = vadd.f32 %v2700, %v2780
      %v2825 = vadd.f32 %v2701, %v2783
      %v2826 = vadd.f32 %v2702, %v2788
      %v2827 = vadd.f32 %v2703, %v2791
      %v2828 = vadd.f32 %v2704, %v2796
      %v2829 = vadd.f32 %v2705, %v2799
      %v2830 = vadd.f32 %v2706, %v2804
      %v2831 = vadd.f32 %v2707, %v2807
      %v2832 = vadd.f32 %v2708, %v2812
      %v2833 = vadd.f32 %v2709, %v2815
      %v2834 = vld [vmem:[%s6] sm:$0x1]
      %v2836 = vlaneseq
      %v2837 = vshrl.u32 %v2836, 7
      %v2838 = vsub.s32 0, %v2837
      %v2839 = vrot.slane %v2834, %v2838
      %v2841 = vmul.f32 %v2818, %v2839
      %v2842 = vmul.f32 %v2819, %v2839
      %v2843 = vmul.f32 %v2820, %v2839
      %v2844 = vmul.f32 %v2821, %v2839
      %v2845 = vmul.f32 %v2822, %v2839
      %v2846 = vmul.f32 %v2823, %v2839
      %v2847 = vmul.f32 %v2824, %v2839
      %v2848 = vmul.f32 %v2825, %v2839
      %v2849 = vmul.f32 %v2826, %v2839
      %v2850 = vmul.f32 %v2827, %v2839
      %v2851 = vmul.f32 %v2828, %v2839
      %v2852 = vmul.f32 %v2829, %v2839
      %v2853 = vmul.f32 %v2830, %v2839
      %v2854 = vmul.f32 %v2831, %v2839
      %v2855 = vmul.f32 %v2832, %v2839
      %v2856 = vmul.f32 %v2833, %v2839
      %v2857 = vld [vmem:[%s7] sm:$0x1]
      %v2859 = vlaneseq
      %v2860 = vshrl.u32 %v2859, 7
      %v2861 = vsub.s32 0, %v2860
      %v2862 = vrot.slane %v2857, %v2861
      %v2864 = vadd.f32 %v2841, %v2862
      %v2865 = vadd.f32 %v2842, %v2862
      %v2866 = vadd.f32 %v2843, %v2862
      %v2867 = vadd.f32 %v2844, %v2862
      %v2868 = vadd.f32 %v2845, %v2862
      %v2869 = vadd.f32 %v2846, %v2862
      %v2870 = vadd.f32 %v2847, %v2862
      %v2871 = vadd.f32 %v2848, %v2862
      %v2872 = vadd.f32 %v2849, %v2862
      %v2873 = vadd.f32 %v2850, %v2862
      %v2874 = vadd.f32 %v2851, %v2862
      %v2875 = vadd.f32 %v2852, %v2862
      %v2876 = vadd.f32 %v2853, %v2862
      %v2877 = vadd.f32 %v2854, %v2862
      %v2878 = vadd.f32 %v2855, %v2862
      %v2879 = vadd.f32 %v2856, %v2862
      %v2880 = vmax.f32 %v2864, 0.0
      %v2881 = vmax.f32 %v2865, 0.0
      %v2882 = vmax.f32 %v2866, 0.0
      %v2883 = vmax.f32 %v2867, 0.0
      %v2884 = vmax.f32 %v2868, 0.0
      %v2885 = vmax.f32 %v2869, 0.0
      %v2886 = vmax.f32 %v2870, 0.0
      %v2887 = vmax.f32 %v2871, 0.0
      %v2888 = vmax.f32 %v2872, 0.0
      %v2889 = vmax.f32 %v2873, 0.0
      %v2890 = vmax.f32 %v2874, 0.0
      %v2891 = vmax.f32 %v2875, 0.0
      %v2892 = vmax.f32 %v2876, 0.0
      %v2893 = vmax.f32 %v2877, 0.0
      %v2894 = vmax.f32 %v2878, 0.0
      %v2895 = vmax.f32 %v2879, 0.0
      %v2896 = vpack.c.bf16 %v2881, %v2880
      %v2897 = vpack.c.bf16 %v2883, %v2882
      %v2898 = vpack.c.bf16 %v2885, %v2884
      %v2899 = vpack.c.bf16 %v2887, %v2886
      %v2900 = vpack.c.bf16 %v2889, %v2888
      %v2901 = vpack.c.bf16 %v2891, %v2890
      %v2902 = vpack.c.bf16 %v2893, %v2892
      %v2903 = vpack.c.bf16 %v2895, %v2894
      %v2904 = vld [vmem:[%s8] sm:$0xf]
      %v2905 = vld [vmem:[%s9] sm:$0x3]
      %v2907 = vsel %vm634, %v848, 0
      %v2910 = vsel %vm634, %v849, 0
      %v2913 = vsel %vm634, %v850, 0
      %v2916 = vsel %vm634, %v851, 0
      %v2919 = vsel %vm634, %v852, 0
      %v2922 = vsel %vm634, %v853, 0
      %v2925 = vsel %vm634, %v854, 0
      %v2928 = vsel %vm634, %v855, 0
      %v2931 = vsel %vm665, %v2905, 0
      %2933 = vmatprep.subr.bf16.mxu0 0
      %2934 = vmatpush1.bf16.msra.mxu0 %v2931
      %2935 = vmatprep.subr.bf16.mxu0 0
      %2936 = vmatpush1.bf16.msra.mxu0 0
      %2937 = vmatprep.subr.bf16.mxu0 0
      %2938 = vmatpush1.bf16.msra.mxu0 0
      %2939 = vmatprep.subr.bf16.mxu0 0
      %2940 = vmatpush1.bf16.msra.mxu0 0
      %2941 = vmatprep.subr.bf16.mxu0 0
      %2942 = vmatpush1.bf16.msra.mxu0 0
      %2943 = vmatprep.subr.bf16.mxu0 0
      %2944 = vmatpush1.bf16.msra.mxu0 0
      %2945 = vmatprep.subr.bf16.mxu0 0
      %2946 = vmatpush1.bf16.msra.mxu0 0
      %2947 = vmatprep.subr.bf16.mxu0 0
      %2948 = vmatpush1.bf16.msra.mxu0 0
      %2949 = vmatprep.subr.bf16.mxu0 0
      %2950 = vmatpush1.bf16.msra.mxu0 0
      %2951 = vmatprep.subr.bf16.mxu0 0
      %2952 = vmatpush1.bf16.msra.mxu0 0
      %2953 = vmatprep.subr.bf16.mxu0 0
      %2954 = vmatpush1.bf16.msra.mxu0 0
      %2955 = vmatprep.subr.bf16.mxu0 0
      %2956 = vmatpush1.bf16.msra.mxu0 0
      %2957 = vmatprep.subr.bf16.mxu0 0
      %2958 = vmatpush1.bf16.msra.mxu0 0
      %2959 = vmatprep.subr.bf16.mxu0 0
      %2960 = vmatpush1.bf16.msra.mxu0 0
      %2961 = vmatprep.subr.bf16.mxu0 0
      %2962 = vmatpush1.bf16.msra.mxu0 0
      %2963 = vmatprep.subr.bf16.mxu0 0
      %2964 = vmatpush1.bf16.msra.mxu0 0
      %2965 = vmatprep.mubr.bf16.mxu0 0
      %2966 = vmatmul.mubr.bf16.gmra.mrb[0].mxu0 %v2907
      %v2967 = vpop.f32.mrb[0].mxu0
      %v2968 = vadd.f32 0.0, %v2967
      %v2969 = vpop.f32.mrb[0].mxu0
      %v2970 = vpop.f32.mrb[0].mxu0
      %v2971 = vadd.f32 0.0, %v2970
      %v2972 = vpop.f32.mrb[0].mxu0
      %2973 = vmatprep.mubr.bf16.mxu0 0
      %2974 = vmatmul.mubr.bf16.gmra.mrb[0].mxu0 %v2910
      %v2975 = vpop.f32.mrb[0].mxu0
      %v2976 = vadd.f32 0.0, %v2975
      %v2977 = vpop.f32.mrb[0].mxu0
      %v2978 = vpop.f32.mrb[0].mxu0
      %v2979 = vadd.f32 0.0, %v2978
      %v2980 = vpop.f32.mrb[0].mxu0
      %2981 = vmatprep.mubr.bf16.mxu0 0
      %2982 = vmatmul.mubr.bf16.gmra.mrb[0].mxu0 %v2913
      %v2983 = vpop.f32.mrb[0].mxu0
      %v2984 = vadd.f32 0.0, %v2983
      %v2985 = vpop.f32.mrb[0].mxu0
      %v2986 = vpop.f32.mrb[0].mxu0
      %v2987 = vadd.f32 0.0, %v2986
      %v2988 = vpop.f32.mrb[0].mxu0
      %2989 = vmatprep.mubr.bf16.mxu0 0
      %2990 = vmatmul.mubr.bf16.gmra.mrb[0].mxu0 %v2916
      %v2991 = vpop.f32.mrb[0].mxu0
      %v2992 = vadd.f32 0.0, %v2991
      %v2993 = vpop.f32.mrb[0].mxu0
      %v2994 = vpop.f32.mrb[0].mxu0
      %v2995 = vadd.f32 0.0, %v2994
      %v2996 = vpop.f32.mrb[0].mxu0
      %2997 = vmatprep.mubr.bf16.mxu0 0
      %2998 = vmatmul.mubr.bf16.gmra.mrb[0].mxu0 %v2919
      %v2999 = vpop.f32.mrb[0].mxu0
      %v3000 = vadd.f32 0.0, %v2999
      %v3001 = vpop.f32.mrb[0].mxu0
      %v3002 = vpop.f32.mrb[0].mxu0
      %v3003 = vadd.f32 0.0, %v3002
      %v3004 = vpop.f32.mrb[0].mxu0
      %3005 = vmatprep.mubr.bf16.mxu0 0
      %3006 = vmatmul.mubr.bf16.gmra.mrb[0].mxu0 %v2922
      %v3007 = vpop.f32.mrb[0].mxu0
      %v3008 = vadd.f32 0.0, %v3007
      %v3009 = vpop.f32.mrb[0].mxu0
      %v3010 = vpop.f32.mrb[0].mxu0
      %v3011 = vadd.f32 0.0, %v3010
      %v3012 = vpop.f32.mrb[0].mxu0
      %3013 = vmatprep.mubr.bf16.mxu0 0
      %3014 = vmatmul.mubr.bf16.gmra.mrb[0].mxu0 %v2925
      %v3015 = vpop.f32.mrb[0].mxu0
      %v3016 = vadd.f32 0.0, %v3015
      %v3017 = vpop.f32.mrb[0].mxu0
      %v3018 = vpop.f32.mrb[0].mxu0
      %v3019 = vadd.f32 0.0, %v3018
      %v3020 = vpop.f32.mrb[0].mxu0
      %3021 = vmatprep.mubr.bf16.mxu0 0
      %3022 = vmatmul.mubr.bf16.gmra.mrb[0].mxu0 %v2928
      %v3023 = vpop.f32.mrb[0].mxu0
      %v3024 = vadd.f32 0.0, %v3023
      %v3025 = vpop.f32.mrb[0].mxu0
      %v3026 = vpop.f32.mrb[0].mxu0
      %v3027 = vadd.f32 0.0, %v3026
      %v3028 = vpop.f32.mrb[0].mxu0
      %3029 = vdwg.mxu0
      %vm3030 = vcmask 64512
      %v3032 = vsel %vm3030, %v2896, 0
      %v3035 = vsel %vm3030, %v2897, 0
      %v3038 = vsel %vm3030, %v2898, 0
      %v3041 = vsel %vm3030, %v2899, 0
      %v3044 = vsel %vm3030, %v2900, 0
      %v3047 = vsel %vm3030, %v2901, 0
      %v3050 = vsel %vm3030, %v2902, 0
      %v3053 = vsel %vm3030, %v2903, 0
      %vm3055 = vcmask 1043456
      %v3057 = vsel %vm3055, %v2904, 0
      %3059 = vmatprep.subr.bf16.mxu0 0
      %3060 = vmatpush1.bf16.msra.mxu0 %v3057
      %3061 = vmatprep.subr.bf16.mxu0 0
      %3062 = vmatpush1.bf16.msra.mxu0 0
      %3063 = vmatprep.subr.bf16.mxu0 0
      %3064 = vmatpush1.bf16.msra.mxu0 0
      %3065 = vmatprep.subr.bf16.mxu0 0
      %3066 = vmatpush1.bf16.msra.mxu0 0
      %3067 = vmatprep.subr.bf16.mxu0 0
      %3068 = vmatpush1.bf16.msra.mxu0 0
      %3069 = vmatprep.subr.bf16.mxu0 0
      %3070 = vmatpush1.bf16.msra.mxu0 0
      %3071 = vmatprep.subr.bf16.mxu0 0
      %3072 = vmatpush1.bf16.msra.mxu0 0
      %3073 = vmatprep.subr.bf16.mxu0 0
      %3074 = vmatpush1.bf16.msra.mxu0 0
      %3075 = vmatprep.subr.bf16.mxu0 0
      %3076 = vmatpush1.bf16.msra.mxu0 0
      %3077 = vmatprep.subr.bf16.mxu0 0
      %3078 = vmatpush1.bf16.msra.mxu0 0
      %3079 = vmatprep.subr.bf16.mxu0 0
      %3080 = vmatpush1.bf16.msra.mxu0 0
      %3081 = vmatprep.subr.bf16.mxu0 0
      %3082 = vmatpush1.bf16.msra.mxu0 0
      %3083 = vmatprep.subr.bf16.mxu0 0
      %3084 = vmatpush1.bf16.msra.mxu0 0
      %3085 = vmatprep.subr.bf16.mxu0 0
      %3086 = vmatpush1.bf16.msra.mxu0 0
      %3087 = vmatprep.subr.bf16.mxu0 0
      %3088 = vmatpush1.bf16.msra.mxu0 0
      %3089 = vmatprep.subr.bf16.mxu0 0
      %3090 = vmatpush1.bf16.msra.mxu0 0
      %3091 = vmatprep.mubr.bf16.mxu0 0
      %3092 = vmatmul.mubr.bf16.gmra.mrb[0].mxu0 %v3032
      %v3093 = vpop.f32.mrb[0].mxu0
      %v3094 = vadd.f32 %v2968, %v3093
      %v3095 = vpop.f32.mrb[0].mxu0
      %v3096 = vpop.f32.mrb[0].mxu0
      %v3097 = vadd.f32 %v2971, %v3096
      %v3098 = vpop.f32.mrb[0].mxu0
      %3099 = vmatprep.mubr.bf16.mxu0 0
      %3100 = vmatmul.mubr.bf16.gmra.mrb[0].mxu0 %v3035
      %v3101 = vpop.f32.mrb[0].mxu0
      %v3102 = vadd.f32 %v2976, %v3101
      %v3103 = vpop.f32.mrb[0].mxu0
      %v3104 = vpop.f32.mrb[0].mxu0
      %v3105 = vadd.f32 %v2979, %v3104
      %v3106 = vpop.f32.mrb[0].mxu0
      %3107 = vmatprep.mubr.bf16.mxu0 0
      %3108 = vmatmul.mubr.bf16.gmra.mrb[0].mxu0 %v3038
      %v3109 = vpop.f32.mrb[0].mxu0
      %v3110 = vadd.f32 %v2984, %v3109
      %v3111 = vpop.f32.mrb[0].mxu0
      %v3112 = vpop.f32.mrb[0].mxu0
      %v3113 = vadd.f32 %v2987, %v3112
      %v3114 = vpop.f32.mrb[0].mxu0
      %3115 = vmatprep.mubr.bf16.mxu0 0
      %3116 = vmatmul.mubr.bf16.gmra.mrb[0].mxu0 %v3041
      %v3117 = vpop.f32.mrb[0].mxu0
      %v3118 = vadd.f32 %v2992, %v3117
      %v3119 = vpop.f32.mrb[0].mxu0
      %v3120 = vpop.f32.mrb[0].mxu0
      %v3121 = vadd.f32 %v2995, %v3120
      %v3122 = vpop.f32.mrb[0].mxu0
      %3123 = vmatprep.mubr.bf16.mxu0 0
      %3124 = vmatmul.mubr.bf16.gmra.mrb[0].mxu0 %v3044
      %v3125 = vpop.f32.mrb[0].mxu0
      %v3126 = vadd.f32 %v3000, %v3125
      %v3127 = vpop.f32.mrb[0].mxu0
      %v3128 = vpop.f32.mrb[0].mxu0
      %v3129 = vadd.f32 %v3003, %v3128
      %v3130 = vpop.f32.mrb[0].mxu0
      %3131 = vmatprep.mubr.bf16.mxu0 0
      %3132 = vmatmul.mubr.bf16.gmra.mrb[0].mxu0 %v3047
      %v3133 = vpop.f32.mrb[0].mxu0
      %v3134 = vadd.f32 %v3008, %v3133
      %v3135 = vpop.f32.mrb[0].mxu0
      %v3136 = vpop.f32.mrb[0].mxu0
      %v3137 = vadd.f32 %v3011, %v3136
      %v3138 = vpop.f32.mrb[0].mxu0
      %3139 = vmatprep.mubr.bf16.mxu0 0
      %3140 = vmatmul.mubr.bf16.gmra.mrb[0].mxu0 %v3050
      %v3141 = vpop.f32.mrb[0].mxu0
      %v3142 = vadd.f32 %v3016, %v3141
      %v3143 = vpop.f32.mrb[0].mxu0
      %v3144 = vpop.f32.mrb[0].mxu0
      %v3145 = vadd.f32 %v3019, %v3144
      %v3146 = vpop.f32.mrb[0].mxu0
      %3147 = vmatprep.mubr.bf16.mxu0 0
      %3148 = vmatmul.mubr.bf16.gmra.mrb[0].mxu0 %v3053
      %v3149 = vpop.f32.mrb[0].mxu0
      %v3150 = vadd.f32 %v3024, %v3149
      %v3151 = vpop.f32.mrb[0].mxu0
      %v3152 = vpop.f32.mrb[0].mxu0
      %v3153 = vadd.f32 %v3027, %v3152
      %v3154 = vpop.f32.mrb[0].mxu0
      %3155 = vdwg.mxu0
      %v3156 = vld [vmem:[%s10] sm:$0x1]
      %v3158 = vlaneseq
      %v3159 = vshrl.u32 %v3158, 7
      %v3160 = vsub.s32 0, %v3159
      %v3161 = vrot.slane %v3156, %v3160
      %v3163 = vadd.f32 %v3094, %v3161
      %v3164 = vadd.f32 %v3097, %v3161
      %v3165 = vadd.f32 %v3102, %v3161
      %v3166 = vadd.f32 %v3105, %v3161
      %v3167 = vadd.f32 %v3110, %v3161
      %v3168 = vadd.f32 %v3113, %v3161
      %v3169 = vadd.f32 %v3118, %v3161
      %v3170 = vadd.f32 %v3121, %v3161
      %v3171 = vadd.f32 %v3126, %v3161
      %v3172 = vadd.f32 %v3129, %v3161
      %v3173 = vadd.f32 %v3134, %v3161
      %v3174 = vadd.f32 %v3137, %v3161
      %v3175 = vadd.f32 %v3142, %v3161
      %v3176 = vadd.f32 %v3145, %v3161
      %v3177 = vadd.f32 %v3150, %v3161
      %v3178 = vadd.f32 %v3153, %v3161
      %v3179 = vpack.c.bf16 %v3164, %v3163
      %v3180 = vpack.c.bf16 %v3166, %v3165
      %v3181 = vpack.c.bf16 %v3168, %v3167
      %v3182 = vpack.c.bf16 %v3170, %v3169
      %v3183 = vpack.c.bf16 %v3172, %v3171
      %v3184 = vpack.c.bf16 %v3174, %v3173
      %v3185 = vpack.c.bf16 %v3176, %v3175
      %v3186 = vpack.c.bf16 %v3178, %v3177
      %v3195 = vunpack.c.l.b16 %v3179
      %v3196 = vunpack.c.h.b16 %v3179
      %v3197 = vunpack.c.l.b16 %v3180
      %v3198 = vunpack.c.h.b16 %v3180
      %v3199 = vunpack.c.l.b16 %v3181
      %v3200 = vunpack.c.h.b16 %v3181
      %v3201 = vunpack.c.l.b16 %v3182
      %v3202 = vunpack.c.h.b16 %v3182
      %v3203 = vunpack.c.l.b16 %v3183
      %v3204 = vunpack.c.h.b16 %v3183
      %v3205 = vunpack.c.l.b16 %v3184
      %v3206 = vunpack.c.h.b16 %v3184
      %v3207 = vunpack.c.l.b16 %v3185
      %v3208 = vunpack.c.h.b16 %v3185
      %v3209 = vunpack.c.l.b16 %v3186
      %v3210 = vunpack.c.h.b16 %v3186
      %v3211 = vpack.c.b16 %v3195, %v3195
      %v3212 = vpack.c.b16 %v3196, %v3196
      %v3213 = vpack.c.b16 %v3197, %v3197
      %v3214 = vpack.c.b16 %v3198, %v3198
      %v3215 = vpack.c.b16 %v3199, %v3199
      %v3216 = vpack.c.b16 %v3200, %v3200
      %v3217 = vpack.c.b16 %v3201, %v3201
      %v3218 = vpack.c.b16 %v3202, %v3202
      %v3219 = vpack.c.b16 %v3203, %v3203
      %v3220 = vpack.c.b16 %v3204, %v3204
      %v3221 = vpack.c.b16 %v3205, %v3205
      %v3222 = vpack.c.b16 %v3206, %v3206
      %v3223 = vpack.c.b16 %v3207, %v3207
      %v3224 = vpack.c.b16 %v3208, %v3208
      %v3225 = vpack.c.b16 %v3209, %v3209
      %v3226 = vpack.c.b16 %v3210, %v3210
      %vm3243 = vcmask 60416
      %3244 = vst.msk [vmem:[%s553] sm:$0xf] %vm3243, %v3211
      %3245 = vst.msk [vmem:[%s553 + $0x4] sm:$0xf] %vm3243, %v3212
      %3246 = vst.msk [vmem:[%s553 + $0x8] sm:$0xf] %vm3243, %v3213
      %3247 = vst.msk [vmem:[%s553 + $0xc] sm:$0xf] %vm3243, %v3214
      %3248 = vst.msk [vmem:[%s553 + $0x10] sm:$0xf] %vm3243, %v3215
      %3249 = vst.msk [vmem:[%s553 + $0x14] sm:$0xf] %vm3243, %v3216
      %3250 = vst.msk [vmem:[%s553 + $0x18] sm:$0xf] %vm3243, %v3217
      %3251 = vst.msk [vmem:[%s553 + $0x1c] sm:$0xf] %vm3243, %v3218
      %3252 = vst.msk [vmem:[%s553 + $0x20] sm:$0xf] %vm3243, %v3219
      %3253 = vst.msk [vmem:[%s553 + $0x24] sm:$0xf] %vm3243, %v3220
      %3254 = vst.msk [vmem:[%s553 + $0x28] sm:$0xf] %vm3243, %v3221
      %3255 = vst.msk [vmem:[%s553 + $0x2c] sm:$0xf] %vm3243, %v3222
      %3256 = vst.msk [vmem:[%s553 + $0x30] sm:$0xf] %vm3243, %v3223
      %3257 = vst.msk [vmem:[%s553 + $0x34] sm:$0xf] %vm3243, %v3224
      %3258 = vst.msk [vmem:[%s553 + $0x38] sm:$0xf] %vm3243, %v3225
      %3259 = vst.msk [vmem:[%s553 + $0x3c] sm:$0xf] %vm3243, %v3226
      %s3260 = smul.u32 8, %s27
      %p3261 = scmp.lt.s32.totalorder %s26, 1
      %s3262 = scalar_select %p3261, %s26, 1
      %p3263 = scmp.lt.s32.totalorder %s3260, 15
      %s3264 = scalar_select %p3263, %s3260, 15
      %s3265 = smul.addr %s3264, 2
      %s3266 = smul.addr %s3262, 32
      %s3267 = sadd.s32 %s3265, %s3266
      %s3268 = smul.addr %s3267, 4
      %s3269 = scalar_lea.vmem %s11, %s3268
      // Predicated region
      $region73: #{tpu_custom_call.1} parent=63 // pred_check
        %p3270 = pneg %p322
      $region74: #{tpu_custom_call.1} parent=63 // pred_check_branch
        %3272 = sbr.rel (%p3270) target = $region76
      $region75: #{tpu_custom_call.1} parent=63 // pred_region
        %s3273 = smul.u32 8, %s27
      $region76: #{tpu_custom_call.1} parent=63 // pred_fallthru
        _
    $region64: #{tpu_custom_call.1} parent=5 // pred_fallthru
      _
    %p3274 = scmp.le.s32.totalorder 2, %s17
    // Predicated region
    $region77: #{tpu_custom_call.1} parent=5 // pred_check
      %p3275 = pneg %p3274
    $region78: #{tpu_custom_call.1} parent=5 // pred_check_branch
      %3277 = sbr.rel (%p3275) target = $region80
    $region79: #{tpu_custom_call.1} parent=5 // pred_region
      %s3278 = ssub.s32 %s17, 2
      // Predicated region
      $region81: #{tpu_custom_call.1} parent=79 // pred_check
        %p3279 = pneg %p328
      $region82: #{tpu_custom_call.1} parent=79 // pred_check_branch
        %3281 = sbr.rel (%p3279) target = $region84
      $region83: #{tpu_custom_call.1} parent=79 // pred_region
        %s3282 = smul.u32 8, %s29
        %p3283 = scmp.lt.s32.totalorder %s28, 1
        %s3284 = scalar_select %p3283, %s28, 1
        %p3285 = scmp.lt.s32.totalorder %s3282, 15
        %s3286 = scalar_select %p3285, %s3282, 15
        %s3287 = smul.addr %s3286, 2
        %s3288 = smul.addr %s3284, 32
        %s3289 = sadd.s32 %s3287, %s3288
        %s3290 = smul.addr %s3289, 4
        %s3291 = scalar_lea.vmem %s11, %s3290
      $region84: #{tpu_custom_call.1} parent=79 // pred_fallthru
        _
    $region80: #{tpu_custom_call.1} parent=5 // pred_fallthru
      _
  $region6: #{tpu_custom_call.1} parent=0 // loop_footer
    %s21 = sadd.s32 1, %s17
  $region7: #{tpu_custom_call.1} parent=0 // loop_footer_branch
    %16 = sbr.rel target = $region3
  $region8: #{tpu_custom_call.1} parent=0 // loop_exit
    _

</llo_original>
